<compile_context>
chip_gen: v7x
topology: tpu7x:2x2x1
jax: 0.10.0
libtpu: 0.0.40
codegen_flags: <defaults>
</compile_context>

<pallas_src>
import functools

import jax
import jax.numpy as jnp
from jax.experimental import pallas as pl
from jax.experimental.pallas import tpu as pltpu

PATCH = 14                       # DINOv2 patch size
LN_EPS = 1e-6                    # DINOv2 uses LayerNorm(eps=1e-6)
INV_SQRT2 = 0.7071067811865476
NEG_INF = -1e30
VMEM_LIMIT = 48 * 1024 * 1024    # real raise over the 16/32 MiB scoped defaults,
                                 # still below v7x's 64 MiB physical VMEM


# ----------------------------------------------------------------------------- helpers
def _layernorm(x, w, b):
    mu = jnp.mean(x, axis=-1, keepdims=True)
    var = jnp.mean(jnp.square(x - mu), axis=-1, keepdims=True)
    return (x - mu) * jax.lax.rsqrt(var + LN_EPS) * w + b


def _erf_poly(x):
    # Abramowitz & Stegun 7.1.26 rational polynomial, |error| <= 1.5e-7.
    # Uses only exp/abs/where so it is guaranteed to lower in Mosaic.
    a1, a2, a3, a4, a5 = 0.254829592, -0.284496736, 1.421413741, -1.453152027, 1.061405429
    p = 0.3275911
    z = jnp.abs(x)
    t = 1.0 / (1.0 + p * z)
    poly = ((((a5 * t + a4) * t + a3) * t + a2) * t + a1) * t
    y = 1.0 - poly * jnp.exp(-z * z)
    return jnp.where(x >= 0, y, -y)


def _gelu_exact(x):
    # nn.GELU() default (exact erf formulation) as used in the DINOv2 MLP.
    return 0.5 * x * (1.0 + _erf_poly(x * INV_SQRT2))


# --------------------------------------------------------- fused DINOv2 forward kernel
def _dinov2_kernel(num_heads, apply_final_norm,
                   patches_ref, patchw_ref, tokadd_ref, abias_ref,
                   ln1w_ref, ln1b_ref, qkvw_ref, qkvb_ref, projw_ref, projb_ref,
                   ls1_ref, ln2w_ref, ln2b_ref, fc1w_ref, fc1b_ref, fc2w_ref,
                   fc2b_ref, ls2_ref, normw_ref, normb_ref,
                   out_ref):
    d = pl.program_id(1)
    M, D = out_ref.shape            # M = b_tile * S_pad  (batch folded into rows)
    hd = D // num_heads

    # ---- fused patch embedding (first depth step of each batch tile).
    # CLS row / conv bias / positional embedding are pre-folded into tokadd host-side;
    # CLS & pad rows of `patches` are zero so their matmul contribution is exactly 0.
    @pl.when(d == 0)
    def _():
        out_ref[...] = (jnp.dot(patches_ref[...], patchw_ref[...],
                                preferred_element_type=jnp.float32)
                        + tokadd_ref[...])

    x = out_ref[...]                # [M, D] f32 residual stream (VMEM-resident)

    # ---- attention branch: x + ls1 * proj(MHSA(LN(x)))
    h = _layernorm(x, ln1w_ref[0], ln1b_ref[0]).astype(jnp.bfloat16)
    qkv = jnp.dot(h, qkvw_ref[0], preferred_element_type=jnp.float32) + qkvb_ref[0]

    abias = abias_ref[...]          # precomputed block-diagonal / pad-key additive bias
    heads = []
    for hi in range(num_heads):     # toy num_heads=2; lane-aligned head_dim slices
        lo = hi * hd
        qh = qkv[:, lo:lo + hd].astype(jnp.bfloat16)          # scale folded into W_q
        kh = qkv[:, D + lo:D + lo + hd].astype(jnp.bfloat16)
        vh = qkv[:, 2 * D + lo:2 * D + lo + hd].astype(jnp.bfloat16)
        att = jax.lax.dot_general(qh, kh, (((1,), (1,)), ((), ())),
                                  preferred_element_type=jnp.float32)   # q @ k^T
        att = att + abias
        att = jnp.exp(att - jnp.max(att, axis=-1, keepdims=True))
        denom = jnp.sum(att, axis=-1, keepdims=True)
        pv = jnp.dot(att.astype(jnp.bfloat16), vh,
                     preferred_element_type=jnp.float32)                # [M, hd]
        pv = pv * pl.reciprocal(denom, approx=True)   # deferred softmax normalization
        heads.append(pv.astype(jnp.bfloat16))
    attn = jnp.concatenate(heads, axis=-1)            # [M, D], lane-aligned concat
    proj = jnp.dot(attn, projw_ref[0],
                   preferred_element_type=jnp.float32) + projb_ref[0]   # one K=D matmul
    x = x + ls1_ref[0] * proj

    # ---- MLP branch: x + ls2 * fc2(GELU(fc1(LN(x))))
    h2 = _layernorm(x, ln2w_ref[0], ln2b_ref[0]).astype(jnp.bfloat16)
    hid = jnp.dot(h2, fc1w_ref[0], preferred_element_type=jnp.float32) + fc1b_ref[0]
    hid = _gelu_exact(hid).astype(jnp.bfloat16)
    mlp = jnp.dot(hid, fc2w_ref[0], preferred_element_type=jnp.float32) + fc2b_ref[0]
    y = x + ls2_ref[0] * mlp

    last = pl.num_programs(1) - 1
    if apply_final_norm:
        # fused final LayerNorm epilogue on the last block
        @pl.when(d == last)
        def _():
            out_ref[...] = _layernorm(y, normw_ref[...], normb_ref[...])

        @pl.when(d < last)
        def _():
            out_ref[...] = y
    else:
        out_ref[...] = y


def dinov2_forward(patches2d, patch_w, tok_add, abias, blocks, norm_w, norm_b,
                   num_heads, apply_final_norm, s_pad, b_tile):
    Mtot, P_pad = patches2d.shape
    D = patch_w.shape[1]
    depth = blocks["qkv_w"].shape[0]
    Dh = blocks["fc1_w"].shape[2]
    Mt = b_tile * s_pad
    assert Mtot % Mt == 0
    GB = Mtot // Mt                 # leading "parallel" axis (megacore-shardable)

    kern = functools.partial(_dinov2_kernel, num_heads, apply_final_norm)

    def wspec(*shape):
        # stacked per-block parameter: select block `d` along the leading axis.
        # NOTE: on 128-MiB-VMEM parts (v5e/v6e) the big weight specs could additionally
        # use deeper buffering (pipeline_mode=pl.Buffered(3)) to hide the weight DMA.
        return pl.BlockSpec((1,) + shape, lambda b, d: (d, 0, 0))

    return pl.pallas_call(
        kern,
        out_shape=jax.ShapeDtypeStruct((Mtot, D), jnp.float32),
        grid=(GB, depth),
        in_specs=[
            pl.BlockSpec((Mt, P_pad), lambda b, d: (b, 0)),   # patch pixel rows
            pl.BlockSpec((P_pad, D), lambda b, d: (0, 0)),    # patch-embed weight
            pl.BlockSpec((Mt, D), lambda b, d: (b, 0)),       # cls/bias/pos additive term
            pl.BlockSpec((Mt, Mt), lambda b, d: (0, 0)),      # attention additive bias
            wspec(1, D), wspec(1, D),              # ln1 w/b
            wspec(D, 3 * D), wspec(1, 3 * D),      # qkv w/b (scale folded into W_q)
            wspec(D, D), wspec(1, D),              # proj w/b
            wspec(1, D),                           # ls1 gamma
            wspec(1, D), wspec(1, D),              # ln2 w/b
            wspec(D, Dh), wspec(1, Dh),            # fc1 w/b
            wspec(Dh, D), wspec(1, D),             # fc2 w/b
            wspec(1, D),                           # ls2 gamma
            pl.BlockSpec((1, D), lambda b, d: (0, 0)),   # final norm w
            pl.BlockSpec((1, D), lambda b, d: (0, 0)),   # final norm b
        ],
        out_specs=pl.BlockSpec((Mt, D), lambda b, d: (b, 0)),
        compiler_params=pltpu.CompilerParams(
            dimension_semantics=("parallel", "arbitrary"),
            vmem_limit_bytes=VMEM_LIMIT),
    )(patches2d, patch_w, tok_add, abias,
      blocks["ln1_w"], blocks["ln1_b"], blocks["qkv_w"], blocks["qkv_b"],
      blocks["proj_w"], blocks["proj_b"], blocks["ls1"],
      blocks["ln2_w"], blocks["ln2_b"], blocks["fc1_w"], blocks["fc1_b"],
      blocks["fc2_w"], blocks["fc2_b"], blocks["ls2"],
      norm_w, norm_b)


# --------------------------------------------------------------------------- parameters
def init_dinov2_params(key, embed_dim, depth, num_heads, mlp_ratio, num_patches,
                       in_chans=3):
    D = embed_dim
    P = in_chans * PATCH * PATCH
    P_pad = ((P + 127) // 128) * 128            # lane-aligned patch feature dim
    Dh = D * mlp_ratio
    S = num_patches + 1
    hd = D // num_heads
    attn_scale = float(hd) ** -0.5
    keys = jax.random.split(key, 3 + depth)

    def nrm(k, shape, scale=0.02):
        return (scale * jax.random.normal(k, shape)).astype(jnp.float32)

    # conv(3, D, 14, stride 14) weight reshaped to [3*14*14, D] (feature order c,kh,kw),
    # zero-padded to P_pad rows (padded patch columns are zero so the matmul is exact).
    patch_w = jnp.zeros((P_pad, D), jnp.float32).at[:P].set(nrm(keys[0], (P, D)))

    params = {
        "patch_w": patch_w.astype(jnp.bfloat16),
        "patch_b": jnp.zeros((1, D), jnp.float32),
        "cls": nrm(keys[1], (1, D)),
        "pos": nrm(keys[2], (S, D)),
        "norm_w": jnp.ones((1, D), jnp.float32),
        "norm_b": jnp.zeros((1, D), jnp.float32),
    }

    blk_keys = [jax.random.split(keys[3 + i], 4) for i in range(depth)]

    def qkv_weight(k):
        w = nrm(k, (D, 3 * D))
        # fold the attention scale 1/sqrt(hd) into the Q columns (host-side, free).
        # (qkv_b is zero here; its Q slice would also need scaling if nonzero.)
        w = w.at[:, :D].multiply(attn_scale)
        return w.astype(jnp.bfloat16)

    params["blocks"] = {
        "ln1_w": jnp.ones((depth, 1, D), jnp.float32),
        "ln1_b": jnp.zeros((depth, 1, D), jnp.float32),
        "qkv_w": jnp.stack([qkv_weight(bk[0]) for bk in blk_keys]),
        "qkv_b": jnp.zeros((depth, 1, 3 * D), jnp.float32),
        "proj_w": jnp.stack([nrm(bk[1], (D, D)).astype(jnp.bfloat16) for bk in blk_keys]),
        "proj_b": jnp.zeros((depth, 1, D), jnp.float32),
        "ls1": jnp.full((depth, 1, D), 0.1, jnp.float32),      # LayerScale gamma
        "ln2_w": jnp.ones((depth, 1, D), jnp.float32),
        "ln2_b": jnp.zeros((depth, 1, D), jnp.float32),
        "fc1_w": jnp.stack([nrm(bk[2], (D, Dh)).astype(jnp.bfloat16) for bk in blk_keys]),
        "fc1_b": jnp.zeros((depth, 1, Dh), jnp.float32),
        "fc2_w": jnp.stack([nrm(bk[3], (Dh, D)).astype(jnp.bfloat16) for bk in blk_keys]),
        "fc2_b": jnp.zeros((depth, 1, D), jnp.float32),
        "ls2": jnp.full((depth, 1, D), 0.1, jnp.float32),
    }
    return params


# --------------------------------------------------------------------------- the module
class DINOv2:
    """Pallas-TPU re-implementation of LoopModels/backbones/dinov2.py::DINOv2.forward."""

    def __init__(self, embed_dim=256, depth=3, num_heads=2, mlp_ratio=4,
                 num_patches=4, num_trainable_blocks=2, norm_layer=False,
                 return_token=False, seed=0):
        self.num_channels = embed_dim
        self.num_heads = num_heads
        self.num_trainable_blocks = num_trainable_blocks  # no-grad split: no fwd effect
        self.norm_layer = norm_layer
        self.return_token = return_token
        self.params = init_dinov2_params(
            jax.random.PRNGKey(seed), embed_dim, depth, num_heads, mlp_ratio,
            num_patches)

    def __call__(self, x):
        B, C, H, W = x.shape
        assert H % PATCH == 0 and W % PATCH == 0
        Hp, Wp = H // PATCH, W // PATCH
        N = Hp * Wp
        S = N + 1
        S_pad = ((S + 7) // 8) * 8          # pad tokens up to the sublane (8) grid
        D = self.num_channels
        P = C * PATCH * PATCH
        P_pad = ((P + 127) // 128) * 128    # lane-aligned patch feature dim

        # whole batch folded into the MXU row dim; set b_tile < B to split the leading
        # "parallel" grid axis across v7x's two TensorCores for large batches.
        b_tile = B

        # glue: unfold NCHW image -> per-patch rows [B, N, C*14*14] (order c,kh,kw),
        # lay them out at rows 1..N of a zero [B*S_pad, P_pad] slab (row 0 = CLS slot,
        # tail rows / cols = zero pad) so the fused patch-embed is one aligned matmul.
        patches = (x.reshape(B, C, Hp, PATCH, Wp, PATCH)
                    .transpose(0, 2, 4, 1, 3, 5)
                    .reshape(B, N, P))
        patches2d = jnp.zeros((B, S_pad, P_pad), jnp.bfloat16)
        patches2d = patches2d.at[:, 1:S, :P].set(patches.astype(jnp.bfloat16))
        patches2d = patches2d.reshape(B * S_pad, P_pad)

        # per-row additive token term: CLS row -> cls + pos[0]; patch row s -> bias + pos[s];
        # pad rows -> 0 (the matmul contribution of zero patch rows is exactly 0).
        tok_add = jnp.zeros((S_pad, D), jnp.float32)
        tok_add = tok_add.at[0].set(self.params["cls"][0] + self.params["pos"][0])
        tok_add = tok_add.at[1:S].set(self.params["patch_b"][0] + self.params["pos"][1:S])
        tok_add = jnp.tile(tok_add[None], (B, 1, 1)).reshape(B * S_pad, D)

        # precomputed block-diagonal (per-image) + pad-key additive attention bias.
        Mt = b_tile * S_pad
        r = jnp.arange(Mt)
        same_img = (r[:, None] // S_pad) == (r[None, :] // S_pad)
        valid_key = (r[None, :] % S_pad) < S
        abias = jnp.where(same_img & valid_key, 0.0, NEG_INF).astype(jnp.float32)

        tok = dinov2_forward(patches2d, self.params["patch_w"], tok_add, abias,
                             self.params["blocks"], self.params["norm_w"],
                             self.params["norm_b"], self.num_heads, self.norm_layer,
                             S_pad, b_tile)
        tok = tok.reshape(B, S_pad, D)

        t = tok[:, 0]
        f = tok[:, 1:S].reshape(B, Hp, Wp, D).transpose(0, 3, 1, 2)
        if self.return_token:
            return f, t
        return f


# ------------------------------------------------------------------- pure-JAX reference
def reference_forward(params, x, num_heads, norm_layer, return_token):
    """Pure-JAX reference mirroring the kernel numerics (bf16 matmul operands,
    f32 accumulation, scale folded into W_q) on the unpadded token sequence."""
    f32, bf16 = jnp.float32, jnp.bfloat16

    def mm(a, b):
        return jnp.dot(a.astype(bf16), b.astype(bf16), preferred_element_type=f32)

    def ln(z, w, b):
        mu = z.mean(-1, keepdims=True)
        var = ((z - mu) ** 2).mean(-1, keepdims=True)
        return (z - mu) * jax.lax.rsqrt(var + LN_EPS) * w + b

    B, C, H, W = x.shape
    Hp, Wp = H // PATCH, W // PATCH
    N = Hp * Wp
    P = C * PATCH * PATCH
    patches = (x.reshape(B, C, Hp, PATCH, Wp, PATCH)
                .transpose(0, 2, 4, 1, 3, 5)
                .reshape(B, N, P))
    emb = mm(patches, params["patch_w"][:P]) + params["patch_b"]
    D = emb.shape[-1]
    cls = jnp.broadcast_to(params["cls"][None], (B, 1, D))
    tok = jnp.concatenate([cls, emb], axis=1) + params["pos"][None]

    hd = D // num_heads
    blocks = params["blocks"]
    depth = blocks["qkv_w"].shape[0]
    for d in range(depth):
        p = {k: v[d] for k, v in blocks.items()}
        h = ln(tok, p["ln1_w"], p["ln1_b"])
        qkv = mm(h, p["qkv_w"]) + p["qkv_b"]        # attention scale pre-folded into W_q
        heads = []
        for hi in range(num_heads):
            lo = hi * hd
            qh = qkv[..., lo:lo + hd]
            kh = qkv[..., D + lo:D + lo + hd]
            vh = qkv[..., 2 * D + lo:2 * D + lo + hd]
            att = jnp.einsum('bqd,bkd->bqk', qh.astype(bf16), kh.astype(bf16),
                             preferred_element_type=f32)
            att = jnp.exp(att - jnp.max(att, axis=-1, keepdims=True))
            denom = jnp.sum(att, axis=-1, keepdims=True)
            pv = jnp.einsum('bqk,bkd->bqd', att.astype(bf16), vh.astype(bf16),
                            preferred_element_type=f32) / denom
            heads.append(pv)
        attn = jnp.concatenate(heads, axis=-1)
        tok = tok + p["ls1"] * (mm(attn, p["proj_w"]) + p["proj_b"])

        h2 = ln(tok, p["ln2_w"], p["ln2_b"])
        hid = mm(h2, p["fc1_w"]) + p["fc1_b"]
        hid = 0.5 * hid * (1.0 + jax.lax.erf(hid * INV_SQRT2))
        tok = tok + p["ls2"] * (mm(hid, p["fc2_w"]) + p["fc2_b"])

    if norm_layer:
        tok = ln(tok, params["norm_w"], params["norm_b"])
    t = tok[:, 0]
    f = tok[:, 1:].reshape(B, Hp, Wp, D).transpose(0, 3, 1, 2)
    return (f, t) if return_token else f


# -------------------------------------------------------------------------------- main
if __name__ == "__main__":
    key = jax.random.PRNGKey(0)
    x_key, _ = jax.random.split(key)

    B, C, H, W = 2, 3, 28, 28          # H, W divisible by 14 -> 2x2 = 4 patches
    x = jax.random.normal(x_key, (B, C, H, W), dtype=jnp.float32)

    model = DINOv2(embed_dim=256, depth=3, num_heads=2, mlp_ratio=4,
                   num_patches=(H // PATCH) * (W // PATCH),
                   num_trainable_blocks=2, norm_layer=False, return_token=False,
                   seed=0)

    f = model(x)
    f = jax.block_until_ready(f)
    assert f.shape == (B, model.num_channels, H // PATCH, W // PATCH), f.shape

    f_ref = reference_forward(model.params, x, model.num_heads,
                              model.norm_layer, model.return_token)
    max_err = float(jnp.max(jnp.abs(f - f_ref)))
    assert max_err < 1e-2, f"mismatch vs reference: {max_err}"

    print("KERNEL_OK")
</pallas_src>

<mosaic_0001>
module attributes {stable_mosaic.version = 11 : i64} {
  func.func @_dinov2_kernel(%arg0: i32, %arg1: i32, %arg2: memref<16x640xbf16, #tpu.memory_space<vmem>>, %arg3: memref<640x256xbf16, #tpu.memory_space<vmem>>, %arg4: memref<16x256xf32, #tpu.memory_space<vmem>>, %arg5: memref<16x16xf32, #tpu.memory_space<vmem>>, %arg6: memref<1x1x256xf32, #tpu.memory_space<vmem>>, %arg7: memref<1x1x256xf32, #tpu.memory_space<vmem>>, %arg8: memref<1x256x768xbf16, #tpu.memory_space<vmem>>, %arg9: memref<1x1x768xf32, #tpu.memory_space<vmem>>, %arg10: memref<1x256x256xbf16, #tpu.memory_space<vmem>>, %arg11: memref<1x1x256xf32, #tpu.memory_space<vmem>>, %arg12: memref<1x1x256xf32, #tpu.memory_space<vmem>>, %arg13: memref<1x1x256xf32, #tpu.memory_space<vmem>>, %arg14: memref<1x1x256xf32, #tpu.memory_space<vmem>>, %arg15: memref<1x256x1024xbf16, #tpu.memory_space<vmem>>, %arg16: memref<1x1x1024xf32, #tpu.memory_space<vmem>>, %arg17: memref<1x1024x256xbf16, #tpu.memory_space<vmem>>, %arg18: memref<1x1x256xf32, #tpu.memory_space<vmem>>, %arg19: memref<1x1x256xf32, #tpu.memory_space<vmem>>, %arg20: memref<1x256xf32, #tpu.memory_space<vmem>>, %arg21: memref<1x256xf32, #tpu.memory_space<vmem>>, %arg22: memref<16x256xf32, #tpu.memory_space<vmem>>) attributes {dimension_semantics = [#tpu.dimension_semantics<parallel>, #tpu.dimension_semantics<arbitrary>], iteration_bounds = array<i64: 1, 3>, scalar_prefetch = 0 : i64, scratch_operands = 0 : i64, tpu.core_type = #tpu.core_type<tc>, window_params = [{transform_indices = @transform_0, window_bounds = array<i64: 16, 640>}, {pipeline_mode = #tpu.pipeline_mode<synchronous>, transform_indices = @transform_1, window_bounds = array<i64: 640, 256>}, {transform_indices = @transform_2, window_bounds = array<i64: 16, 256>}, {pipeline_mode = #tpu.pipeline_mode<synchronous>, transform_indices = @transform_3, window_bounds = array<i64: 16, 16>}, {transform_indices = @transform_4, window_bounds = array<i64: 1, 1, 256>}, {transform_indices = @transform_5, window_bounds = array<i64: 1, 1, 256>}, {transform_indices = @transform_6, window_bounds = array<i64: 1, 256, 768>}, {transform_indices = @transform_7, window_bounds = array<i64: 1, 1, 768>}, {transform_indices = @transform_8, window_bounds = array<i64: 1, 256, 256>}, {transform_indices = @transform_9, window_bounds = array<i64: 1, 1, 256>}, {transform_indices = @transform_10, window_bounds = array<i64: 1, 1, 256>}, {transform_indices = @transform_11, window_bounds = array<i64: 1, 1, 256>}, {transform_indices = @transform_12, window_bounds = array<i64: 1, 1, 256>}, {transform_indices = @transform_13, window_bounds = array<i64: 1, 256, 1024>}, {transform_indices = @transform_14, window_bounds = array<i64: 1, 1, 1024>}, {transform_indices = @transform_15, window_bounds = array<i64: 1, 1024, 256>}, {transform_indices = @transform_16, window_bounds = array<i64: 1, 1, 256>}, {transform_indices = @transform_17, window_bounds = array<i64: 1, 1, 256>}, {pipeline_mode = #tpu.pipeline_mode<synchronous>, transform_indices = @transform_18, window_bounds = array<i64: 1, 256>}, {pipeline_mode = #tpu.pipeline_mode<synchronous>, transform_indices = @transform_19, window_bounds = array<i64: 1, 256>}, {transform_indices = @transform_20, window_bounds = array<i64: 16, 256>}]} {
    %c0_i32 = arith.constant 0 : i32
    %0 = arith.cmpi eq, %arg1, %c0_i32 : i32
    %1 = arith.extui %0 : i1 to i32
    %c0_i32_0 = arith.constant 0 : i32
    %2 = arith.cmpi ne, %1, %c0_i32_0 : i32
    scf.if %2 {
      %c0_84 = arith.constant 0 : index
      %c0_85 = arith.constant 0 : index
      %182 = vector.load %arg2[%c0_84, %c0_85] : memref<16x640xbf16, #tpu.memory_space<vmem>>, vector<16x640xbf16>
      %c0_86 = arith.constant 0 : index
      %c0_87 = arith.constant 0 : index
      %183 = vector.load %arg3[%c0_86, %c0_87] : memref<640x256xbf16, #tpu.memory_space<vmem>>, vector<640x256xbf16>
      %cst_88 = arith.constant dense<0.000000e+00> : vector<16x256xf32>
      %184 = tpu.matmul %182, %183, %cst_88 {dimension_numbers = #tpu.dot_dimension_numbers<[1], [0], [0], [1], [0, 0, 1, 1], [], []>} : vector<16x640xbf16>, vector<640x256xbf16>, vector<16x256xf32> -> vector<16x256xf32>
      %c0_89 = arith.constant 0 : index
      %c0_90 = arith.constant 0 : index
      %185 = vector.load %arg4[%c0_89, %c0_90] : memref<16x256xf32, #tpu.memory_space<vmem>>, vector<16x256xf32>
      %186 = arith.addf %184, %185 : vector<16x256xf32>
      %c0_91 = arith.constant 0 : index
      %c0_92 = arith.constant 0 : index
      %187 = vector.load %arg22[%c0_91, %c0_92] : memref<16x256xf32, #tpu.memory_space<vmem>>, vector<16x256xf32>
      tpu.vector_store %arg22[%c0_91, %c0_92], %186 {strides = array<i32>} : memref<16x256xf32, #tpu.memory_space<vmem>>, vector<16x256xf32>,
    } else {
    }
    %c0 = arith.constant 0 : index
    %c0_1 = arith.constant 0 : index
    %3 = vector.load %arg22[%c0, %c0_1] : memref<16x256xf32, #tpu.memory_space<vmem>>, vector<16x256xf32>
    %c0_2 = arith.constant 0 : index
    %c0_3 = arith.constant 0 : index
    %c0_4 = arith.constant 0 : index
    %4 = vector.load %arg6[%c0_2, %c0_3, %c0_4] : memref<1x1x256xf32, #tpu.memory_space<vmem>>, vector<1x1x256xf32>
    %5 = vector.shape_cast %4 : vector<1x1x256xf32> to vector<1x256xf32>
    %c0_5 = arith.constant 0 : index
    %c0_6 = arith.constant 0 : index
    %c0_7 = arith.constant 0 : index
    %6 = vector.load %arg7[%c0_5, %c0_6, %c0_7] : memref<1x1x256xf32, #tpu.memory_space<vmem>>, vector<1x1x256xf32>
    %7 = vector.shape_cast %6 : vector<1x1x256xf32> to vector<1x256xf32>
    %cst = arith.constant dense<0.000000e+00> : vector<16xf32>
    %8 = vector.multi_reduction <add>, %3, %cst [1] : vector<16x256xf32> to vector<16xf32>
    %9 = vector.shape_cast %8 : vector<16xf32> to vector<16x1xf32>
    %cst_8 = arith.constant 2.560000e+02 : f32
    %10 = vector.broadcast %cst_8 : f32 to vector<16x1xf32>
    %11 = arith.divf %9, %10 : vector<16x1xf32>
    %12 = vector.broadcast %11 : vector<16x1xf32> to vector<16x256xf32>
    %13 = arith.subf %3, %12 : vector<16x256xf32>
    %14 = arith.mulf %13, %13 : vector<16x256xf32>
    %cst_9 = arith.constant dense<0.000000e+00> : vector<16xf32>
    %15 = vector.multi_reduction <add>, %14, %cst_9 [1] : vector<16x256xf32> to vector<16xf32>
    %16 = vector.shape_cast %15 : vector<16xf32> to vector<16x1xf32>
    %cst_10 = arith.constant 2.560000e+02 : f32
    %17 = vector.broadcast %cst_10 : f32 to vector<16x1xf32>
    %18 = arith.divf %16, %17 : vector<16x1xf32>
    %19 = vector.broadcast %11 : vector<16x1xf32> to vector<16x256xf32>
    %20 = arith.subf %3, %19 : vector<16x256xf32>
    %cst_11 = arith.constant 9.99999997E-7 : f32
    %21 = vector.broadcast %cst_11 : f32 to vector<16x1xf32>
    %22 = arith.addf %18, %21 : vector<16x1xf32>
    %23 = math.rsqrt %22 : vector<16x1xf32>
    %24 = vector.broadcast %23 : vector<16x1xf32> to vector<16x256xf32>
    %25 = arith.mulf %20, %24 : vector<16x256xf32>
    %26 = vector.broadcast %5 : vector<1x256xf32> to vector<16x256xf32>
    %27 = arith.mulf %25, %26 : vector<16x256xf32>
    %28 = vector.broadcast %7 : vector<1x256xf32> to vector<16x256xf32>
    %29 = arith.addf %27, %28 : vector<16x256xf32>
    %30 = arith.truncf %29 : vector<16x256xf32> to vector<16x256xbf16>
    %c0_12 = arith.constant 0 : index
    %c0_13 = arith.constant 0 : index
    %c0_14 = arith.constant 0 : index
    %31 = vector.load %arg8[%c0_12, %c0_13, %c0_14] : memref<1x256x768xbf16, #tpu.memory_space<vmem>>, vector<1x256x768xbf16>
    %32 = vector.shape_cast %31 : vector<1x256x768xbf16> to vector<256x768xbf16>
    %cst_15 = arith.constant dense<0.000000e+00> : vector<16x768xf32>
    %33 = tpu.matmul %30, %32, %cst_15 {dimension_numbers = #tpu.dot_dimension_numbers<[1], [0], [0], [1], [0, 0, 1, 1], [], []>} : vector<16x256xbf16>, vector<256x768xbf16>, vector<16x768xf32> -> vector<16x768xf32>
    %c0_16 = arith.constant 0 : index
    %c0_17 = arith.constant 0 : index
    %c0_18 = arith.constant 0 : index
    %34 = vector.load %arg9[%c0_16, %c0_17, %c0_18] : memref<1x1x768xf32, #tpu.memory_space<vmem>>, vector<1x1x768xf32>
    %35 = vector.shape_cast %34 : vector<1x1x768xf32> to vector<1x768xf32>
    %36 = vector.broadcast %35 : vector<1x768xf32> to vector<16x768xf32>
    %37 = arith.addf %33, %36 : vector<16x768xf32>
    %c0_19 = arith.constant 0 : index
    %c0_20 = arith.constant 0 : index
    %38 = vector.load %arg5[%c0_19, %c0_20] : memref<16x16xf32, #tpu.memory_space<vmem>>, vector<16x16xf32>
    %39 = vector.extract_strided_slice %37 {offsets = [0, 0], sizes = [16, 128], strides = [1, 1]} : vector<16x768xf32> to vector<16x128xf32>
    %40 = arith.truncf %39 : vector<16x128xf32> to vector<16x128xbf16>
    %41 = vector.extract_strided_slice %37 {offsets = [0, 256], sizes = [16, 128], strides = [1, 1]} : vector<16x768xf32> to vector<16x128xf32>
    %42 = arith.truncf %41 : vector<16x128xf32> to vector<16x128xbf16>
    %43 = vector.extract_strided_slice %37 {offsets = [0, 512], sizes = [16, 128], strides = [1, 1]} : vector<16x768xf32> to vector<16x128xf32>
    %44 = arith.truncf %43 : vector<16x128xf32> to vector<16x128xbf16>
    %cst_21 = arith.constant dense<0.000000e+00> : vector<16x16xf32>
    %45 = tpu.matmul %40, %42, %cst_21 {dimension_numbers = #tpu.dot_dimension_numbers<[1], [1], [0], [0], [0, 0, 1, 0], [], []>} : vector<16x128xbf16>, vector<16x128xbf16>, vector<16x16xf32> -> vector<16x16xf32>
    %46 = arith.addf %45, %38 : vector<16x16xf32>
    %cst_22 = arith.constant dense<0xFF800000> : vector<16xf32>
    %47 = vector.multi_reduction <maximumf>, %46, %cst_22 [1] : vector<16x16xf32> to vector<16xf32>
    %48 = vector.shape_cast %47 : vector<16xf32> to vector<16x1xf32>
    %49 = vector.broadcast %48 : vector<16x1xf32> to vector<16x16xf32>
    %50 = arith.subf %46, %49 : vector<16x16xf32>
    %51 = math.exp %50 : vector<16x16xf32>
    %cst_23 = arith.constant dense<0.000000e+00> : vector<16xf32>
    %52 = vector.multi_reduction <add>, %51, %cst_23 [1] : vector<16x16xf32> to vector<16xf32>
    %53 = vector.shape_cast %52 : vector<16xf32> to vector<16x1xf32>
    %54 = arith.truncf %51 : vector<16x16xf32> to vector<16x16xbf16>
    %cst_24 = arith.constant dense<0.000000e+00> : vector<16x128xf32>
    %55 = tpu.matmul %54, %44, %cst_24 {dimension_numbers = #tpu.dot_dimension_numbers<[1], [0], [0], [1], [0, 0, 1, 1], [], []>} : vector<16x16xbf16>, vector<16x128xbf16>, vector<16x128xf32> -> vector<16x128xf32>
    %56 = tpu.reciprocal %53 {approx = true} : vector<16x1xf32> -> vector<16x1xf32>
    %57 = vector.broadcast %56 : vector<16x1xf32> to vector<16x128xf32>
    %58 = arith.mulf %55, %57 : vector<16x128xf32>
    %59 = arith.truncf %58 : vector<16x128xf32> to vector<16x128xbf16>
    %60 = vector.extract_strided_slice %37 {offsets = [0, 128], sizes = [16, 128], strides = [1, 1]} : vector<16x768xf32> to vector<16x128xf32>
    %61 = arith.truncf %60 : vector<16x128xf32> to vector<16x128xbf16>
    %62 = vector.extract_strided_slice %37 {offsets = [0, 384], sizes = [16, 128], strides = [1, 1]} : vector<16x768xf32> to vector<16x128xf32>
    %63 = arith.truncf %62 : vector<16x128xf32> to vector<16x128xbf16>
    %64 = vector.extract_strided_slice %37 {offsets = [0, 640], sizes = [16, 128], strides = [1, 1]} : vector<16x768xf32> to vector<16x128xf32>
    %65 = arith.truncf %64 : vector<16x128xf32> to vector<16x128xbf16>
    %cst_25 = arith.constant dense<0.000000e+00> : vector<16x16xf32>
    %66 = tpu.matmul %61, %63, %cst_25 {dimension_numbers = #tpu.dot_dimension_numbers<[1], [1], [0], [0], [0, 0, 1, 0], [], []>} : vector<16x128xbf16>, vector<16x128xbf16>, vector<16x16xf32> -> vector<16x16xf32>
    %67 = arith.addf %66, %38 : vector<16x16xf32>
    %cst_26 = arith.constant dense<0xFF800000> : vector<16xf32>
    %68 = vector.multi_reduction <maximumf>, %67, %cst_26 [1] : vector<16x16xf32> to vector<16xf32>
    %69 = vector.shape_cast %68 : vector<16xf32> to vector<16x1xf32>
    %70 = vector.broadcast %69 : vector<16x1xf32> to vector<16x16xf32>
    %71 = arith.subf %67, %70 : vector<16x16xf32>
    %72 = math.exp %71 : vector<16x16xf32>
    %cst_27 = arith.constant dense<0.000000e+00> : vector<16xf32>
    %73 = vector.multi_reduction <add>, %72, %cst_27 [1] : vector<16x16xf32> to vector<16xf32>
    %74 = vector.shape_cast %73 : vector<16xf32> to vector<16x1xf32>
    %75 = arith.truncf %72 : vector<16x16xf32> to vector<16x16xbf16>
    %cst_28 = arith.constant dense<0.000000e+00> : vector<16x128xf32>
    %76 = tpu.matmul %75, %65, %cst_28 {dimension_numbers = #tpu.dot_dimension_numbers<[1], [0], [0], [1], [0, 0, 1, 1], [], []>} : vector<16x16xbf16>, vector<16x128xbf16>, vector<16x128xf32> -> vector<16x128xf32>
    %77 = tpu.reciprocal %74 {approx = true} : vector<16x1xf32> -> vector<16x1xf32>
    %78 = vector.broadcast %77 : vector<16x1xf32> to vector<16x128xf32>
    %79 = arith.mulf %76, %78 : vector<16x128xf32>
    %80 = arith.truncf %79 : vector<16x128xf32> to vector<16x128xbf16>
    %81 = tpu.concatenate %59, %80 in 1 : vector<16x128xbf16>, vector<16x128xbf16> -> vector<16x256xbf16>
    %c0_29 = arith.constant 0 : index
    %c0_30 = arith.constant 0 : index
    %c0_31 = arith.constant 0 : index
    %82 = vector.load %arg10[%c0_29, %c0_30, %c0_31] : memref<1x256x256xbf16, #tpu.memory_space<vmem>>, vector<1x256x256xbf16>
    %83 = vector.shape_cast %82 : vector<1x256x256xbf16> to vector<256x256xbf16>
    %cst_32 = arith.constant dense<0.000000e+00> : vector<16x256xf32>
    %84 = tpu.matmul %81, %83, %cst_32 {dimension_numbers = #tpu.dot_dimension_numbers<[1], [0], [0], [1], [0, 0, 1, 1], [], []>} : vector<16x256xbf16>, vector<256x256xbf16>, vector<16x256xf32> -> vector<16x256xf32>
    %c0_33 = arith.constant 0 : index
    %c0_34 = arith.constant 0 : index
    %c0_35 = arith.constant 0 : index
    %85 = vector.load %arg11[%c0_33, %c0_34, %c0_35] : memref<1x1x256xf32, #tpu.memory_space<vmem>>, vector<1x1x256xf32>
    %86 = vector.shape_cast %85 : vector<1x1x256xf32> to vector<1x256xf32>
    %87 = vector.broadcast %86 : vector<1x256xf32> to vector<16x256xf32>
    %88 = arith.addf %84, %87 : vector<16x256xf32>
    %c0_36 = arith.constant 0 : index
    %c0_37 = arith.constant 0 : index
    %c0_38 = arith.constant 0 : index
    %89 = vector.load %arg12[%c0_36, %c0_37, %c0_38] : memref<1x1x256xf32, #tpu.memory_space<vmem>>, vector<1x1x256xf32>
    %90 = vector.shape_cast %89 : vector<1x1x256xf32> to vector<1x256xf32>
    %91 = vector.broadcast %90 : vector<1x256xf32> to vector<16x256xf32>
    %92 = arith.mulf %91, %88 : vector<16x256xf32>
    %93 = arith.addf %3, %92 : vector<16x256xf32>
    %c0_39 = arith.constant 0 : index
    %c0_40 = arith.constant 0 : index
    %c0_41 = arith.constant 0 : index
    %94 = vector.load %arg13[%c0_39, %c0_40, %c0_41] : memref<1x1x256xf32, #tpu.memory_space<vmem>>, vector<1x1x256xf32>
    %95 = vector.shape_cast %94 : vector<1x1x256xf32> to vector<1x256xf32>
    %c0_42 = arith.constant 0 : index
    %c0_43 = arith.constant 0 : index
    %c0_44 = arith.constant 0 : index
    %96 = vector.load %arg14[%c0_42, %c0_43, %c0_44] : memref<1x1x256xf32, #tpu.memory_space<vmem>>, vector<1x1x256xf32>
    %97 = vector.shape_cast %96 : vector<1x1x256xf32> to vector<1x256xf32>
    %cst_45 = arith.constant dense<0.000000e+00> : vector<16xf32>
    %98 = vector.multi_reduction <add>, %93, %cst_45 [1] : vector<16x256xf32> to vector<16xf32>
    %99 = vector.shape_cast %98 : vector<16xf32> to vector<16x1xf32>
    %cst_46 = arith.constant 2.560000e+02 : f32
    %100 = vector.broadcast %cst_46 : f32 to vector<16x1xf32>
    %101 = arith.divf %99, %100 : vector<16x1xf32>
    %102 = vector.broadcast %101 : vector<16x1xf32> to vector<16x256xf32>
    %103 = arith.subf %93, %102 : vector<16x256xf32>
    %104 = arith.mulf %103, %103 : vector<16x256xf32>
    %cst_47 = arith.constant dense<0.000000e+00> : vector<16xf32>
    %105 = vector.multi_reduction <add>, %104, %cst_47 [1] : vector<16x256xf32> to vector<16xf32>
    %106 = vector.shape_cast %105 : vector<16xf32> to vector<16x1xf32>
    %cst_48 = arith.constant 2.560000e+02 : f32
    %107 = vector.broadcast %cst_48 : f32 to vector<16x1xf32>
    %108 = arith.divf %106, %107 : vector<16x1xf32>
    %109 = vector.broadcast %101 : vector<16x1xf32> to vector<16x256xf32>
    %110 = arith.subf %93, %109 : vector<16x256xf32>
    %cst_49 = arith.constant 9.99999997E-7 : f32
    %111 = vector.broadcast %cst_49 : f32 to vector<16x1xf32>
    %112 = arith.addf %108, %111 : vector<16x1xf32>
    %113 = math.rsqrt %112 : vector<16x1xf32>
    %114 = vector.broadcast %113 : vector<16x1xf32> to vector<16x256xf32>
    %115 = arith.mulf %110, %114 : vector<16x256xf32>
    %116 = vector.broadcast %95 : vector<1x256xf32> to vector<16x256xf32>
    %117 = arith.mulf %115, %116 : vector<16x256xf32>
    %118 = vector.broadcast %97 : vector<1x256xf32> to vector<16x256xf32>
    %119 = arith.addf %117, %118 : vector<16x256xf32>
    %120 = arith.truncf %119 : vector<16x256xf32> to vector<16x256xbf16>
    %c0_50 = arith.constant 0 : index
    %c0_51 = arith.constant 0 : index
    %c0_52 = arith.constant 0 : index
    %121 = vector.load %arg15[%c0_50, %c0_51, %c0_52] : memref<1x256x1024xbf16, #tpu.memory_space<vmem>>, vector<1x256x1024xbf16>
    %122 = vector.shape_cast %121 : vector<1x256x1024xbf16> to vector<256x1024xbf16>
    %cst_53 = arith.constant dense<0.000000e+00> : vector<16x1024xf32>
    %123 = tpu.matmul %120, %122, %cst_53 {dimension_numbers = #tpu.dot_dimension_numbers<[1], [0], [0], [1], [0, 0, 1, 1], [], []>} : vector<16x256xbf16>, vector<256x1024xbf16>, vector<16x1024xf32> -> vector<16x1024xf32>
    %c0_54 = arith.constant 0 : index
    %c0_55 = arith.constant 0 : index
    %c0_56 = arith.constant 0 : index
    %124 = vector.load %arg16[%c0_54, %c0_55, %c0_56] : memref<1x1x1024xf32, #tpu.memory_space<vmem>>, vector<1x1x1024xf32>
    %125 = vector.shape_cast %124 : vector<1x1x1024xf32> to vector<1x1024xf32>
    %126 = vector.broadcast %125 : vector<1x1024xf32> to vector<16x1024xf32>
    %127 = arith.addf %123, %126 : vector<16x1024xf32>
    %cst_57 = arith.constant 5.000000e-01 : f32
    %128 = vector.broadcast %cst_57 : f32 to vector<16x1024xf32>
    %129 = arith.mulf %128, %127 : vector<16x1024xf32>
    %cst_58 = arith.constant 0.707106769 : f32
    %130 = vector.broadcast %cst_58 : f32 to vector<16x1024xf32>
    %131 = arith.mulf %127, %130 : vector<16x1024xf32>
    %132 = math.absf %131 : vector<16x1024xf32>
    %cst_59 = arith.constant 0.327591091 : f32
    %133 = vector.broadcast %cst_59 : f32 to vector<16x1024xf32>
    %134 = arith.mulf %133, %132 : vector<16x1024xf32>
    %cst_60 = arith.constant 1.000000e+00 : f32
    %135 = vector.broadcast %cst_60 : f32 to vector<16x1024xf32>
    %136 = arith.addf %135, %134 : vector<16x1024xf32>
    %cst_61 = arith.constant 1.000000e+00 : f32
    %137 = vector.broadcast %cst_61 : f32 to vector<16x1024xf32>
    %138 = arith.divf %137, %136 : vector<16x1024xf32>
    %cst_62 = arith.constant 1.06140542 : f32
    %139 = vector.broadcast %cst_62 : f32 to vector<16x1024xf32>
    %140 = arith.mulf %139, %138 : vector<16x1024xf32>
    %cst_63 = arith.constant -1.45315206 : f32
    %141 = vector.broadcast %cst_63 : f32 to vector<16x1024xf32>
    %142 = arith.addf %140, %141 : vector<16x1024xf32>
    %143 = arith.mulf %142, %138 : vector<16x1024xf32>
    %cst_64 = arith.constant 1.42141378 : f32
    %144 = vector.broadcast %cst_64 : f32 to vector<16x1024xf32>
    %145 = arith.addf %143, %144 : vector<16x1024xf32>
    %146 = arith.mulf %145, %138 : vector<16x1024xf32>
    %cst_65 = arith.constant -0.284496725 : f32
    %147 = vector.broadcast %cst_65 : f32 to vector<16x1024xf32>
    %148 = arith.addf %146, %147 : vector<16x1024xf32>
    %149 = arith.mulf %148, %138 : vector<16x1024xf32>
    %cst_66 = arith.constant 0.254829586 : f32
    %150 = vector.broadcast %cst_66 : f32 to vector<16x1024xf32>
    %151 = arith.addf %149, %150 : vector<16x1024xf32>
    %152 = arith.mulf %151, %138 : vector<16x1024xf32>
    %cst_67 = arith.constant 0.000000e+00 : f32
    %153 = vector.broadcast %cst_67 : f32 to vector<16x1024xf32>
    %154 = arith.subf %153, %132 : vector<16x1024xf32>
    %155 = arith.mulf %154, %132 : vector<16x1024xf32>
    %156 = math.exp %155 : vector<16x1024xf32>
    %157 = arith.mulf %152, %156 : vector<16x1024xf32>
    %cst_68 = arith.constant 1.000000e+00 : f32
    %158 = vector.broadcast %cst_68 : f32 to vector<16x1024xf32>
    %159 = arith.subf %158, %157 : vector<16x1024xf32>
    %cst_69 = arith.constant 0.000000e+00 : f32
    %160 = vector.broadcast %cst_69 : f32 to vector<16x1024xf32>
    %161 = arith.cmpf oge, %131, %160 : vector<16x1024xf32>
    %cst_70 = arith.constant 0.000000e+00 : f32
    %162 = vector.broadcast %cst_70 : f32 to vector<16x1024xf32>
    %163 = arith.subf %162, %159 : vector<16x1024xf32>
    %164 = arith.select %161, %159, %163 : vector<16x1024xi1>, vector<16x1024xf32>
    %cst_71 = arith.constant 1.000000e+00 : f32
    %165 = vector.broadcast %cst_71 : f32 to vector<16x1024xf32>
    %166 = arith.addf %165, %164 : vector<16x1024xf32>
    %167 = arith.mulf %129, %166 : vector<16x1024xf32>
    %168 = arith.truncf %167 : vector<16x1024xf32> to vector<16x1024xbf16>
    %c0_72 = arith.constant 0 : index
    %c0_73 = arith.constant 0 : index
    %c0_74 = arith.constant 0 : index
    %169 = vector.load %arg17[%c0_72, %c0_73, %c0_74] : memref<1x1024x256xbf16, #tpu.memory_space<vmem>>, vector<1x1024x256xbf16>
    %170 = vector.shape_cast %169 : vector<1x1024x256xbf16> to vector<1024x256xbf16>
    %cst_75 = arith.constant dense<0.000000e+00> : vector<16x256xf32>
    %171 = tpu.matmul %168, %170, %cst_75 {dimension_numbers = #tpu.dot_dimension_numbers<[1], [0], [0], [1], [0, 0, 1, 1], [], []>} : vector<16x1024xbf16>, vector<1024x256xbf16>, vector<16x256xf32> -> vector<16x256xf32>
    %c0_76 = arith.constant 0 : index
    %c0_77 = arith.constant 0 : index
    %c0_78 = arith.constant 0 : index
    %172 = vector.load %arg18[%c0_76, %c0_77, %c0_78] : memref<1x1x256xf32, #tpu.memory_space<vmem>>, vector<1x1x256xf32>
    %173 = vector.shape_cast %172 : vector<1x1x256xf32> to vector<1x256xf32>
    %174 = vector.broadcast %173 : vector<1x256xf32> to vector<16x256xf32>
    %175 = arith.addf %171, %174 : vector<16x256xf32>
    %c0_79 = arith.constant 0 : index
    %c0_80 = arith.constant 0 : index
    %c0_81 = arith.constant 0 : index
    %176 = vector.load %arg19[%c0_79, %c0_80, %c0_81] : memref<1x1x256xf32, #tpu.memory_space<vmem>>, vector<1x1x256xf32>
    %177 = vector.shape_cast %176 : vector<1x1x256xf32> to vector<1x256xf32>
    %178 = vector.broadcast %177 : vector<1x256xf32> to vector<16x256xf32>
    %179 = arith.mulf %178, %175 : vector<16x256xf32>
    %180 = arith.addf %93, %179 : vector<16x256xf32>
    %c0_82 = arith.constant 0 : index
    %c0_83 = arith.constant 0 : index
    %181 = vector.load %arg22[%c0_82, %c0_83] : memref<16x256xf32, #tpu.memory_space<vmem>>, vector<16x256xf32>
    tpu.vector_store %arg22[%c0_82, %c0_83], %180 {strides = array<i32>} : memref<16x256xf32, #tpu.memory_space<vmem>>, vector<16x256xf32>,
    return
  }
  func.func @transform_0(%arg0: i32, %arg1: i32) -> (i32, i32) {
    %c0_i32 = arith.constant 0 : i32
    %c0_i32_0 = arith.constant 0 : i32
    return %arg0, %c0_i32 : i32, i32
  }
  func.func @transform_1(%arg0: i32, %arg1: i32) -> (i32, i32) {
    %c0_i32 = arith.constant 0 : i32
    %c0_i32_0 = arith.constant 0 : i32
    %c0_i32_1 = arith.constant 0 : i32
    return %c0_i32, %c0_i32_0 : i32, i32
  }
  func.func @transform_2(%arg0: i32, %arg1: i32) -> (i32, i32) {
    %c0_i32 = arith.constant 0 : i32
    %c0_i32_0 = arith.constant 0 : i32
    return %arg0, %c0_i32 : i32, i32
  }
  func.func @transform_3(%arg0: i32, %arg1: i32) -> (i32, i32) {
    %c0_i32 = arith.constant 0 : i32
    %c0_i32_0 = arith.constant 0 : i32
    %c0_i32_1 = arith.constant 0 : i32
    return %c0_i32, %c0_i32_0 : i32, i32
  }
  func.func @transform_4(%arg0: i32, %arg1: i32) -> (i32, i32, i32) {
    %c0_i32 = arith.constant 0 : i32
    %c0_i32_0 = arith.constant 0 : i32
    %c0_i32_1 = arith.constant 0 : i32
    return %arg1, %c0_i32, %c0_i32_0 : i32, i32, i32
  }
  func.func @transform_5(%arg0: i32, %arg1: i32) -> (i32, i32, i32) {
    %c0_i32 = arith.constant 0 : i32
    %c0_i32_0 = arith.constant 0 : i32
    %c0_i32_1 = arith.constant 0 : i32
    return %arg1, %c0_i32, %c0_i32_0 : i32, i32, i32
  }
  func.func @transform_6(%arg0: i32, %arg1: i32) -> (i32, i32, i32) {
    %c0_i32 = arith.constant 0 : i32
    %c0_i32_0 = arith.constant 0 : i32
    %c0_i32_1 = arith.constant 0 : i32
    return %arg1, %c0_i32, %c0_i32_0 : i32, i32, i32
  }
  func.func @transform_7(%arg0: i32, %arg1: i32) -> (i32, i32, i32) {
    %c0_i32 = arith.constant 0 : i32
    %c0_i32_0 = arith.constant 0 : i32
    %c0_i32_1 = arith.constant 0 : i32
    return %arg1, %c0_i32, %c0_i32_0 : i32, i32, i32
  }
  func.func @transform_8(%arg0: i32, %arg1: i32) -> (i32, i32, i32) {
    %c0_i32 = arith.constant 0 : i32
    %c0_i32_0 = arith.constant 0 : i32
    %c0_i32_1 = arith.constant 0 : i32
    return %arg1, %c0_i32, %c0_i32_0 : i32, i32, i32
  }
  func.func @transform_9(%arg0: i32, %arg1: i32) -> (i32, i32, i32) {
    %c0_i32 = arith.constant 0 : i32
    %c0_i32_0 = arith.constant 0 : i32
    %c0_i32_1 = arith.constant 0 : i32
    return %arg1, %c0_i32, %c0_i32_0 : i32, i32, i32
  }
  func.func @transform_10(%arg0: i32, %arg1: i32) -> (i32, i32, i32) {
    %c0_i32 = arith.constant 0 : i32
    %c0_i32_0 = arith.constant 0 : i32
    %c0_i32_1 = arith.constant 0 : i32
    return %arg1, %c0_i32, %c0_i32_0 : i32, i32, i32
  }
  func.func @transform_11(%arg0: i32, %arg1: i32) -> (i32, i32, i32) {
    %c0_i32 = arith.constant 0 : i32
    %c0_i32_0 = arith.constant 0 : i32
    %c0_i32_1 = arith.constant 0 : i32
    return %arg1, %c0_i32, %c0_i32_0 : i32, i32, i32
  }
  func.func @transform_12(%arg0: i32, %arg1: i32) -> (i32, i32, i32) {
    %c0_i32 = arith.constant 0 : i32
    %c0_i32_0 = arith.constant 0 : i32
    %c0_i32_1 = arith.constant 0 : i32
    return %arg1, %c0_i32, %c0_i32_0 : i32, i32, i32
  }
  func.func @transform_13(%arg0: i32, %arg1: i32) -> (i32, i32, i32) {
    %c0_i32 = arith.constant 0 : i32
    %c0_i32_0 = arith.constant 0 : i32
    %c0_i32_1 = arith.constant 0 : i32
    return %arg1, %c0_i32, %c0_i32_0 : i32, i32, i32
  }
  func.func @transform_14(%arg0: i32, %arg1: i32) -> (i32, i32, i32) {
    %c0_i32 = arith.constant 0 : i32
    %c0_i32_0 = arith.constant 0 : i32
    %c0_i32_1 = arith.constant 0 : i32
    return %arg1, %c0_i32, %c0_i32_0 : i32, i32, i32
  }
  func.func @transform_15(%arg0: i32, %arg1: i32) -> (i32, i32, i32) {
    %c0_i32 = arith.constant 0 : i32
    %c0_i32_0 = arith.constant 0 : i32
    %c0_i32_1 = arith.constant 0 : i32
    return %arg1, %c0_i32, %c0_i32_0 : i32, i32, i32
  }
  func.func @transform_16(%arg0: i32, %arg1: i32) -> (i32, i32, i32) {
    %c0_i32 = arith.constant 0 : i32
    %c0_i32_0 = arith.constant 0 : i32
    %c0_i32_1 = arith.constant 0 : i32
    return %arg1, %c0_i32, %c0_i32_0 : i32, i32, i32
  }
  func.func @transform_17(%arg0: i32, %arg1: i32) -> (i32, i32, i32) {
    %c0_i32 = arith.constant 0 : i32
    %c0_i32_0 = arith.constant 0 : i32
    %c0_i32_1 = arith.constant 0 : i32
    return %arg1, %c0_i32, %c0_i32_0 : i32, i32, i32
  }
  func.func @transform_18(%arg0: i32, %arg1: i32) -> (i32, i32) {
    %c0_i32 = arith.constant 0 : i32
    %c0_i32_0 = arith.constant 0 : i32
    %c0_i32_1 = arith.constant 0 : i32
    return %c0_i32, %c0_i32_0 : i32, i32
  }
  func.func @transform_19(%arg0: i32, %arg1: i32) -> (i32, i32) {
    %c0_i32 = arith.constant 0 : i32
    %c0_i32_0 = arith.constant 0 : i32
    %c0_i32_1 = arith.constant 0 : i32
    return %c0_i32, %c0_i32_0 : i32, i32
  }
  func.func @transform_20(%arg0: i32, %arg1: i32) -> (i32, i32) {
    %c0_i32 = arith.constant 0 : i32
    %c0_i32_0 = arith.constant 0 : i32
    return %arg0, %c0_i32 : i32, i32
  }
}

</mosaic_0001>

<llo_original>
// kernel: tpu_custom_call.1
$region0: #{tpu_custom_call.1}
  #allocation0 [shape = 'u32[]', space=smem, size = 0x4, offset = 0x4, fixed_abs, tag = 'smem constant byte address 0x4 - core index']
  #allocation1 [shape = 'u32[144,128]{1,0:T(1,128)}', space=vmem, size = 0x12000, scoped, tag = 'internal scratch']
  %s0 = inlined_call_operand.hbm [shape: bf16[16,640], index: 0, kind: input, shape index: {}]
  %s1 = inlined_call_operand.hbm [shape: bf16[640,256], index: 1, kind: input, shape index: {}]
  %s2 = inlined_call_operand.hbm [shape: f32[16,256], index: 2, kind: input, shape index: {}]
  %s3 = inlined_call_operand.hbm [shape: f32[16,16], index: 3, kind: input, shape index: {}]
  %s4 = inlined_call_operand.hbm [shape: f32[3,1,256], index: 4, kind: input, shape index: {}]
  %s5 = inlined_call_operand.hbm [shape: f32[3,1,256], index: 5, kind: input, shape index: {}]
  %s6 = inlined_call_operand.hbm [shape: bf16[3,256,768], index: 6, kind: input, shape index: {}]
  %s7 = inlined_call_operand.hbm [shape: f32[3,1,768], index: 7, kind: input, shape index: {}]
  %s8 = inlined_call_operand.hbm [shape: bf16[3,256,256], index: 8, kind: input, shape index: {}]
  %s9 = inlined_call_operand.hbm [shape: f32[3,1,256], index: 9, kind: input, shape index: {}]
  %s10 = inlined_call_operand.hbm [shape: f32[3,1,256], index: 10, kind: input, shape index: {}]
  %s11 = inlined_call_operand.hbm [shape: f32[3,1,256], index: 11, kind: input, shape index: {}]
  %s12 = inlined_call_operand.hbm [shape: f32[3,1,256], index: 12, kind: input, shape index: {}]
  %s13 = inlined_call_operand.hbm [shape: bf16[3,256,1024], index: 13, kind: input, shape index: {}]
  %s14 = inlined_call_operand.hbm [shape: f32[3,1,1024], index: 14, kind: input, shape index: {}]
  %s15 = inlined_call_operand.hbm [shape: bf16[3,1024,256], index: 15, kind: input, shape index: {}]
  %s16 = inlined_call_operand.hbm [shape: f32[3,1,256], index: 16, kind: input, shape index: {}]
  %s17 = inlined_call_operand.hbm [shape: f32[3,1,256], index: 17, kind: input, shape index: {}]
  %s18 = inlined_call_operand.hbm [shape: f32[1,256], index: 18, kind: input, shape index: {}]
  %s19 = inlined_call_operand.hbm [shape: f32[1,256], index: 19, kind: input, shape index: {}]
  %s20 = inlined_call_operand.hbm [shape: f32[16,256], index: 20, kind: output, shape index: {}]
  %s21 = sld [smem:[#allocation0]]
  $region197: #{tpu_custom_call.1} parent=0
    _
  %s23 = ssub.s32 1, %s21
  %s24 = scalar_select 0, %s23, %s21
  $region1: #{tpu_custom_call.1} parent=0
    #allocation2 [shape = 'u8[20480]{0}', space=vmem, size = 0x5000, scoped, tag = 'input window, operand 0, single buffered']
    #allocation3 [shape = 's32[2]{0}', space=sflag, size = 0x8, scoped, tag = 'scoped memory for tpu_custom_call.1']
    #allocation4 [shape = 's32[2]{0}', space=sflag, size = 0x8, scoped, tag = 'scoped memory for tpu_custom_call.1']
    #allocation5 [shape = 'u8[327680]{0}', space=vmem, size = 0x50000, scoped, tag = 'input window, operand 1, single buffered']
    #allocation6 [shape = 's32[1]{0}', space=sflag, size = 0x4, scoped, tag = 'scoped memory for tpu_custom_call.1']
    #allocation7 [shape = 'u8[16384]{0}', space=vmem, size = 0x4000, scoped, tag = 'input window, operand 2, single buffered']
    #allocation8 [shape = 'u8[8192]{0}', space=vmem, size = 0x2000, scoped, tag = 'input window, operand 3, single buffered']
    #allocation9 [shape = 's32[1]{0}', space=sflag, size = 0x4, scoped, tag = 'scoped memory for tpu_custom_call.1']
    #allocation10 [shape = 'u8[2048]{0}', space=vmem, size = 0x800, scoped, tag = 'input window, operand 4']
    #allocation11 [shape = 'u8[2048]{0}', space=vmem, size = 0x800, scoped, tag = 'input window, operand 5']
    #allocation12 [shape = 'u8[786432]{0}', space=vmem, size = 0xc0000, scoped, tag = 'input window, operand 6']
    #allocation13 [shape = 'u8[6144]{0}', space=vmem, size = 0x1800, scoped, tag = 'input window, operand 7']
    #allocation14 [shape = 'u8[262144]{0}', space=vmem, size = 0x40000, scoped, tag = 'input window, operand 8']
    #allocation15 [shape = 'u8[2048]{0}', space=vmem, size = 0x800, scoped, tag = 'input window, operand 9']
    #allocation16 [shape = 'u8[2048]{0}', space=vmem, size = 0x800, scoped, tag = 'input window, operand 10']
    #allocation17 [shape = 'u8[2048]{0}', space=vmem, size = 0x800, scoped, tag = 'input window, operand 11']
    #allocation18 [shape = 'u8[2048]{0}', space=vmem, size = 0x800, scoped, tag = 'input window, operand 12']
    #allocation19 [shape = 'u8[1048576]{0}', space=vmem, size = 0x100000, scoped, tag = 'input window, operand 13']
    #allocation20 [shape = 'u8[8192]{0}', space=vmem, size = 0x2000, scoped, tag = 'input window, operand 14']
    #allocation21 [shape = 'u8[1048576]{0}', space=vmem, size = 0x100000, scoped, tag = 'input window, operand 15']
    #allocation22 [shape = 'u8[2048]{0}', space=vmem, size = 0x800, scoped, tag = 'input window, operand 16']
    #allocation23 [shape = 'u8[2048]{0}', space=vmem, size = 0x800, scoped, tag = 'input window, operand 17']
    #allocation24 [shape = 'u8[1024]{0}', space=vmem, size = 0x400, scoped, tag = 'input window, operand 18, single buffered']
    #allocation25 [shape = 'u8[1024]{0}', space=vmem, size = 0x400, scoped, tag = 'input window, operand 19, single buffered']
    #allocation26 [shape = 'u8[16384]{0}', space=vmem, size = 0x4000, scoped, tag = 'output window, operand 0, single buffered']
    %25 = vsyncpa [#allocation3], 0
    %26 = vsyncpa [#allocation6], 0
    %27 = vsyncpa [#allocation9], 0
    %28 = vsyncpa [#allocation4], 0
    loop: start=0, step=1, limit=5
    $region2: #{tpu_custom_call.1} parent=1 // loop_pre_header
      _
    $region3: #{tpu_custom_call.1} parent=1 // loop_header
      %s30 = sphi 0, %s34
      %p31 = scmp.ge.s32.totalorder %s30, 5
      %s37 = sphi 0, %s49
      %s38 = sphi 0, %s45
      %s39 = sphi 0, %s37
      %s40 = sphi 0, %s38
      %s41 = sphi 0, %s39
      %s42 = sphi 0, %s40
      %s52 = sphi 0, %s54
      %s55 = sphi 0, %s52
      %s56 = sphi 0, %s55
      %s72 = sphi 0, %s56
      %s76 = sphi 0, %s76
      %s78 = sphi 0, %s76
      %s79 = sphi 0, %s78
      %s93 = sphi 0, %s79
      %s99 = sphi 0, %s101
      %s102 = sphi 0, %s99
      %s103 = sphi 0, %s102
      %s119 = sphi 0, %s103
      %s123 = sphi 0, %s123
      %s125 = sphi 0, %s123
      %s126 = sphi 0, %s125
      %s140 = sphi 0, %s126
      %s146 = sphi 0, %s148
      %s149 = sphi 0, %s146
      %s150 = sphi 0, %s149
      %s166 = sphi 0, %s150
      %s172 = sphi 0, %s174
      %s175 = sphi 0, %s172
      %s176 = sphi 0, %s175
      %s192 = sphi 0, %s176
      %s198 = sphi 0, %s200
      %s201 = sphi 0, %s198
      %s202 = sphi 0, %s201
      %s218 = sphi 0, %s202
      %s224 = sphi 0, %s226
      %s227 = sphi 0, %s224
      %s228 = sphi 0, %s227
      %s244 = sphi 0, %s228
      %s250 = sphi 0, %s252
      %s253 = sphi 0, %s250
      %s254 = sphi 0, %s253
      %s270 = sphi 0, %s254
      %s276 = sphi 0, %s278
      %s279 = sphi 0, %s276
      %s280 = sphi 0, %s279
      %s296 = sphi 0, %s280
      %s302 = sphi 0, %s304
      %s305 = sphi 0, %s302
      %s306 = sphi 0, %s305
      %s322 = sphi 0, %s306
      %s328 = sphi 0, %s330
      %s331 = sphi 0, %s328
      %s332 = sphi 0, %s331
      %s348 = sphi 0, %s332
      %s354 = sphi 0, %s356
      %s357 = sphi 0, %s354
      %s358 = sphi 0, %s357
      %s374 = sphi 0, %s358
      %s380 = sphi 0, %s382
      %s383 = sphi 0, %s380
      %s384 = sphi 0, %s383
      %s400 = sphi 0, %s384
      %s406 = sphi 0, %s408
      %s409 = sphi 0, %s406
      %s410 = sphi 0, %s409
      %s426 = sphi 0, %s410
      %s432 = sphi 0, %s434
      %s435 = sphi 0, %s432
      %s436 = sphi 0, %s435
      %s452 = sphi 0, %s436
      %s458 = sphi 0, %s460
      %s461 = sphi 0, %s458
      %s462 = sphi 0, %s461
      %s478 = sphi 0, %s462
      %s484 = sphi 0, %s486
      %s487 = sphi 0, %s484
      %s488 = sphi 0, %s487
      %s504 = sphi 0, %s488
      %s508 = sphi 0, %s508
      %s510 = sphi 0, %s508
      %s511 = sphi 0, %s510
      %s525 = sphi 0, %s511
      %s529 = sphi 0, %s529
      %s531 = sphi 0, %s529
      %s532 = sphi 0, %s531
      %s546 = sphi 0, %s532
      %s552 = sphi 0, %s554
      %s555 = sphi 0, %s552
      %s556 = sphi 0, %s555
      %s572 = sphi 0, %s556
    $region4: #{tpu_custom_call.1} parent=1 // loop_header_branch
      %33 = sbr.rel (%p31) target = $region8
    $region5: #{tpu_custom_call.1} parent=1 // loop_body
      %s35 = ssub.s32 %s30, 1
      %s36 = ssub.s32 %s30, 2
      %s43 = sadd.s32 1, %s38
      %p44 = scmp.ge.s32.totalorder %s43, 3
      %s45 = scalar_select %p44, 0, %s43
      %s46 = sadd.s32 1, %s37
      %s47 = scalar_select %p44, %s46, %s37
      %p48 = scmp.ge.s32.totalorder %s47, 1
      %s49 = scalar_select %p48, 0, %s47
      %s50 = ssub.s32 %s37, %s49
      %p51 = scmp.eq.s32.totalorder %s50, 0
      %s53 = sadd.s32 %s52, 1
      %s54 = scalar_select %p51, %s52, %s53
      %p57 = pneg %p51
      %p58 = scmp.eq.s32.totalorder %s30, 2
      %p59 = por %p57, %p58
      %p60 = scmp.ne.s32.totalorder %s52, %s55
      %p61 = scmp.eq.s32.totalorder %s30, 0
      %p62 = por %p60, %p61
      %p63 = scmp.ne.s32.totalorder %s52, %s55
      %p64 = scmp.eq.s32.totalorder %s35, 2
      %p65 = por %p63, %p64
      %p66 = scmp.ne.s32.totalorder %s55, %s56
      %p67 = scmp.eq.s32.totalorder %s35, 0
      %p68 = por %p66, %p67
      %p69 = scmp.ne.s32.totalorder %s55, %s56
      %p70 = scmp.eq.s32.totalorder %s36, 2
      %p71 = por %p69, %p70
      %p73 = scmp.ne.s32.totalorder %s56, %s72
      %p74 = scmp.eq.s32.totalorder %s36, 0
      %p75 = por %p73, %p74
      %s77 = sadd.s32 %s76, 1
      %p80 = scmp.eq.s32.totalorder %s30, 2
      %p81 = scmp.ne.s32.totalorder %s76, %s78
      %p82 = scmp.eq.s32.totalorder %s30, 0
      %p83 = por %p81, %p82
      %p84 = scmp.ne.s32.totalorder %s76, %s78
      %p85 = scmp.eq.s32.totalorder %s35, 2
      %p86 = por %p84, %p85
      %p87 = scmp.ne.s32.totalorder %s78, %s79
      %p88 = scmp.eq.s32.totalorder %s35, 0
      %p89 = por %p87, %p88
      %p90 = scmp.ne.s32.totalorder %s78, %s79
      %p91 = scmp.eq.s32.totalorder %s36, 2
      %p92 = por %p90, %p91
      %p94 = scmp.ne.s32.totalorder %s79, %s93
      %p95 = scmp.eq.s32.totalorder %s36, 0
      %p96 = por %p94, %p95
      %s97 = ssub.s32 %s37, %s49
      %p98 = scmp.eq.s32.totalorder %s97, 0
      %s100 = sadd.s32 %s99, 1
      %s101 = scalar_select %p98, %s99, %s100
      %p104 = pneg %p98
      %p105 = scmp.eq.s32.totalorder %s30, 2
      %p106 = por %p104, %p105
      %p107 = scmp.ne.s32.totalorder %s99, %s102
      %p108 = scmp.eq.s32.totalorder %s30, 0
      %p109 = por %p107, %p108
      %p110 = scmp.ne.s32.totalorder %s99, %s102
      %p111 = scmp.eq.s32.totalorder %s35, 2
      %p112 = por %p110, %p111
      %p113 = scmp.ne.s32.totalorder %s102, %s103
      %p114 = scmp.eq.s32.totalorder %s35, 0
      %p115 = por %p113, %p114
      %p116 = scmp.ne.s32.totalorder %s102, %s103
      %p117 = scmp.eq.s32.totalorder %s36, 2
      %p118 = por %p116, %p117
      %p120 = scmp.ne.s32.totalorder %s103, %s119
      %p121 = scmp.eq.s32.totalorder %s36, 0
      %p122 = por %p120, %p121
      %s124 = sadd.s32 %s123, 1
      %p127 = scmp.eq.s32.totalorder %s30, 2
      %p128 = scmp.ne.s32.totalorder %s123, %s125
      %p129 = scmp.eq.s32.totalorder %s30, 0
      %p130 = por %p128, %p129
      %p131 = scmp.ne.s32.totalorder %s123, %s125
      %p132 = scmp.eq.s32.totalorder %s35, 2
      %p133 = por %p131, %p132
      %p134 = scmp.ne.s32.totalorder %s125, %s126
      %p135 = scmp.eq.s32.totalorder %s35, 0
      %p136 = por %p134, %p135
      %p137 = scmp.ne.s32.totalorder %s125, %s126
      %p138 = scmp.eq.s32.totalorder %s36, 2
      %p139 = por %p137, %p138
      %p141 = scmp.ne.s32.totalorder %s126, %s140
      %p142 = scmp.eq.s32.totalorder %s36, 0
      %p143 = por %p141, %p142
      %s144 = ssub.s32 %s38, %s45
      %p145 = scmp.eq.s32.totalorder %s144, 0
      %s147 = sadd.s32 %s146, 1
      %s148 = scalar_select %p145, %s146, %s147
      %p151 = pneg %p145
      %p152 = scmp.eq.s32.totalorder %s30, 2
      %p153 = por %p151, %p152
      %p154 = scmp.ne.s32.totalorder %s146, %s149
      %p155 = scmp.eq.s32.totalorder %s30, 0
      %p156 = por %p154, %p155
      %p157 = scmp.ne.s32.totalorder %s146, %s149
      %p158 = scmp.eq.s32.totalorder %s35, 2
      %p159 = por %p157, %p158
      %p160 = scmp.ne.s32.totalorder %s149, %s150
      %p161 = scmp.eq.s32.totalorder %s35, 0
      %p162 = por %p160, %p161
      %p163 = scmp.ne.s32.totalorder %s149, %s150
      %p164 = scmp.eq.s32.totalorder %s36, 2
      %p165 = por %p163, %p164
      %p167 = scmp.ne.s32.totalorder %s150, %s166
      %p168 = scmp.eq.s32.totalorder %s36, 0
      %p169 = por %p167, %p168
      %s170 = ssub.s32 %s38, %s45
      %p171 = scmp.eq.s32.totalorder %s170, 0
      %s173 = sadd.s32 %s172, 1
      %s174 = scalar_select %p171, %s172, %s173
      %p177 = pneg %p171
      %p178 = scmp.eq.s32.totalorder %s30, 2
      %p179 = por %p177, %p178
      %p180 = scmp.ne.s32.totalorder %s172, %s175
      %p181 = scmp.eq.s32.totalorder %s30, 0
      %p182 = por %p180, %p181
      %p183 = scmp.ne.s32.totalorder %s172, %s175
      %p184 = scmp.eq.s32.totalorder %s35, 2
      %p185 = por %p183, %p184
      %p186 = scmp.ne.s32.totalorder %s175, %s176
      %p187 = scmp.eq.s32.totalorder %s35, 0
      %p188 = por %p186, %p187
      %p189 = scmp.ne.s32.totalorder %s175, %s176
      %p190 = scmp.eq.s32.totalorder %s36, 2
      %p191 = por %p189, %p190
      %p193 = scmp.ne.s32.totalorder %s176, %s192
      %p194 = scmp.eq.s32.totalorder %s36, 0
      %p195 = por %p193, %p194
      %s196 = ssub.s32 %s38, %s45
      %p197 = scmp.eq.s32.totalorder %s196, 0
      %s199 = sadd.s32 %s198, 1
      %s200 = scalar_select %p197, %s198, %s199
      %p203 = pneg %p197
      %p204 = scmp.eq.s32.totalorder %s30, 2
      %p205 = por %p203, %p204
      %p206 = scmp.ne.s32.totalorder %s198, %s201
      %p207 = scmp.eq.s32.totalorder %s30, 0
      %p208 = por %p206, %p207
      %p209 = scmp.ne.s32.totalorder %s198, %s201
      %p210 = scmp.eq.s32.totalorder %s35, 2
      %p211 = por %p209, %p210
      %p212 = scmp.ne.s32.totalorder %s201, %s202
      %p213 = scmp.eq.s32.totalorder %s35, 0
      %p214 = por %p212, %p213
      %p215 = scmp.ne.s32.totalorder %s201, %s202
      %p216 = scmp.eq.s32.totalorder %s36, 2
      %p217 = por %p215, %p216
      %p219 = scmp.ne.s32.totalorder %s202, %s218
      %p220 = scmp.eq.s32.totalorder %s36, 0
      %p221 = por %p219, %p220
      %s222 = ssub.s32 %s38, %s45
      %p223 = scmp.eq.s32.totalorder %s222, 0
      %s225 = sadd.s32 %s224, 1
      %s226 = scalar_select %p223, %s224, %s225
      %p229 = pneg %p223
      %p230 = scmp.eq.s32.totalorder %s30, 2
      %p231 = por %p229, %p230
      %p232 = scmp.ne.s32.totalorder %s224, %s227
      %p233 = scmp.eq.s32.totalorder %s30, 0
      %p234 = por %p232, %p233
      %p235 = scmp.ne.s32.totalorder %s224, %s227
      %p236 = scmp.eq.s32.totalorder %s35, 2
      %p237 = por %p235, %p236
      %p238 = scmp.ne.s32.totalorder %s227, %s228
      %p239 = scmp.eq.s32.totalorder %s35, 0
      %p240 = por %p238, %p239
      %p241 = scmp.ne.s32.totalorder %s227, %s228
      %p242 = scmp.eq.s32.totalorder %s36, 2
      %p243 = por %p241, %p242
      %p245 = scmp.ne.s32.totalorder %s228, %s244
      %p246 = scmp.eq.s32.totalorder %s36, 0
      %p247 = por %p245, %p246
      %s248 = ssub.s32 %s38, %s45
      %p249 = scmp.eq.s32.totalorder %s248, 0
      %s251 = sadd.s32 %s250, 1
      %s252 = scalar_select %p249, %s250, %s251
      %p255 = pneg %p249
      %p256 = scmp.eq.s32.totalorder %s30, 2
      %p257 = por %p255, %p256
      %p258 = scmp.ne.s32.totalorder %s250, %s253
      %p259 = scmp.eq.s32.totalorder %s30, 0
      %p260 = por %p258, %p259
      %p261 = scmp.ne.s32.totalorder %s250, %s253
      %p262 = scmp.eq.s32.totalorder %s35, 2
      %p263 = por %p261, %p262
      %p264 = scmp.ne.s32.totalorder %s253, %s254
      %p265 = scmp.eq.s32.totalorder %s35, 0
      %p266 = por %p264, %p265
      %p267 = scmp.ne.s32.totalorder %s253, %s254
      %p268 = scmp.eq.s32.totalorder %s36, 2
      %p269 = por %p267, %p268
      %p271 = scmp.ne.s32.totalorder %s254, %s270
      %p272 = scmp.eq.s32.totalorder %s36, 0
      %p273 = por %p271, %p272
      %s274 = ssub.s32 %s38, %s45
      %p275 = scmp.eq.s32.totalorder %s274, 0
      %s277 = sadd.s32 %s276, 1
      %s278 = scalar_select %p275, %s276, %s277
      %p281 = pneg %p275
      %p282 = scmp.eq.s32.totalorder %s30, 2
      %p283 = por %p281, %p282
      %p284 = scmp.ne.s32.totalorder %s276, %s279
      %p285 = scmp.eq.s32.totalorder %s30, 0
      %p286 = por %p284, %p285
      %p287 = scmp.ne.s32.totalorder %s276, %s279
      %p288 = scmp.eq.s32.totalorder %s35, 2
      %p289 = por %p287, %p288
      %p290 = scmp.ne.s32.totalorder %s279, %s280
      %p291 = scmp.eq.s32.totalorder %s35, 0
      %p292 = por %p290, %p291
      %p293 = scmp.ne.s32.totalorder %s279, %s280
      %p294 = scmp.eq.s32.totalorder %s36, 2
      %p295 = por %p293, %p294
      %p297 = scmp.ne.s32.totalorder %s280, %s296
      %p298 = scmp.eq.s32.totalorder %s36, 0
      %p299 = por %p297, %p298
      %s300 = ssub.s32 %s38, %s45
      %p301 = scmp.eq.s32.totalorder %s300, 0
      %s303 = sadd.s32 %s302, 1
      %s304 = scalar_select %p301, %s302, %s303
      %p307 = pneg %p301
      %p308 = scmp.eq.s32.totalorder %s30, 2
      %p309 = por %p307, %p308
      %p310 = scmp.ne.s32.totalorder %s302, %s305
      %p311 = scmp.eq.s32.totalorder %s30, 0
      %p312 = por %p310, %p311
      %p313 = scmp.ne.s32.totalorder %s302, %s305
      %p314 = scmp.eq.s32.totalorder %s35, 2
      %p315 = por %p313, %p314
      %p316 = scmp.ne.s32.totalorder %s305, %s306
      %p317 = scmp.eq.s32.totalorder %s35, 0
      %p318 = por %p316, %p317
      %p319 = scmp.ne.s32.totalorder %s305, %s306
      %p320 = scmp.eq.s32.totalorder %s36, 2
      %p321 = por %p319, %p320
      %p323 = scmp.ne.s32.totalorder %s306, %s322
      %p324 = scmp.eq.s32.totalorder %s36, 0
      %p325 = por %p323, %p324
      %s326 = ssub.s32 %s38, %s45
      %p327 = scmp.eq.s32.totalorder %s326, 0
      %s329 = sadd.s32 %s328, 1
      %s330 = scalar_select %p327, %s328, %s329
      %p333 = pneg %p327
      %p334 = scmp.eq.s32.totalorder %s30, 2
      %p335 = por %p333, %p334
      %p336 = scmp.ne.s32.totalorder %s328, %s331
      %p337 = scmp.eq.s32.totalorder %s30, 0
      %p338 = por %p336, %p337
      %p339 = scmp.ne.s32.totalorder %s328, %s331
      %p340 = scmp.eq.s32.totalorder %s35, 2
      %p341 = por %p339, %p340
      %p342 = scmp.ne.s32.totalorder %s331, %s332
      %p343 = scmp.eq.s32.totalorder %s35, 0
      %p344 = por %p342, %p343
      %p345 = scmp.ne.s32.totalorder %s331, %s332
      %p346 = scmp.eq.s32.totalorder %s36, 2
      %p347 = por %p345, %p346
      %p349 = scmp.ne.s32.totalorder %s332, %s348
      %p350 = scmp.eq.s32.totalorder %s36, 0
      %p351 = por %p349, %p350
      %s352 = ssub.s32 %s38, %s45
      %p353 = scmp.eq.s32.totalorder %s352, 0
      %s355 = sadd.s32 %s354, 1
      %s356 = scalar_select %p353, %s354, %s355
      %p359 = pneg %p353
      %p360 = scmp.eq.s32.totalorder %s30, 2
      %p361 = por %p359, %p360
      %p362 = scmp.ne.s32.totalorder %s354, %s357
      %p363 = scmp.eq.s32.totalorder %s30, 0
      %p364 = por %p362, %p363
      %p365 = scmp.ne.s32.totalorder %s354, %s357
      %p366 = scmp.eq.s32.totalorder %s35, 2
      %p367 = por %p365, %p366
      %p368 = scmp.ne.s32.totalorder %s357, %s358
      %p369 = scmp.eq.s32.totalorder %s35, 0
      %p370 = por %p368, %p369
      %p371 = scmp.ne.s32.totalorder %s357, %s358
      %p372 = scmp.eq.s32.totalorder %s36, 2
      %p373 = por %p371, %p372
      %p375 = scmp.ne.s32.totalorder %s358, %s374
      %p376 = scmp.eq.s32.totalorder %s36, 0
      %p377 = por %p375, %p376
      %s378 = ssub.s32 %s38, %s45
      %p379 = scmp.eq.s32.totalorder %s378, 0
      %s381 = sadd.s32 %s380, 1
      %s382 = scalar_select %p379, %s380, %s381
      %p385 = pneg %p379
      %p386 = scmp.eq.s32.totalorder %s30, 2
      %p387 = por %p385, %p386
      %p388 = scmp.ne.s32.totalorder %s380, %s383
      %p389 = scmp.eq.s32.totalorder %s30, 0
      %p390 = por %p388, %p389
      %p391 = scmp.ne.s32.totalorder %s380, %s383
      %p392 = scmp.eq.s32.totalorder %s35, 2
      %p393 = por %p391, %p392
      %p394 = scmp.ne.s32.totalorder %s383, %s384
      %p395 = scmp.eq.s32.totalorder %s35, 0
      %p396 = por %p394, %p395
      %p397 = scmp.ne.s32.totalorder %s383, %s384
      %p398 = scmp.eq.s32.totalorder %s36, 2
      %p399 = por %p397, %p398
      %p401 = scmp.ne.s32.totalorder %s384, %s400
      %p402 = scmp.eq.s32.totalorder %s36, 0
      %p403 = por %p401, %p402
      %s404 = ssub.s32 %s38, %s45
      %p405 = scmp.eq.s32.totalorder %s404, 0
      %s407 = sadd.s32 %s406, 1
      %s408 = scalar_select %p405, %s406, %s407
      %p411 = pneg %p405
      %p412 = scmp.eq.s32.totalorder %s30, 2
      %p413 = por %p411, %p412
      %p414 = scmp.ne.s32.totalorder %s406, %s409
      %p415 = scmp.eq.s32.totalorder %s30, 0
      %p416 = por %p414, %p415
      %p417 = scmp.ne.s32.totalorder %s406, %s409
      %p418 = scmp.eq.s32.totalorder %s35, 2
      %p419 = por %p417, %p418
      %p420 = scmp.ne.s32.totalorder %s409, %s410
      %p421 = scmp.eq.s32.totalorder %s35, 0
      %p422 = por %p420, %p421
      %p423 = scmp.ne.s32.totalorder %s409, %s410
      %p424 = scmp.eq.s32.totalorder %s36, 2
      %p425 = por %p423, %p424
      %p427 = scmp.ne.s32.totalorder %s410, %s426
      %p428 = scmp.eq.s32.totalorder %s36, 0
      %p429 = por %p427, %p428
      %s430 = ssub.s32 %s38, %s45
      %p431 = scmp.eq.s32.totalorder %s430, 0
      %s433 = sadd.s32 %s432, 1
      %s434 = scalar_select %p431, %s432, %s433
      %p437 = pneg %p431
      %p438 = scmp.eq.s32.totalorder %s30, 2
      %p439 = por %p437, %p438
      %p440 = scmp.ne.s32.totalorder %s432, %s435
      %p441 = scmp.eq.s32.totalorder %s30, 0
      %p442 = por %p440, %p441
      %p443 = scmp.ne.s32.totalorder %s432, %s435
      %p444 = scmp.eq.s32.totalorder %s35, 2
      %p445 = por %p443, %p444
      %p446 = scmp.ne.s32.totalorder %s435, %s436
      %p447 = scmp.eq.s32.totalorder %s35, 0
      %p448 = por %p446, %p447
      %p449 = scmp.ne.s32.totalorder %s435, %s436
      %p450 = scmp.eq.s32.totalorder %s36, 2
      %p451 = por %p449, %p450
      %p453 = scmp.ne.s32.totalorder %s436, %s452
      %p454 = scmp.eq.s32.totalorder %s36, 0
      %p455 = por %p453, %p454
      %s456 = ssub.s32 %s38, %s45
      %p457 = scmp.eq.s32.totalorder %s456, 0
      %s459 = sadd.s32 %s458, 1
      %s460 = scalar_select %p457, %s458, %s459
      %p463 = pneg %p457
      %p464 = scmp.eq.s32.totalorder %s30, 2
      %p465 = por %p463, %p464
      %p466 = scmp.ne.s32.totalorder %s458, %s461
      %p467 = scmp.eq.s32.totalorder %s30, 0
      %p468 = por %p466, %p467
      %p469 = scmp.ne.s32.totalorder %s458, %s461
      %p470 = scmp.eq.s32.totalorder %s35, 2
      %p471 = por %p469, %p470
      %p472 = scmp.ne.s32.totalorder %s461, %s462
      %p473 = scmp.eq.s32.totalorder %s35, 0
      %p474 = por %p472, %p473
      %p475 = scmp.ne.s32.totalorder %s461, %s462
      %p476 = scmp.eq.s32.totalorder %s36, 2
      %p477 = por %p475, %p476
      %p479 = scmp.ne.s32.totalorder %s462, %s478
      %p480 = scmp.eq.s32.totalorder %s36, 0
      %p481 = por %p479, %p480
      %s482 = ssub.s32 %s38, %s45
      %p483 = scmp.eq.s32.totalorder %s482, 0
      %s485 = sadd.s32 %s484, 1
      %s486 = scalar_select %p483, %s484, %s485
      %p489 = pneg %p483
      %p490 = scmp.eq.s32.totalorder %s30, 2
      %p491 = por %p489, %p490
      %p492 = scmp.ne.s32.totalorder %s484, %s487
      %p493 = scmp.eq.s32.totalorder %s30, 0
      %p494 = por %p492, %p493
      %p495 = scmp.ne.s32.totalorder %s484, %s487
      %p496 = scmp.eq.s32.totalorder %s35, 2
      %p497 = por %p495, %p496
      %p498 = scmp.ne.s32.totalorder %s487, %s488
      %p499 = scmp.eq.s32.totalorder %s35, 0
      %p500 = por %p498, %p499
      %p501 = scmp.ne.s32.totalorder %s487, %s488
      %p502 = scmp.eq.s32.totalorder %s36, 2
      %p503 = por %p501, %p502
      %p505 = scmp.ne.s32.totalorder %s488, %s504
      %p506 = scmp.eq.s32.totalorder %s36, 0
      %p507 = por %p505, %p506
      %s509 = sadd.s32 %s508, 1
      %p512 = scmp.eq.s32.totalorder %s30, 2
      %p513 = scmp.ne.s32.totalorder %s508, %s510
      %p514 = scmp.eq.s32.totalorder %s30, 0
      %p515 = por %p513, %p514
      %p516 = scmp.ne.s32.totalorder %s508, %s510
      %p517 = scmp.eq.s32.totalorder %s35, 2
      %p518 = por %p516, %p517
      %p519 = scmp.ne.s32.totalorder %s510, %s511
      %p520 = scmp.eq.s32.totalorder %s35, 0
      %p521 = por %p519, %p520
      %p522 = scmp.ne.s32.totalorder %s510, %s511
      %p523 = scmp.eq.s32.totalorder %s36, 2
      %p524 = por %p522, %p523
      %p526 = scmp.ne.s32.totalorder %s511, %s525
      %p527 = scmp.eq.s32.totalorder %s36, 0
      %p528 = por %p526, %p527
      %s530 = sadd.s32 %s529, 1
      %p533 = scmp.eq.s32.totalorder %s30, 2
      %p534 = scmp.ne.s32.totalorder %s529, %s531
      %p535 = scmp.eq.s32.totalorder %s30, 0
      %p536 = por %p534, %p535
      %p537 = scmp.ne.s32.totalorder %s529, %s531
      %p538 = scmp.eq.s32.totalorder %s35, 2
      %p539 = por %p537, %p538
      %p540 = scmp.ne.s32.totalorder %s531, %s532
      %p541 = scmp.eq.s32.totalorder %s35, 0
      %p542 = por %p540, %p541
      %p543 = scmp.ne.s32.totalorder %s531, %s532
      %p544 = scmp.eq.s32.totalorder %s36, 2
      %p545 = por %p543, %p544
      %p547 = scmp.ne.s32.totalorder %s532, %s546
      %p548 = scmp.eq.s32.totalorder %s36, 0
      %p549 = por %p547, %p548
      %s550 = ssub.s32 %s37, %s49
      %p551 = scmp.eq.s32.totalorder %s550, 0
      %s553 = sadd.s32 %s552, 1
      %s554 = scalar_select %p551, %s552, %s553
      %p557 = pneg %p551
      %p558 = scmp.eq.s32.totalorder %s30, 2
      %p559 = por %p557, %p558
      %p560 = scmp.ne.s32.totalorder %s552, %s555
      %p561 = scmp.eq.s32.totalorder %s30, 0
      %p562 = por %p560, %p561
      %p563 = scmp.ne.s32.totalorder %s552, %s555
      %p564 = scmp.eq.s32.totalorder %s35, 2
      %p565 = por %p563, %p564
      %p566 = scmp.ne.s32.totalorder %s555, %s556
      %p567 = scmp.eq.s32.totalorder %s35, 0
      %p568 = por %p566, %p567
      %p569 = scmp.ne.s32.totalorder %s555, %s556
      %p570 = scmp.eq.s32.totalorder %s36, 2
      %p571 = por %p569, %p570
      %p573 = scmp.ne.s32.totalorder %s556, %s572
      %p574 = scmp.eq.s32.totalorder %s36, 0
      %p575 = por %p573, %p574
      %p576 = scmp.le.s32.totalorder 1, %s30
      %p577 = scmp.lt.s32.totalorder %s30, 4
      %p578 = pnand %p576, %p577
      %p579 = pneg %p578
      // Predicated region
      $region9: #{tpu_custom_call.1} parent=5 // pred_check
        _
      $region10: #{tpu_custom_call.1} parent=5 // pred_check_branch
        %581 = sbr.rel (%p578) target = $region12
      $region11: #{tpu_custom_call.1} parent=5 // pred_region
        %s582 = ssub.s32 %s30, 1
        // Predicated region
        $region13: #{tpu_custom_call.1} parent=11 // pred_check
          %p583 = pneg %p68
        $region14: #{tpu_custom_call.1} parent=11 // pred_check_branch
          %585 = sbr.rel (%p583) target = $region16
        $region15: #{tpu_custom_call.1} parent=11 // pred_region
          %s586 = smul.u32 2, %s39
          %s588 = ssub.s32 640, 640
          %589 = vsyncadd [#allocation3], %s588
          %s590 = smul.addr %s586, 5
          %s591 = smul.addr %s590, 64
          %s592 = scalar_lea.hbm %s0, %s591
          %s593 = sshll.u32 [#allocation2], 4
          %s594 = int_to_ptr.vmem [resolvable:$true] %s593
          %599 = dma.hbm_to_vmem [thread:$0]  %s592, 640, %s594, [#allocation3], 320, 320, 20
        $region16: #{tpu_custom_call.1} parent=11 // pred_fallthru
          _
        // Predicated region
        $region17: #{tpu_custom_call.1} parent=11 // pred_check
          %p600 = pneg %p89
        $region18: #{tpu_custom_call.1} parent=11 // pred_check_branch
          %602 = sbr.rel (%p600) target = $region20
        $region19: #{tpu_custom_call.1} parent=11 // pred_region
          %s604 = ssub.s32 10240, 10240
          %605 = vsyncadd [#allocation6], %s604
          %s606 = sshll.u32 [#allocation5], 4
          %s607 = int_to_ptr.vmem [resolvable:$true] %s606
          %612 = dma.hbm_to_vmem [thread:$0]  %s1, 10240, %s607, [#allocation6], 128, 128, 8
        $region20: #{tpu_custom_call.1} parent=11 // pred_fallthru
          _
        // Predicated region
        $region21: #{tpu_custom_call.1} parent=11 // pred_check
          %p613 = pneg %p115
        $region22: #{tpu_custom_call.1} parent=11 // pred_check_branch
          %615 = sbr.rel (%p613) target = $region24
        $region23: #{tpu_custom_call.1} parent=11 // pred_region
          %s616 = smul.u32 2, %s39
          %s618 = ssub.s32 512, 512
          %619 = vsyncadd [#allocation6], %s618
          %s620 = smul.addr %s616, 2
          %s621 = smul.addr %s620, 128
          %s622 = scalar_lea.hbm %s2, %s621
          %s623 = sshll.u32 [#allocation7], 4
          %s624 = int_to_ptr.vmem [resolvable:$true] %s623
          %629 = dma.hbm_to_vmem [thread:$0]  %s622, 512, %s624, [#allocation6], 256, 256, 16
        $region24: #{tpu_custom_call.1} parent=11 // pred_fallthru
          _
        // Predicated region
        $region25: #{tpu_custom_call.1} parent=11 // pred_check
          %p630 = pneg %p136
        $region26: #{tpu_custom_call.1} parent=11 // pred_check_branch
          %632 = sbr.rel (%p630) target = $region28
        $region27: #{tpu_custom_call.1} parent=11 // pred_region
          %s634 = ssub.s32 256, 256
          %635 = vsyncadd [#allocation9], %s634
          %s636 = sshll.u32 [#allocation8], 4
          %s637 = int_to_ptr.vmem [resolvable:$true] %s636
          %642 = dma.hbm_to_vmem [thread:$0]  %s3, 256, %s637, [#allocation9], 128, 128, 8
        $region28: #{tpu_custom_call.1} parent=11 // pred_fallthru
          _
        // Predicated region
        $region29: #{tpu_custom_call.1} parent=11 // pred_check
          %p643 = pneg %p521
        $region30: #{tpu_custom_call.1} parent=11 // pred_check_branch
          %645 = sbr.rel (%p643) target = $region32
        $region31: #{tpu_custom_call.1} parent=11 // pred_region
          %s647 = ssub.s32 32, 32
          %648 = vsyncadd [#allocation6], %s647
          %s650 = sshll.u32 [#allocation24], 4
          %s651 = int_to_ptr.vmem [resolvable:$true] %s650
          %653 = dma.hbm_to_vmem [thread:$0]  %s18, 32, %s651, [#allocation6]
        $region32: #{tpu_custom_call.1} parent=11 // pred_fallthru
          _
        // Predicated region
        $region33: #{tpu_custom_call.1} parent=11 // pred_check
          %p654 = pneg %p542
        $region34: #{tpu_custom_call.1} parent=11 // pred_check_branch
          %656 = sbr.rel (%p654) target = $region36
        $region35: #{tpu_custom_call.1} parent=11 // pred_region
          %s658 = ssub.s32 32, 32
          %659 = vsyncadd [#allocation9], %s658
          %s661 = sshll.u32 [#allocation25], 4
          %s662 = int_to_ptr.vmem [resolvable:$true] %s661
          %664 = dma.hbm_to_vmem [thread:$0]  %s19, 32, %s662, [#allocation9]
        $region36: #{tpu_custom_call.1} parent=11 // pred_fallthru
          _
      $region12: #{tpu_custom_call.1} parent=5 // pred_fallthru
        _
      %p665 = scmp.lt.s32.totalorder %s30, 3
      // Predicated region
      $region37: #{tpu_custom_call.1} parent=5 // pred_check
        %p666 = pneg %p665
      $region38: #{tpu_custom_call.1} parent=5 // pred_check_branch
        %668 = sbr.rel (%p666) target = $region40
      $region39: #{tpu_custom_call.1} parent=5 // pred_region
        // Predicated region
        $region41: #{tpu_custom_call.1} parent=39 // pred_check
          %p669 = pneg %p156
        $region42: #{tpu_custom_call.1} parent=39 // pred_check_branch
          %671 = sbr.rel (%p669) target = $region44
        $region43: #{tpu_custom_call.1} parent=39 // pred_region
          %s672 = sand.u32 %s30, 1
          %s673 = scalar_lea.sflag [#allocation3], %s672
          %s674 = sand.u32 %s146, 1
          %s675 = smul.addr %s674, 2
          %s676 = scalar_lea.vmem [#allocation10], %s675
          %s678 = ssub.s32 32, 32
          %679 = vsyncadd %s673, %s678
          %s680 = smul.addr %s38, 2
          %s681 = smul.addr %s680, 16
          %s682 = scalar_lea.hbm %s4, %s681
          %s684 = sshll.u32 %s676, 4
          %s685 = int_to_ptr.vmem [resolvable:$true] %s684
          %687 = dma.hbm_to_vmem [thread:$0]  %s682, 32, %s685, %s673
        $region44: #{tpu_custom_call.1} parent=39 // pred_fallthru
          _
        // Predicated region
        $region45: #{tpu_custom_call.1} parent=39 // pred_check
          %p688 = pneg %p182
        $region46: #{tpu_custom_call.1} parent=39 // pred_check_branch
          %690 = sbr.rel (%p688) target = $region48
        $region47: #{tpu_custom_call.1} parent=39 // pred_region
          %s691 = sand.u32 %s30, 1
          %s692 = scalar_lea.sflag [#allocation3], %s691
          %s693 = sand.u32 %s172, 1
          %s694 = smul.addr %s693, 2
          %s695 = scalar_lea.vmem [#allocation11], %s694
          %s697 = ssub.s32 32, 32
          %698 = vsyncadd %s692, %s697
          %s699 = smul.addr %s38, 2
          %s700 = smul.addr %s699, 16
          %s701 = scalar_lea.hbm %s5, %s700
          %s703 = sshll.u32 %s695, 4
          %s704 = int_to_ptr.vmem [resolvable:$true] %s703
          %706 = dma.hbm_to_vmem [thread:$0]  %s701, 32, %s704, %s692
        $region48: #{tpu_custom_call.1} parent=39 // pred_fallthru
          _
        // Predicated region
        $region49: #{tpu_custom_call.1} parent=39 // pred_check
          %p707 = pneg %p208
        $region50: #{tpu_custom_call.1} parent=39 // pred_check_branch
          %709 = sbr.rel (%p707) target = $region52
        $region51: #{tpu_custom_call.1} parent=39 // pred_region
          %s710 = sand.u32 %s30, 1
          %s711 = scalar_lea.sflag [#allocation3], %s710
          %s712 = sand.u32 %s198, 1
          %s713 = smul.addr %s712, 768
          %s714 = scalar_lea.vmem [#allocation12], %s713
          %s716 = ssub.s32 12288, 12288
          %717 = vsyncadd %s711, %s716
          %s718 = smul.addr %s38, 192
          %s719 = smul.addr %s718, 64
          %s720 = scalar_lea.hbm %s6, %s719
          %s721 = sshll.u32 %s714, 4
          %s722 = int_to_ptr.vmem [resolvable:$true] %s721
          %727 = dma.hbm_to_vmem [thread:$0]  %s720, 12288, %s722, %s711, 384, 384, 24
        $region52: #{tpu_custom_call.1} parent=39 // pred_fallthru
          _
        // Predicated region
        $region53: #{tpu_custom_call.1} parent=39 // pred_check
          %p728 = pneg %p234
        $region54: #{tpu_custom_call.1} parent=39 // pred_check_branch
          %730 = sbr.rel (%p728) target = $region56
        $region55: #{tpu_custom_call.1} parent=39 // pred_region
          %s731 = sand.u32 %s30, 1
          %s732 = scalar_lea.sflag [#allocation3], %s731
          %s733 = sand.u32 %s224, 1
          %s734 = smul.addr %s733, 6
          %s735 = scalar_lea.vmem [#allocation13], %s734
          %s737 = ssub.s32 96, 96
          %738 = vsyncadd %s732, %s737
          %s739 = smul.addr %s38, 6
          %s740 = smul.addr %s739, 16
          %s741 = scalar_lea.hbm %s7, %s740
          %s743 = sshll.u32 %s735, 4
          %s744 = int_to_ptr.vmem [resolvable:$true] %s743
          %746 = dma.hbm_to_vmem [thread:$0]  %s741, 96, %s744, %s732
        $region56: #{tpu_custom_call.1} parent=39 // pred_fallthru
          _
        // Predicated region
        $region57: #{tpu_custom_call.1} parent=39 // pred_check
          %p747 = pneg %p260
        $region58: #{tpu_custom_call.1} parent=39 // pred_check_branch
          %749 = sbr.rel (%p747) target = $region60
        $region59: #{tpu_custom_call.1} parent=39 // pred_region
          %s750 = sand.u32 %s30, 1
          %s751 = scalar_lea.sflag [#allocation3], %s750
          %s752 = sand.u32 %s250, 1
          %s753 = smul.addr %s752, 256
          %s754 = scalar_lea.vmem [#allocation14], %s753
          %s756 = ssub.s32 4096, 4096
          %757 = vsyncadd %s751, %s756
          %s758 = smul.addr %s38, 64
          %s759 = smul.addr %s758, 64
          %s760 = scalar_lea.hbm %s8, %s759
          %s761 = sshll.u32 %s754, 4
          %s762 = int_to_ptr.vmem [resolvable:$true] %s761
          %767 = dma.hbm_to_vmem [thread:$0]  %s760, 4096, %s762, %s751, 128, 128, 8
        $region60: #{tpu_custom_call.1} parent=39 // pred_fallthru
          _
        // Predicated region
        $region61: #{tpu_custom_call.1} parent=39 // pred_check
          %p768 = pneg %p286
        $region62: #{tpu_custom_call.1} parent=39 // pred_check_branch
          %770 = sbr.rel (%p768) target = $region64
        $region63: #{tpu_custom_call.1} parent=39 // pred_region
          %s771 = sand.u32 %s30, 1
          %s772 = scalar_lea.sflag [#allocation3], %s771
          %s773 = sand.u32 %s276, 1
          %s774 = smul.addr %s773, 2
          %s775 = scalar_lea.vmem [#allocation15], %s774
          %s777 = ssub.s32 32, 32
          %778 = vsyncadd %s772, %s777
          %s779 = smul.addr %s38, 2
          %s780 = smul.addr %s779, 16
          %s781 = scalar_lea.hbm %s9, %s780
          %s783 = sshll.u32 %s775, 4
          %s784 = int_to_ptr.vmem [resolvable:$true] %s783
          %786 = dma.hbm_to_vmem [thread:$0]  %s781, 32, %s784, %s772
        $region64: #{tpu_custom_call.1} parent=39 // pred_fallthru
          _
        // Predicated region
        $region65: #{tpu_custom_call.1} parent=39 // pred_check
          %p787 = pneg %p312
        $region66: #{tpu_custom_call.1} parent=39 // pred_check_branch
          %789 = sbr.rel (%p787) target = $region68
        $region67: #{tpu_custom_call.1} parent=39 // pred_region
          %s790 = sand.u32 %s30, 1
          %s791 = scalar_lea.sflag [#allocation3], %s790
          %s792 = sand.u32 %s302, 1
          %s793 = smul.addr %s792, 2
          %s794 = scalar_lea.vmem [#allocation16], %s793
          %s796 = ssub.s32 32, 32
          %797 = vsyncadd %s791, %s796
          %s798 = smul.addr %s38, 2
          %s799 = smul.addr %s798, 16
          %s800 = scalar_lea.hbm %s10, %s799
          %s802 = sshll.u32 %s794, 4
          %s803 = int_to_ptr.vmem [resolvable:$true] %s802
          %805 = dma.hbm_to_vmem [thread:$0]  %s800, 32, %s803, %s791
        $region68: #{tpu_custom_call.1} parent=39 // pred_fallthru
          _
        // Predicated region
        $region69: #{tpu_custom_call.1} parent=39 // pred_check
          %p806 = pneg %p338
        $region70: #{tpu_custom_call.1} parent=39 // pred_check_branch
          %808 = sbr.rel (%p806) target = $region72
        $region71: #{tpu_custom_call.1} parent=39 // pred_region
          %s809 = sand.u32 %s30, 1
          %s810 = scalar_lea.sflag [#allocation3], %s809
          %s811 = sand.u32 %s328, 1
          %s812 = smul.addr %s811, 2
          %s813 = scalar_lea.vmem [#allocation17], %s812
          %s815 = ssub.s32 32, 32
          %816 = vsyncadd %s810, %s815
          %s817 = smul.addr %s38, 2
          %s818 = smul.addr %s817, 16
          %s819 = scalar_lea.hbm %s11, %s818
          %s821 = sshll.u32 %s813, 4
          %s822 = int_to_ptr.vmem [resolvable:$true] %s821
          %824 = dma.hbm_to_vmem [thread:$0]  %s819, 32, %s822, %s810
        $region72: #{tpu_custom_call.1} parent=39 // pred_fallthru
          _
        // Predicated region
        $region73: #{tpu_custom_call.1} parent=39 // pred_check
          %p825 = pneg %p364
        $region74: #{tpu_custom_call.1} parent=39 // pred_check_branch
          %827 = sbr.rel (%p825) target = $region76
        $region75: #{tpu_custom_call.1} parent=39 // pred_region
          %s828 = sand.u32 %s30, 1
          %s829 = scalar_lea.sflag [#allocation3], %s828
          %s830 = sand.u32 %s354, 1
          %s831 = smul.addr %s830, 2
          %s832 = scalar_lea.vmem [#allocation18], %s831
          %s834 = ssub.s32 32, 32
          %835 = vsyncadd %s829, %s834
          %s836 = smul.addr %s38, 2
          %s837 = smul.addr %s836, 16
          %s838 = scalar_lea.hbm %s12, %s837
          %s840 = sshll.u32 %s832, 4
          %s841 = int_to_ptr.vmem [resolvable:$true] %s840
          %843 = dma.hbm_to_vmem [thread:$0]  %s838, 32, %s841, %s829
        $region76: #{tpu_custom_call.1} parent=39 // pred_fallthru
          _
        // Predicated region
        $region77: #{tpu_custom_call.1} parent=39 // pred_check
          %p844 = pneg %p390
        $region78: #{tpu_custom_call.1} parent=39 // pred_check_branch
          %846 = sbr.rel (%p844) target = $region80
        $region79: #{tpu_custom_call.1} parent=39 // pred_region
          %s847 = sand.u32 %s30, 1
          %s848 = scalar_lea.sflag [#allocation3], %s847
          %s849 = sand.u32 %s380, 1
          %s850 = smul.addr %s849, 1024
          %s851 = scalar_lea.vmem [#allocation19], %s850
          %s853 = ssub.s32 16384, 16384
          %854 = vsyncadd %s848, %s853
          %s855 = smul.addr %s38, 256
          %s856 = smul.addr %s855, 64
          %s857 = scalar_lea.hbm %s13, %s856
          %s858 = sshll.u32 %s851, 4
          %s859 = int_to_ptr.vmem [resolvable:$true] %s858
          %864 = dma.hbm_to_vmem [thread:$0]  %s857, 16384, %s859, %s848, 512, 512, 32
        $region80: #{tpu_custom_call.1} parent=39 // pred_fallthru
          _
        // Predicated region
        $region81: #{tpu_custom_call.1} parent=39 // pred_check
          %p865 = pneg %p416
        $region82: #{tpu_custom_call.1} parent=39 // pred_check_branch
          %867 = sbr.rel (%p865) target = $region84
        $region83: #{tpu_custom_call.1} parent=39 // pred_region
          %s868 = sand.u32 %s30, 1
          %s869 = scalar_lea.sflag [#allocation3], %s868
          %s870 = sand.u32 %s406, 1
          %s871 = smul.addr %s870, 8
          %s872 = scalar_lea.vmem [#allocation20], %s871
          %s874 = ssub.s32 128, 128
          %875 = vsyncadd %s869, %s874
          %s876 = smul.addr %s38, 8
          %s877 = smul.addr %s876, 16
          %s878 = scalar_lea.hbm %s14, %s877
          %s880 = sshll.u32 %s872, 4
          %s881 = int_to_ptr.vmem [resolvable:$true] %s880
          %883 = dma.hbm_to_vmem [thread:$0]  %s878, 128, %s881, %s869
        $region84: #{tpu_custom_call.1} parent=39 // pred_fallthru
          _
        // Predicated region
        $region85: #{tpu_custom_call.1} parent=39 // pred_check
          %p884 = pneg %p442
        $region86: #{tpu_custom_call.1} parent=39 // pred_check_branch
          %886 = sbr.rel (%p884) target = $region88
        $region87: #{tpu_custom_call.1} parent=39 // pred_region
          %s887 = sand.u32 %s30, 1
          %s888 = scalar_lea.sflag [#allocation3], %s887
          %s889 = sand.u32 %s432, 1
          %s890 = smul.addr %s889, 1024
          %s891 = scalar_lea.vmem [#allocation21], %s890
          %s893 = ssub.s32 16384, 16384
          %894 = vsyncadd %s888, %s893
          %s895 = smul.addr %s38, 256
          %s896 = smul.addr %s895, 64
          %s897 = scalar_lea.hbm %s15, %s896
          %s898 = sshll.u32 %s891, 4
          %s899 = int_to_ptr.vmem [resolvable:$true] %s898
          %904 = dma.hbm_to_vmem [thread:$0]  %s897, 16384, %s899, %s888, 128, 128, 8
        $region88: #{tpu_custom_call.1} parent=39 // pred_fallthru
          _
        // Predicated region
        $region89: #{tpu_custom_call.1} parent=39 // pred_check
          %p905 = pneg %p468
        $region90: #{tpu_custom_call.1} parent=39 // pred_check_branch
          %907 = sbr.rel (%p905) target = $region92
        $region91: #{tpu_custom_call.1} parent=39 // pred_region
          %s908 = sand.u32 %s30, 1
          %s909 = scalar_lea.sflag [#allocation3], %s908
          %s910 = sand.u32 %s458, 1
          %s911 = smul.addr %s910, 2
          %s912 = scalar_lea.vmem [#allocation22], %s911
          %s914 = ssub.s32 32, 32
          %915 = vsyncadd %s909, %s914
          %s916 = smul.addr %s38, 2
          %s917 = smul.addr %s916, 16
          %s918 = scalar_lea.hbm %s16, %s917
          %s920 = sshll.u32 %s912, 4
          %s921 = int_to_ptr.vmem [resolvable:$true] %s920
          %923 = dma.hbm_to_vmem [thread:$0]  %s918, 32, %s921, %s909
        $region92: #{tpu_custom_call.1} parent=39 // pred_fallthru
          _
        // Predicated region
        $region93: #{tpu_custom_call.1} parent=39 // pred_check
          %p924 = pneg %p494
        $region94: #{tpu_custom_call.1} parent=39 // pred_check_branch
          %926 = sbr.rel (%p924) target = $region96
        $region95: #{tpu_custom_call.1} parent=39 // pred_region
          %s927 = sand.u32 %s30, 1
          %s928 = scalar_lea.sflag [#allocation3], %s927
          %s929 = sand.u32 %s484, 1
          %s930 = smul.addr %s929, 2
          %s931 = scalar_lea.vmem [#allocation23], %s930
          %s933 = ssub.s32 32, 32
          %934 = vsyncadd %s928, %s933
          %s935 = smul.addr %s38, 2
          %s936 = smul.addr %s935, 16
          %s937 = scalar_lea.hbm %s17, %s936
          %s939 = sshll.u32 %s931, 4
          %s940 = int_to_ptr.vmem [resolvable:$true] %s939
          %942 = dma.hbm_to_vmem [thread:$0]  %s937, 32, %s940, %s928
        $region96: #{tpu_custom_call.1} parent=39 // pred_fallthru
          _
      $region40: #{tpu_custom_call.1} parent=5 // pred_fallthru
        _
      %p943 = scmp.le.s32.totalorder 1, %s30
      %p944 = scmp.lt.s32.totalorder %s30, 4
      %p945 = pnand %p943, %p944
      %p946 = pneg %p945
      // Predicated region
      $region97: #{tpu_custom_call.1} parent=5 // pred_check
        _
      $region98: #{tpu_custom_call.1} parent=5 // pred_check_branch
        %948 = sbr.rel (%p945) target = $region100
      $region99: #{tpu_custom_call.1} parent=5 // pred_region
        %s949 = ssub.s32 %s30, 1
        // Predicated region
        $region101: #{tpu_custom_call.1} parent=99 // pred_check
          %p950 = pneg %p68
        $region102: #{tpu_custom_call.1} parent=99 // pred_check_branch
          %952 = sbr.rel (%p950) target = $region104
        $region103: #{tpu_custom_call.1} parent=99 // pred_region
          %953 = dma.done [#allocation3], 640
        $region104: #{tpu_custom_call.1} parent=99 // pred_fallthru
          _
        // Predicated region
        $region105: #{tpu_custom_call.1} parent=99 // pred_check
          %p954 = pneg %p89
        $region106: #{tpu_custom_call.1} parent=99 // pred_check_branch
          %956 = sbr.rel (%p954) target = $region108
        $region107: #{tpu_custom_call.1} parent=99 // pred_region
          %957 = dma.done [#allocation6], 10240
        $region108: #{tpu_custom_call.1} parent=99 // pred_fallthru
          _
        // Predicated region
        $region109: #{tpu_custom_call.1} parent=99 // pred_check
          %p958 = pneg %p115
        $region110: #{tpu_custom_call.1} parent=99 // pred_check_branch
          %960 = sbr.rel (%p958) target = $region112
        $region111: #{tpu_custom_call.1} parent=99 // pred_region
          %961 = dma.done [#allocation6], 512
        $region112: #{tpu_custom_call.1} parent=99 // pred_fallthru
          _
        // Predicated region
        $region113: #{tpu_custom_call.1} parent=99 // pred_check
          %p962 = pneg %p136
        $region114: #{tpu_custom_call.1} parent=99 // pred_check_branch
          %964 = sbr.rel (%p962) target = $region116
        $region115: #{tpu_custom_call.1} parent=99 // pred_region
          %965 = dma.done [#allocation9], 256
        $region116: #{tpu_custom_call.1} parent=99 // pred_fallthru
          _
        %s966 = sand.u32 %s35, 1
        %s967 = scalar_lea.sflag [#allocation3], %s966
        %s968 = sand.u32 %s149, 1
        %s969 = smul.addr %s968, 2
        %s970 = scalar_lea.vmem [#allocation10], %s969
        // Predicated region
        $region117: #{tpu_custom_call.1} parent=99 // pred_check
          %p971 = pneg %p162
        $region118: #{tpu_custom_call.1} parent=99 // pred_check_branch
          %973 = sbr.rel (%p971) target = $region120
        $region119: #{tpu_custom_call.1} parent=99 // pred_region
          %974 = dma.done %s967, 32
        $region120: #{tpu_custom_call.1} parent=99 // pred_fallthru
          _
        %s975 = sand.u32 %s35, 1
        %s976 = scalar_lea.sflag [#allocation3], %s975
        %s977 = sand.u32 %s175, 1
        %s978 = smul.addr %s977, 2
        %s979 = scalar_lea.vmem [#allocation11], %s978
        // Predicated region
        $region121: #{tpu_custom_call.1} parent=99 // pred_check
          %p980 = pneg %p188
        $region122: #{tpu_custom_call.1} parent=99 // pred_check_branch
          %982 = sbr.rel (%p980) target = $region124
        $region123: #{tpu_custom_call.1} parent=99 // pred_region
          %983 = dma.done %s976, 32
        $region124: #{tpu_custom_call.1} parent=99 // pred_fallthru
          _
        %s984 = sand.u32 %s35, 1
        %s985 = scalar_lea.sflag [#allocation3], %s984
        %s986 = sand.u32 %s201, 1
        %s987 = smul.addr %s986, 768
        %s988 = scalar_lea.vmem [#allocation12], %s987
        // Predicated region
        $region125: #{tpu_custom_call.1} parent=99 // pred_check
          %p989 = pneg %p214
        $region126: #{tpu_custom_call.1} parent=99 // pred_check_branch
          %991 = sbr.rel (%p989) target = $region128
        $region127: #{tpu_custom_call.1} parent=99 // pred_region
          %992 = dma.done %s985, 12288
        $region128: #{tpu_custom_call.1} parent=99 // pred_fallthru
          _
        %s993 = sand.u32 %s35, 1
        %s994 = scalar_lea.sflag [#allocation3], %s993
        %s995 = sand.u32 %s227, 1
        %s996 = smul.addr %s995, 6
        %s997 = scalar_lea.vmem [#allocation13], %s996
        // Predicated region
        $region129: #{tpu_custom_call.1} parent=99 // pred_check
          %p998 = pneg %p240
        $region130: #{tpu_custom_call.1} parent=99 // pred_check_branch
          %1000 = sbr.rel (%p998) target = $region132
        $region131: #{tpu_custom_call.1} parent=99 // pred_region
          %1001 = dma.done %s994, 96
        $region132: #{tpu_custom_call.1} parent=99 // pred_fallthru
          _
        %s1002 = sand.u32 %s35, 1
        %s1003 = scalar_lea.sflag [#allocation3], %s1002
        %s1004 = sand.u32 %s253, 1
        %s1005 = smul.addr %s1004, 256
        %s1006 = scalar_lea.vmem [#allocation14], %s1005
        // Predicated region
        $region133: #{tpu_custom_call.1} parent=99 // pred_check
          %p1007 = pneg %p266
        $region134: #{tpu_custom_call.1} parent=99 // pred_check_branch
          %1009 = sbr.rel (%p1007) target = $region136
        $region135: #{tpu_custom_call.1} parent=99 // pred_region
          %1010 = dma.done %s1003, 4096
        $region136: #{tpu_custom_call.1} parent=99 // pred_fallthru
          _
        %s1011 = sand.u32 %s35, 1
        %s1012 = scalar_lea.sflag [#allocation3], %s1011
        %s1013 = sand.u32 %s279, 1
        %s1014 = smul.addr %s1013, 2
        %s1015 = scalar_lea.vmem [#allocation15], %s1014
        // Predicated region
        $region137: #{tpu_custom_call.1} parent=99 // pred_check
          %p1016 = pneg %p292
        $region138: #{tpu_custom_call.1} parent=99 // pred_check_branch
          %1018 = sbr.rel (%p1016) target = $region140
        $region139: #{tpu_custom_call.1} parent=99 // pred_region
          %1019 = dma.done %s1012, 32
        $region140: #{tpu_custom_call.1} parent=99 // pred_fallthru
          _
        %s1020 = sand.u32 %s35, 1
        %s1021 = scalar_lea.sflag [#allocation3], %s1020
        %s1022 = sand.u32 %s305, 1
        %s1023 = smul.addr %s1022, 2
        %s1024 = scalar_lea.vmem [#allocation16], %s1023
        // Predicated region
        $region141: #{tpu_custom_call.1} parent=99 // pred_check
          %p1025 = pneg %p318
        $region142: #{tpu_custom_call.1} parent=99 // pred_check_branch
          %1027 = sbr.rel (%p1025) target = $region144
        $region143: #{tpu_custom_call.1} parent=99 // pred_region
          %1028 = dma.done %s1021, 32
        $region144: #{tpu_custom_call.1} parent=99 // pred_fallthru
          _
        %s1029 = sand.u32 %s35, 1
        %s1030 = scalar_lea.sflag [#allocation3], %s1029
        %s1031 = sand.u32 %s331, 1
        %s1032 = smul.addr %s1031, 2
        %s1033 = scalar_lea.vmem [#allocation17], %s1032
        // Predicated region
        $region145: #{tpu_custom_call.1} parent=99 // pred_check
          %p1034 = pneg %p344
        $region146: #{tpu_custom_call.1} parent=99 // pred_check_branch
          %1036 = sbr.rel (%p1034) target = $region148
        $region147: #{tpu_custom_call.1} parent=99 // pred_region
          %1037 = dma.done %s1030, 32
        $region148: #{tpu_custom_call.1} parent=99 // pred_fallthru
          _
        %s1038 = sand.u32 %s35, 1
        %s1039 = scalar_lea.sflag [#allocation3], %s1038
        %s1040 = sand.u32 %s357, 1
        %s1041 = smul.addr %s1040, 2
        %s1042 = scalar_lea.vmem [#allocation18], %s1041
        // Predicated region
        $region149: #{tpu_custom_call.1} parent=99 // pred_check
          %p1043 = pneg %p370
        $region150: #{tpu_custom_call.1} parent=99 // pred_check_branch
          %1045 = sbr.rel (%p1043) target = $region152
        $region151: #{tpu_custom_call.1} parent=99 // pred_region
          %1046 = dma.done %s1039, 32
        $region152: #{tpu_custom_call.1} parent=99 // pred_fallthru
          _
        %s1047 = sand.u32 %s35, 1
        %s1048 = scalar_lea.sflag [#allocation3], %s1047
        %s1049 = sand.u32 %s383, 1
        %s1050 = smul.addr %s1049, 1024
        %s1051 = scalar_lea.vmem [#allocation19], %s1050
        // Predicated region
        $region153: #{tpu_custom_call.1} parent=99 // pred_check
          %p1052 = pneg %p396
        $region154: #{tpu_custom_call.1} parent=99 // pred_check_branch
          %1054 = sbr.rel (%p1052) target = $region156
        $region155: #{tpu_custom_call.1} parent=99 // pred_region
          %1055 = dma.done %s1048, 16384
        $region156: #{tpu_custom_call.1} parent=99 // pred_fallthru
          _
        %s1056 = sand.u32 %s35, 1
        %s1057 = scalar_lea.sflag [#allocation3], %s1056
        %s1058 = sand.u32 %s409, 1
        %s1059 = smul.addr %s1058, 8
        %s1060 = scalar_lea.vmem [#allocation20], %s1059
        // Predicated region
        $region157: #{tpu_custom_call.1} parent=99 // pred_check
          %p1061 = pneg %p422
        $region158: #{tpu_custom_call.1} parent=99 // pred_check_branch
          %1063 = sbr.rel (%p1061) target = $region160
        $region159: #{tpu_custom_call.1} parent=99 // pred_region
          %1064 = dma.done %s1057, 128
        $region160: #{tpu_custom_call.1} parent=99 // pred_fallthru
          _
        %s1065 = sand.u32 %s35, 1
        %s1066 = scalar_lea.sflag [#allocation3], %s1065
        %s1067 = sand.u32 %s435, 1
        %s1068 = smul.addr %s1067, 1024
        %s1069 = scalar_lea.vmem [#allocation21], %s1068
        // Predicated region
        $region161: #{tpu_custom_call.1} parent=99 // pred_check
          %p1070 = pneg %p448
        $region162: #{tpu_custom_call.1} parent=99 // pred_check_branch
          %1072 = sbr.rel (%p1070) target = $region164
        $region163: #{tpu_custom_call.1} parent=99 // pred_region
          %1073 = dma.done %s1066, 16384
        $region164: #{tpu_custom_call.1} parent=99 // pred_fallthru
          _
        %s1074 = sand.u32 %s35, 1
        %s1075 = scalar_lea.sflag [#allocation3], %s1074
        %s1076 = sand.u32 %s461, 1
        %s1077 = smul.addr %s1076, 2
        %s1078 = scalar_lea.vmem [#allocation22], %s1077
        // Predicated region
        $region165: #{tpu_custom_call.1} parent=99 // pred_check
          %p1079 = pneg %p474
        $region166: #{tpu_custom_call.1} parent=99 // pred_check_branch
          %1081 = sbr.rel (%p1079) target = $region168
        $region167: #{tpu_custom_call.1} parent=99 // pred_region
          %1082 = dma.done %s1075, 32
        $region168: #{tpu_custom_call.1} parent=99 // pred_fallthru
          _
        %s1083 = sand.u32 %s35, 1
        %s1084 = scalar_lea.sflag [#allocation3], %s1083
        %s1085 = sand.u32 %s487, 1
        %s1086 = smul.addr %s1085, 2
        %s1087 = scalar_lea.vmem [#allocation23], %s1086
        // Predicated region
        $region169: #{tpu_custom_call.1} parent=99 // pred_check
          %p1088 = pneg %p500
        $region170: #{tpu_custom_call.1} parent=99 // pred_check_branch
          %1090 = sbr.rel (%p1088) target = $region172
        $region171: #{tpu_custom_call.1} parent=99 // pred_region
          %1091 = dma.done %s1084, 32
        $region172: #{tpu_custom_call.1} parent=99 // pred_fallthru
          _
        // Predicated region
        $region173: #{tpu_custom_call.1} parent=99 // pred_check
          %p1092 = pneg %p521
        $region174: #{tpu_custom_call.1} parent=99 // pred_check_branch
          %1094 = sbr.rel (%p1092) target = $region176
        $region175: #{tpu_custom_call.1} parent=99 // pred_region
          %1095 = dma.done [#allocation6], 32
        $region176: #{tpu_custom_call.1} parent=99 // pred_fallthru
          _
        // Predicated region
        $region177: #{tpu_custom_call.1} parent=99 // pred_check
          %p1096 = pneg %p542
        $region178: #{tpu_custom_call.1} parent=99 // pred_check_branch
          %1098 = sbr.rel (%p1096) target = $region180
        $region179: #{tpu_custom_call.1} parent=99 // pred_region
          %1099 = dma.done [#allocation9], 32
        $region180: #{tpu_custom_call.1} parent=99 // pred_fallthru
          _
        %p1100 = pneg %p68
        %p1101 = pneg %p65
        %p1102 = pneg %p89
        %p1103 = pneg %p86
        %p1104 = pneg %p115
        %p1105 = pneg %p112
        %p1106 = pneg %p136
        %p1107 = pneg %p133
        %s1108 = sand.u32 %s35, 1
        %s1109 = scalar_lea.sflag [#allocation3], %s1108
        %s1110 = sand.u32 %s149, 1
        %s1111 = smul.addr %s1110, 2
        %s1112 = scalar_lea.vmem [#allocation10], %s1111
        %p1113 = pneg %p162
        %p1114 = pneg %p159
        %s1115 = sand.u32 %s35, 1
        %s1116 = scalar_lea.sflag [#allocation3], %s1115
        %s1117 = sand.u32 %s175, 1
        %s1118 = smul.addr %s1117, 2
        %s1119 = scalar_lea.vmem [#allocation11], %s1118
        %p1120 = pneg %p188
        %p1121 = pneg %p185
        %s1122 = sand.u32 %s35, 1
        %s1123 = scalar_lea.sflag [#allocation3], %s1122
        %s1124 = sand.u32 %s201, 1
        %s1125 = smul.addr %s1124, 768
        %s1126 = scalar_lea.vmem [#allocation12], %s1125
        %p1127 = pneg %p214
        %p1128 = pneg %p211
        %s1129 = sand.u32 %s35, 1
        %s1130 = scalar_lea.sflag [#allocation3], %s1129
        %s1131 = sand.u32 %s227, 1
        %s1132 = smul.addr %s1131, 6
        %s1133 = scalar_lea.vmem [#allocation13], %s1132
        %p1134 = pneg %p240
        %p1135 = pneg %p237
        %s1136 = sand.u32 %s35, 1
        %s1137 = scalar_lea.sflag [#allocation3], %s1136
        %s1138 = sand.u32 %s253, 1
        %s1139 = smul.addr %s1138, 256
        %s1140 = scalar_lea.vmem [#allocation14], %s1139
        %p1141 = pneg %p266
        %p1142 = pneg %p263
        %s1143 = sand.u32 %s35, 1
        %s1144 = scalar_lea.sflag [#allocation3], %s1143
        %s1145 = sand.u32 %s279, 1
        %s1146 = smul.addr %s1145, 2
        %s1147 = scalar_lea.vmem [#allocation15], %s1146
        %p1148 = pneg %p292
        %p1149 = pneg %p289
        %s1150 = sand.u32 %s35, 1
        %s1151 = scalar_lea.sflag [#allocation3], %s1150
        %s1152 = sand.u32 %s305, 1
        %s1153 = smul.addr %s1152, 2
        %s1154 = scalar_lea.vmem [#allocation16], %s1153
        %p1155 = pneg %p318
        %p1156 = pneg %p315
        %s1157 = sand.u32 %s35, 1
        %s1158 = scalar_lea.sflag [#allocation3], %s1157
        %s1159 = sand.u32 %s331, 1
        %s1160 = smul.addr %s1159, 2
        %s1161 = scalar_lea.vmem [#allocation17], %s1160
        %p1162 = pneg %p344
        %p1163 = pneg %p341
        %s1164 = sand.u32 %s35, 1
        %s1165 = scalar_lea.sflag [#allocation3], %s1164
        %s1166 = sand.u32 %s357, 1
        %s1167 = smul.addr %s1166, 2
        %s1168 = scalar_lea.vmem [#allocation18], %s1167
        %p1169 = pneg %p370
        %p1170 = pneg %p367
        %s1171 = sand.u32 %s35, 1
        %s1172 = scalar_lea.sflag [#allocation3], %s1171
        %s1173 = sand.u32 %s383, 1
        %s1174 = smul.addr %s1173, 1024
        %s1175 = scalar_lea.vmem [#allocation19], %s1174
        %p1176 = pneg %p396
        %p1177 = pneg %p393
        %s1178 = sand.u32 %s35, 1
        %s1179 = scalar_lea.sflag [#allocation3], %s1178
        %s1180 = sand.u32 %s409, 1
        %s1181 = smul.addr %s1180, 8
        %s1182 = scalar_lea.vmem [#allocation20], %s1181
        %p1183 = pneg %p422
        %p1184 = pneg %p419
        %s1185 = sand.u32 %s35, 1
        %s1186 = scalar_lea.sflag [#allocation3], %s1185
        %s1187 = sand.u32 %s435, 1
        %s1188 = smul.addr %s1187, 1024
        %s1189 = scalar_lea.vmem [#allocation21], %s1188
        %p1190 = pneg %p448
        %p1191 = pneg %p445
        %s1192 = sand.u32 %s35, 1
        %s1193 = scalar_lea.sflag [#allocation3], %s1192
        %s1194 = sand.u32 %s461, 1
        %s1195 = smul.addr %s1194, 2
        %s1196 = scalar_lea.vmem [#allocation22], %s1195
        %p1197 = pneg %p474
        %p1198 = pneg %p471
        %s1199 = sand.u32 %s35, 1
        %s1200 = scalar_lea.sflag [#allocation3], %s1199
        %s1201 = sand.u32 %s487, 1
        %s1202 = smul.addr %s1201, 2
        %s1203 = scalar_lea.vmem [#allocation23], %s1202
        %p1204 = pneg %p500
        %p1205 = pneg %p497
        %p1206 = pneg %p521
        %p1207 = pneg %p518
        %p1208 = pneg %p542
        %p1209 = pneg %p539
        %p1210 = pneg %p568
        %p1211 = pneg %p565
        %s1212 = smul.u32 2, %s39
        %s1213 = smul.u32 2, %s39
        %s1214 = smul.u32 2, %s39
        %p1216 = scmp.eq.s32.totalorder %s40, 0
        // Predicated region
        $region181: #{tpu_custom_call.1} parent=99 // pred_check
          %p1217 = pneg %p1216
        $region182: #{tpu_custom_call.1} parent=99 // pred_check_branch
          %1219 = sbr.rel (%p1217) target = $region184
        $region183: #{tpu_custom_call.1} parent=99 // pred_region
          %v1220 = vld [vmem:[#allocation2] sm:$0xff]
          %v1221 = vld [vmem:[#allocation2 + $0x8] sm:$0xff]
          %v1222 = vld [vmem:[#allocation2 + $0x10] sm:$0xf]
          %v1223 = vld [vmem:[#allocation2 + $0x14] sm:$0xff]
          %v1224 = vld [vmem:[#allocation2 + $0x1c] sm:$0xff]
          %v1225 = vld [vmem:[#allocation2 + $0x24] sm:$0xf]
          %v1226 = vld [vmem:[#allocation5] sm:$0xff]
          %v1227 = vld [vmem:[#allocation5 + $0x8] sm:$0xff]
          %v1228 = vld [vmem:[#allocation5 + $0x10] sm:$0xff]
          %v1229 = vld [vmem:[#allocation5 + $0x18] sm:$0xff]
          %v1230 = vld [vmem:[#allocation5 + $0x20] sm:$0xff]
          %v1231 = vld [vmem:[#allocation5 + $0x28] sm:$0xff]
          %v1232 = vld [vmem:[#allocation5 + $0x30] sm:$0xff]
          %v1233 = vld [vmem:[#allocation5 + $0x38] sm:$0xff]
          %v1234 = vld [vmem:[#allocation5 + $0x40] sm:$0xff]
          %v1235 = vld [vmem:[#allocation5 + $0x48] sm:$0xff]
          %v1236 = vld [vmem:[#allocation5 + $0x50] sm:$0xff]
          %v1237 = vld [vmem:[#allocation5 + $0x58] sm:$0xff]
          %v1238 = vld [vmem:[#allocation5 + $0x60] sm:$0xff]
          %v1239 = vld [vmem:[#allocation5 + $0x68] sm:$0xff]
          %v1240 = vld [vmem:[#allocation5 + $0x70] sm:$0xff]
          %v1241 = vld [vmem:[#allocation5 + $0x78] sm:$0xff]
          %v1242 = vld [vmem:[#allocation5 + $0x80] sm:$0xff]
          %v1243 = vld [vmem:[#allocation5 + $0x88] sm:$0xff]
          %v1244 = vld [vmem:[#allocation5 + $0x90] sm:$0xff]
          %v1245 = vld [vmem:[#allocation5 + $0x98] sm:$0xff]
          %v1246 = vld [vmem:[#allocation5 + $0xa0] sm:$0xff]
          %v1247 = vld [vmem:[#allocation5 + $0xa8] sm:$0xff]
          %v1248 = vld [vmem:[#allocation5 + $0xb0] sm:$0xff]
          %v1249 = vld [vmem:[#allocation5 + $0xb8] sm:$0xff]
          %v1250 = vld [vmem:[#allocation5 + $0xc0] sm:$0xff]
          %v1251 = vld [vmem:[#allocation5 + $0xc8] sm:$0xff]
          %v1252 = vld [vmem:[#allocation5 + $0xd0] sm:$0xff]
          %v1253 = vld [vmem:[#allocation5 + $0xd8] sm:$0xff]
          %v1254 = vld [vmem:[#allocation5 + $0xe0] sm:$0xff]
          %v1255 = vld [vmem:[#allocation5 + $0xe8] sm:$0xff]
          %v1256 = vld [vmem:[#allocation5 + $0xf0] sm:$0xff]
          %v1257 = vld [vmem:[#allocation5 + $0xf8] sm:$0xff]
          %v1258 = vld [vmem:[#allocation5 + $0x100] sm:$0xff]
          %v1259 = vld [vmem:[#allocation5 + $0x108] sm:$0xff]
          %v1260 = vld [vmem:[#allocation5 + $0x110] sm:$0xff]
          %v1261 = vld [vmem:[#allocation5 + $0x118] sm:$0xff]
          %v1262 = vld [vmem:[#allocation5 + $0x120] sm:$0xff]
          %v1263 = vld [vmem:[#allocation5 + $0x128] sm:$0xff]
          %v1264 = vld [vmem:[#allocation5 + $0x130] sm:$0xff]
          %v1265 = vld [vmem:[#allocation5 + $0x138] sm:$0xff]
          %v1266 = vld [vmem:[#allocation5 + $0x140] sm:$0xff]
          %v1267 = vld [vmem:[#allocation5 + $0x148] sm:$0xff]
          %v1268 = vld [vmem:[#allocation5 + $0x150] sm:$0xff]
          %v1269 = vld [vmem:[#allocation5 + $0x158] sm:$0xff]
          %v1270 = vld [vmem:[#allocation5 + $0x160] sm:$0xff]
          %v1271 = vld [vmem:[#allocation5 + $0x168] sm:$0xff]
          %v1272 = vld [vmem:[#allocation5 + $0x170] sm:$0xff]
          %v1273 = vld [vmem:[#allocation5 + $0x178] sm:$0xff]
          %v1274 = vld [vmem:[#allocation5 + $0x180] sm:$0xff]
          %v1275 = vld [vmem:[#allocation5 + $0x188] sm:$0xff]
          %v1276 = vld [vmem:[#allocation5 + $0x190] sm:$0xff]
          %v1277 = vld [vmem:[#allocation5 + $0x198] sm:$0xff]
          %v1278 = vld [vmem:[#allocation5 + $0x1a0] sm:$0xff]
          %v1279 = vld [vmem:[#allocation5 + $0x1a8] sm:$0xff]
          %v1280 = vld [vmem:[#allocation5 + $0x1b0] sm:$0xff]
          %v1281 = vld [vmem:[#allocation5 + $0x1b8] sm:$0xff]
          %v1282 = vld [vmem:[#allocation5 + $0x1c0] sm:$0xff]
          %v1283 = vld [vmem:[#allocation5 + $0x1c8] sm:$0xff]
          %v1284 = vld [vmem:[#allocation5 + $0x1d0] sm:$0xff]
          %v1285 = vld [vmem:[#allocation5 + $0x1d8] sm:$0xff]
          %v1286 = vld [vmem:[#allocation5 + $0x1e0] sm:$0xff]
          %v1287 = vld [vmem:[#allocation5 + $0x1e8] sm:$0xff]
          %v1288 = vld [vmem:[#allocation5 + $0x1f0] sm:$0xff]
          %v1289 = vld [vmem:[#allocation5 + $0x1f8] sm:$0xff]
          %v1290 = vld [vmem:[#allocation5 + $0x200] sm:$0xff]
          %v1291 = vld [vmem:[#allocation5 + $0x208] sm:$0xff]
          %v1292 = vld [vmem:[#allocation5 + $0x210] sm:$0xff]
          %v1293 = vld [vmem:[#allocation5 + $0x218] sm:$0xff]
          %v1294 = vld [vmem:[#allocation5 + $0x220] sm:$0xff]
          %v1295 = vld [vmem:[#allocation5 + $0x228] sm:$0xff]
          %v1296 = vld [vmem:[#allocation5 + $0x230] sm:$0xff]
          %v1297 = vld [vmem:[#allocation5 + $0x238] sm:$0xff]
          %v1298 = vld [vmem:[#allocation5 + $0x240] sm:$0xff]
          %v1299 = vld [vmem:[#allocation5 + $0x248] sm:$0xff]
          %v1300 = vld [vmem:[#allocation5 + $0x250] sm:$0xff]
          %v1301 = vld [vmem:[#allocation5 + $0x258] sm:$0xff]
          %v1302 = vld [vmem:[#allocation5 + $0x260] sm:$0xff]
          %v1303 = vld [vmem:[#allocation5 + $0x268] sm:$0xff]
          %v1304 = vld [vmem:[#allocation5 + $0x270] sm:$0xff]
          %v1305 = vld [vmem:[#allocation5 + $0x278] sm:$0xff]
          %v1306 = vld [vmem:[#allocation7] sm:$0xff]
          %v1307 = vld [vmem:[#allocation7 + $0x8] sm:$0xff]
          %v1308 = vld [vmem:[#allocation7 + $0x10] sm:$0xff]
          %v1309 = vld [vmem:[#allocation7 + $0x18] sm:$0xff]
          %v1316 = vunpack.c.l.b16 %v1220
          %v1317 = vunpack.c.h.b16 %v1220
          %v1318 = vunpack.c.l.b16 %v1221
          %v1319 = vunpack.c.h.b16 %v1221
          %v1320 = vunpack.c.l.b16 %v1222
          %v1321 = vunpack.c.l.b16 %v1223
          %v1322 = vunpack.c.h.b16 %v1223
          %v1323 = vunpack.c.l.b16 %v1224
          %v1324 = vunpack.c.h.b16 %v1224
          %v1325 = vunpack.c.l.b16 %v1225
          %v1326 = vpack.c.b16 %v1321, %v1316
          %v1327 = vpack.c.b16 %v1322, %v1317
          %v1328 = vpack.c.b16 %v1323, %v1318
          %v1329 = vpack.c.b16 %v1324, %v1319
          %v1330 = vpack.c.b16 %v1325, %v1320
          %v1416 = vunpack.c.l.b16 %v1226
          %v1417 = vunpack.c.h.b16 %v1226
          %v1418 = vunpack.c.l.b16 %v1227
          %v1419 = vunpack.c.h.b16 %v1227
          %v1420 = vunpack.c.l.b16 %v1228
          %v1421 = vunpack.c.h.b16 %v1228
          %v1422 = vunpack.c.l.b16 %v1229
          %v1423 = vunpack.c.h.b16 %v1229
          %v1424 = vunpack.c.l.b16 %v1230
          %v1425 = vunpack.c.h.b16 %v1230
          %v1426 = vunpack.c.l.b16 %v1231
          %v1427 = vunpack.c.h.b16 %v1231
          %v1428 = vunpack.c.l.b16 %v1232
          %v1429 = vunpack.c.h.b16 %v1232
          %v1430 = vunpack.c.l.b16 %v1233
          %v1431 = vunpack.c.h.b16 %v1233
          %v1432 = vunpack.c.l.b16 %v1234
          %v1433 = vunpack.c.h.b16 %v1234
          %v1434 = vunpack.c.l.b16 %v1235
          %v1435 = vunpack.c.h.b16 %v1235
          %v1436 = vunpack.c.l.b16 %v1236
          %v1437 = vunpack.c.h.b16 %v1236
          %v1438 = vunpack.c.l.b16 %v1237
          %v1439 = vunpack.c.h.b16 %v1237
          %v1440 = vunpack.c.l.b16 %v1238
          %v1441 = vunpack.c.h.b16 %v1238
          %v1442 = vunpack.c.l.b16 %v1239
          %v1443 = vunpack.c.h.b16 %v1239
          %v1444 = vunpack.c.l.b16 %v1240
          %v1445 = vunpack.c.h.b16 %v1240
          %v1446 = vunpack.c.l.b16 %v1241
          %v1447 = vunpack.c.h.b16 %v1241
          %v1448 = vunpack.c.l.b16 %v1242
          %v1449 = vunpack.c.h.b16 %v1242
          %v1450 = vunpack.c.l.b16 %v1243
          %v1451 = vunpack.c.h.b16 %v1243
          %v1452 = vunpack.c.l.b16 %v1244
          %v1453 = vunpack.c.h.b16 %v1244
          %v1454 = vunpack.c.l.b16 %v1245
          %v1455 = vunpack.c.h.b16 %v1245
          %v1456 = vunpack.c.l.b16 %v1246
          %v1457 = vunpack.c.h.b16 %v1246
          %v1458 = vunpack.c.l.b16 %v1247
          %v1459 = vunpack.c.h.b16 %v1247
          %v1460 = vunpack.c.l.b16 %v1248
          %v1461 = vunpack.c.h.b16 %v1248
          %v1462 = vunpack.c.l.b16 %v1249
          %v1463 = vunpack.c.h.b16 %v1249
          %v1464 = vunpack.c.l.b16 %v1250
          %v1465 = vunpack.c.h.b16 %v1250
          %v1466 = vunpack.c.l.b16 %v1251
          %v1467 = vunpack.c.h.b16 %v1251
          %v1468 = vunpack.c.l.b16 %v1252
          %v1469 = vunpack.c.h.b16 %v1252
          %v1470 = vunpack.c.l.b16 %v1253
          %v1471 = vunpack.c.h.b16 %v1253
          %v1472 = vunpack.c.l.b16 %v1254
          %v1473 = vunpack.c.h.b16 %v1254
          %v1474 = vunpack.c.l.b16 %v1255
          %v1475 = vunpack.c.h.b16 %v1255
          %v1476 = vunpack.c.l.b16 %v1256
          %v1477 = vunpack.c.h.b16 %v1256
          %v1478 = vunpack.c.l.b16 %v1257
          %v1479 = vunpack.c.h.b16 %v1257
          %v1480 = vunpack.c.l.b16 %v1258
          %v1481 = vunpack.c.h.b16 %v1258
          %v1482 = vunpack.c.l.b16 %v1259
          %v1483 = vunpack.c.h.b16 %v1259
          %v1484 = vunpack.c.l.b16 %v1260
          %v1485 = vunpack.c.h.b16 %v1260
          %v1486 = vunpack.c.l.b16 %v1261
          %v1487 = vunpack.c.h.b16 %v1261
          %v1488 = vunpack.c.l.b16 %v1262
          %v1489 = vunpack.c.h.b16 %v1262
          %v1490 = vunpack.c.l.b16 %v1263
          %v1491 = vunpack.c.h.b16 %v1263
          %v1492 = vunpack.c.l.b16 %v1264
          %v1493 = vunpack.c.h.b16 %v1264
          %v1494 = vunpack.c.l.b16 %v1265
          %v1495 = vunpack.c.h.b16 %v1265
          %v1496 = vunpack.c.l.b16 %v1266
          %v1497 = vunpack.c.h.b16 %v1266
          %v1498 = vunpack.c.l.b16 %v1267
          %v1499 = vunpack.c.h.b16 %v1267
          %v1500 = vunpack.c.l.b16 %v1268
          %v1501 = vunpack.c.h.b16 %v1268
          %v1502 = vunpack.c.l.b16 %v1269
          %v1503 = vunpack.c.h.b16 %v1269
          %v1504 = vunpack.c.l.b16 %v1270
          %v1505 = vunpack.c.h.b16 %v1270
          %v1506 = vunpack.c.l.b16 %v1271
          %v1507 = vunpack.c.h.b16 %v1271
          %v1508 = vunpack.c.l.b16 %v1272
          %v1509 = vunpack.c.h.b16 %v1272
          %v1510 = vunpack.c.l.b16 %v1273
          %v1511 = vunpack.c.h.b16 %v1273
          %v1512 = vunpack.c.l.b16 %v1274
          %v1513 = vunpack.c.h.b16 %v1274
          %v1514 = vunpack.c.l.b16 %v1275
          %v1515 = vunpack.c.h.b16 %v1275
          %v1516 = vunpack.c.l.b16 %v1276
          %v1517 = vunpack.c.h.b16 %v1276
          %v1518 = vunpack.c.l.b16 %v1277
          %v1519 = vunpack.c.h.b16 %v1277
          %v1520 = vunpack.c.l.b16 %v1278
          %v1521 = vunpack.c.h.b16 %v1278
          %v1522 = vunpack.c.l.b16 %v1279
          %v1523 = vunpack.c.h.b16 %v1279
          %v1524 = vunpack.c.l.b16 %v1280
          %v1525 = vunpack.c.h.b16 %v1280
          %v1526 = vunpack.c.l.b16 %v1281
          %v1527 = vunpack.c.h.b16 %v1281
          %v1528 = vunpack.c.l.b16 %v1282
          %v1529 = vunpack.c.h.b16 %v1282
          %v1530 = vunpack.c.l.b16 %v1283
          %v1531 = vunpack.c.h.b16 %v1283
          %v1532 = vunpack.c.l.b16 %v1284
          %v1533 = vunpack.c.h.b16 %v1284
          %v1534 = vunpack.c.l.b16 %v1285
          %v1535 = vunpack.c.h.b16 %v1285
          %v1536 = vunpack.c.l.b16 %v1286
          %v1537 = vunpack.c.h.b16 %v1286
          %v1538 = vunpack.c.l.b16 %v1287
          %v1539 = vunpack.c.h.b16 %v1287
          %v1540 = vunpack.c.l.b16 %v1288
          %v1541 = vunpack.c.h.b16 %v1288
          %v1542 = vunpack.c.l.b16 %v1289
          %v1543 = vunpack.c.h.b16 %v1289
          %v1544 = vunpack.c.l.b16 %v1290
          %v1545 = vunpack.c.h.b16 %v1290
          %v1546 = vunpack.c.l.b16 %v1291
          %v1547 = vunpack.c.h.b16 %v1291
          %v1548 = vunpack.c.l.b16 %v1292
          %v1549 = vunpack.c.h.b16 %v1292
          %v1550 = vunpack.c.l.b16 %v1293
          %v1551 = vunpack.c.h.b16 %v1293
          %v1552 = vunpack.c.l.b16 %v1294
          %v1553 = vunpack.c.h.b16 %v1294
          %v1554 = vunpack.c.l.b16 %v1295
          %v1555 = vunpack.c.h.b16 %v1295
          %v1556 = vunpack.c.l.b16 %v1296
          %v1557 = vunpack.c.h.b16 %v1296
          %v1558 = vunpack.c.l.b16 %v1297
          %v1559 = vunpack.c.h.b16 %v1297
          %v1560 = vunpack.c.l.b16 %v1298
          %v1561 = vunpack.c.h.b16 %v1298
          %v1562 = vunpack.c.l.b16 %v1299
          %v1563 = vunpack.c.h.b16 %v1299
          %v1564 = vunpack.c.l.b16 %v1300
          %v1565 = vunpack.c.h.b16 %v1300
          %v1566 = vunpack.c.l.b16 %v1301
          %v1567 = vunpack.c.h.b16 %v1301
          %v1568 = vunpack.c.l.b16 %v1302
          %v1569 = vunpack.c.h.b16 %v1302
          %v1570 = vunpack.c.l.b16 %v1303
          %v1571 = vunpack.c.h.b16 %v1303
          %v1572 = vunpack.c.l.b16 %v1304
          %v1573 = vunpack.c.h.b16 %v1304
          %v1574 = vunpack.c.l.b16 %v1305
          %v1575 = vunpack.c.h.b16 %v1305
          %v1576 = vpack.c.b16 %v1418, %v1416
          %v1577 = vpack.c.b16 %v1419, %v1417
          %v1578 = vpack.c.b16 %v1422, %v1420
          %v1579 = vpack.c.b16 %v1423, %v1421
          %v1580 = vpack.c.b16 %v1426, %v1424
          %v1581 = vpack.c.b16 %v1427, %v1425
          %v1582 = vpack.c.b16 %v1430, %v1428
          %v1583 = vpack.c.b16 %v1431, %v1429
          %v1584 = vpack.c.b16 %v1434, %v1432
          %v1585 = vpack.c.b16 %v1435, %v1433
          %v1586 = vpack.c.b16 %v1438, %v1436
          %v1587 = vpack.c.b16 %v1439, %v1437
          %v1588 = vpack.c.b16 %v1442, %v1440
          %v1589 = vpack.c.b16 %v1443, %v1441
          %v1590 = vpack.c.b16 %v1446, %v1444
          %v1591 = vpack.c.b16 %v1447, %v1445
          %v1592 = vpack.c.b16 %v1450, %v1448
          %v1593 = vpack.c.b16 %v1451, %v1449
          %v1594 = vpack.c.b16 %v1454, %v1452
          %v1595 = vpack.c.b16 %v1455, %v1453
          %v1596 = vpack.c.b16 %v1458, %v1456
          %v1597 = vpack.c.b16 %v1459, %v1457
          %v1598 = vpack.c.b16 %v1462, %v1460
          %v1599 = vpack.c.b16 %v1463, %v1461
          %v1600 = vpack.c.b16 %v1466, %v1464
          %v1601 = vpack.c.b16 %v1467, %v1465
          %v1602 = vpack.c.b16 %v1470, %v1468
          %v1603 = vpack.c.b16 %v1471, %v1469
          %v1604 = vpack.c.b16 %v1474, %v1472
          %v1605 = vpack.c.b16 %v1475, %v1473
          %v1606 = vpack.c.b16 %v1478, %v1476
          %v1607 = vpack.c.b16 %v1479, %v1477
          %v1608 = vpack.c.b16 %v1482, %v1480
          %v1609 = vpack.c.b16 %v1483, %v1481
          %v1610 = vpack.c.b16 %v1486, %v1484
          %v1611 = vpack.c.b16 %v1487, %v1485
          %v1612 = vpack.c.b16 %v1490, %v1488
          %v1613 = vpack.c.b16 %v1491, %v1489
          %v1614 = vpack.c.b16 %v1494, %v1492
          %v1615 = vpack.c.b16 %v1495, %v1493
          %v1616 = vpack.c.b16 %v1498, %v1496
          %v1617 = vpack.c.b16 %v1499, %v1497
          %v1618 = vpack.c.b16 %v1502, %v1500
          %v1619 = vpack.c.b16 %v1503, %v1501
          %v1620 = vpack.c.b16 %v1506, %v1504
          %v1621 = vpack.c.b16 %v1507, %v1505
          %v1622 = vpack.c.b16 %v1510, %v1508
          %v1623 = vpack.c.b16 %v1511, %v1509
          %v1624 = vpack.c.b16 %v1514, %v1512
          %v1625 = vpack.c.b16 %v1515, %v1513
          %v1626 = vpack.c.b16 %v1518, %v1516
          %v1627 = vpack.c.b16 %v1519, %v1517
          %v1628 = vpack.c.b16 %v1522, %v1520
          %v1629 = vpack.c.b16 %v1523, %v1521
          %v1630 = vpack.c.b16 %v1526, %v1524
          %v1631 = vpack.c.b16 %v1527, %v1525
          %v1632 = vpack.c.b16 %v1530, %v1528
          %v1633 = vpack.c.b16 %v1531, %v1529
          %v1634 = vpack.c.b16 %v1534, %v1532
          %v1635 = vpack.c.b16 %v1535, %v1533
          %v1636 = vpack.c.b16 %v1538, %v1536
          %v1637 = vpack.c.b16 %v1539, %v1537
          %v1638 = vpack.c.b16 %v1542, %v1540
          %v1639 = vpack.c.b16 %v1543, %v1541
          %v1640 = vpack.c.b16 %v1546, %v1544
          %v1641 = vpack.c.b16 %v1547, %v1545
          %v1642 = vpack.c.b16 %v1550, %v1548
          %v1643 = vpack.c.b16 %v1551, %v1549
          %v1644 = vpack.c.b16 %v1554, %v1552
          %v1645 = vpack.c.b16 %v1555, %v1553
          %v1646 = vpack.c.b16 %v1558, %v1556
          %v1647 = vpack.c.b16 %v1559, %v1557
          %v1648 = vpack.c.b16 %v1562, %v1560
          %v1649 = vpack.c.b16 %v1563, %v1561
          %v1650 = vpack.c.b16 %v1566, %v1564
          %v1651 = vpack.c.b16 %v1567, %v1565
          %v1652 = vpack.c.b16 %v1570, %v1568
          %v1653 = vpack.c.b16 %v1571, %v1569
          %v1654 = vpack.c.b16 %v1574, %v1572
          %v1655 = vpack.c.b16 %v1575, %v1573
          %1736 = vmatprep.subr.bf16.mxu0 %v1577
          %1737 = vmatpush1.bf16.msra.mxu0 %v1576
          %1738 = vmatprep.subr.bf16.mxu0 %v1579
          %1739 = vmatpush1.bf16.msra.mxu0 %v1578
          %1740 = vmatprep.subr.bf16.mxu0 %v1581
          %1741 = vmatpush1.bf16.msra.mxu0 %v1580
          %1742 = vmatprep.subr.bf16.mxu0 %v1583
          %1743 = vmatpush1.bf16.msra.mxu0 %v1582
          %1744 = vmatprep.subr.bf16.mxu0 %v1585
          %1745 = vmatpush1.bf16.msra.mxu0 %v1584
          %1746 = vmatprep.subr.bf16.mxu0 %v1587
          %1747 = vmatpush1.bf16.msra.mxu0 %v1586
          %1748 = vmatprep.subr.bf16.mxu0 %v1589
          %1749 = vmatpush1.bf16.msra.mxu0 %v1588
          %1750 = vmatprep.subr.bf16.mxu0 %v1591
          %1751 = vmatpush1.bf16.msra.mxu0 %v1590
          %1752 = vmatprep.subr.bf16.mxu0 %v1593
          %1753 = vmatpush1.bf16.msra.mxu0 %v1592
          %1754 = vmatprep.subr.bf16.mxu0 %v1595
          %1755 = vmatpush1.bf16.msra.mxu0 %v1594
          %1756 = vmatprep.subr.bf16.mxu0 %v1597
          %1757 = vmatpush1.bf16.msra.mxu0 %v1596
          %1758 = vmatprep.subr.bf16.mxu0 %v1599
          %1759 = vmatpush1.bf16.msra.mxu0 %v1598
          %1760 = vmatprep.subr.bf16.mxu0 %v1601
          %1761 = vmatpush1.bf16.msra.mxu0 %v1600
          %1762 = vmatprep.subr.bf16.mxu0 %v1603
          %1763 = vmatpush1.bf16.msra.mxu0 %v1602
          %1764 = vmatprep.subr.bf16.mxu0 %v1605
          %1765 = vmatpush1.bf16.msra.mxu0 %v1604
          %1766 = vmatprep.subr.bf16.mxu0 %v1607
          %1767 = vmatpush1.bf16.msra.mxu0 %v1606
          %1768 = vmatprep.mubr.bf16.mxu0 %v1327
          %1769 = vmatmul.mubr.bf16.gmra.mrb[0].mxu0 %v1326
          %v1770 = vpop.f32.mrb[0].mxu0
          %v1771 = vadd.f32 %v1306, %v1770
          %v1772 = vpop.f32.mrb[0].mxu0
          %v1773 = vadd.f32 %v1307, %v1772
          %v1774 = vpop.f32.mrb[0].mxu0
          %v1775 = vadd.f32 %v1308, %v1774
          %v1776 = vpop.f32.mrb[0].mxu0
          %v1777 = vadd.f32 %v1309, %v1776
          %1778 = vdwg.mxu0
          %1779 = vmatprep.subr.bf16.mxu0 %v1609
          %1780 = vmatpush1.bf16.msra.mxu0 %v1608
          %1781 = vmatprep.subr.bf16.mxu0 %v1611
          %1782 = vmatpush1.bf16.msra.mxu0 %v1610
          %1783 = vmatprep.subr.bf16.mxu0 %v1613
          %1784 = vmatpush1.bf16.msra.mxu0 %v1612
          %1785 = vmatprep.subr.bf16.mxu0 %v1615
          %1786 = vmatpush1.bf16.msra.mxu0 %v1614
          %1787 = vmatprep.subr.bf16.mxu0 %v1617
          %1788 = vmatpush1.bf16.msra.mxu0 %v1616
          %1789 = vmatprep.subr.bf16.mxu0 %v1619
          %1790 = vmatpush1.bf16.msra.mxu0 %v1618
          %1791 = vmatprep.subr.bf16.mxu0 %v1621
          %1792 = vmatpush1.bf16.msra.mxu0 %v1620
          %1793 = vmatprep.subr.bf16.mxu0 %v1623
          %1794 = vmatpush1.bf16.msra.mxu0 %v1622
          %1795 = vmatprep.subr.bf16.mxu0 %v1625
          %1796 = vmatpush1.bf16.msra.mxu0 %v1624
          %1797 = vmatprep.subr.bf16.mxu0 %v1627
          %1798 = vmatpush1.bf16.msra.mxu0 %v1626
          %1799 = vmatprep.subr.bf16.mxu0 %v1629
          %1800 = vmatpush1.bf16.msra.mxu0 %v1628
          %1801 = vmatprep.subr.bf16.mxu0 %v1631
          %1802 = vmatpush1.bf16.msra.mxu0 %v1630
          %1803 = vmatprep.subr.bf16.mxu0 %v1633
          %1804 = vmatpush1.bf16.msra.mxu0 %v1632
          %1805 = vmatprep.subr.bf16.mxu0 %v1635
          %1806 = vmatpush1.bf16.msra.mxu0 %v1634
          %1807 = vmatprep.subr.bf16.mxu0 %v1637
          %1808 = vmatpush1.bf16.msra.mxu0 %v1636
          %1809 = vmatprep.subr.bf16.mxu0 %v1639
          %1810 = vmatpush1.bf16.msra.mxu0 %v1638
          %1811 = vmatprep.mubr.bf16.mxu0 %v1329
          %1812 = vmatmul.mubr.bf16.gmra.mrb[0].mxu0 %v1328
          %v1813 = vpop.f32.mrb[0].mxu0
          %v1814 = vadd.f32 %v1771, %v1813
          %v1815 = vpop.f32.mrb[0].mxu0
          %v1816 = vadd.f32 %v1773, %v1815
          %v1817 = vpop.f32.mrb[0].mxu0
          %v1818 = vadd.f32 %v1775, %v1817
          %v1819 = vpop.f32.mrb[0].mxu0
          %v1820 = vadd.f32 %v1777, %v1819
          %1821 = vdwg.mxu0
          %1822 = vmatprep.subr.bf16.mxu0 %v1641
          %1823 = vmatpush1.bf16.msra.mxu0 %v1640
          %1824 = vmatprep.subr.bf16.mxu0 %v1643
          %1825 = vmatpush1.bf16.msra.mxu0 %v1642
          %1826 = vmatprep.subr.bf16.mxu0 %v1645
          %1827 = vmatpush1.bf16.msra.mxu0 %v1644
          %1828 = vmatprep.subr.bf16.mxu0 %v1647
          %1829 = vmatpush1.bf16.msra.mxu0 %v1646
          %1830 = vmatprep.subr.bf16.mxu0 %v1649
          %1831 = vmatpush1.bf16.msra.mxu0 %v1648
          %1832 = vmatprep.subr.bf16.mxu0 %v1651
          %1833 = vmatpush1.bf16.msra.mxu0 %v1650
          %1834 = vmatprep.subr.bf16.mxu0 %v1653
          %1835 = vmatpush1.bf16.msra.mxu0 %v1652
          %1836 = vmatprep.subr.bf16.mxu0 %v1655
          %1837 = vmatpush1.bf16.msra.mxu0 %v1654
          %1838 = vmatprep.subr.bf16.mxu0 0
          %1839 = vmatpush1.bf16.msra.mxu0 0
          %1840 = vmatprep.subr.bf16.mxu0 0
          %1841 = vmatpush1.bf16.msra.mxu0 0
          %1842 = vmatprep.subr.bf16.mxu0 0
          %1843 = vmatpush1.bf16.msra.mxu0 0
          %1844 = vmatprep.subr.bf16.mxu0 0
          %1845 = vmatpush1.bf16.msra.mxu0 0
          %1846 = vmatprep.subr.bf16.mxu0 0
          %1847 = vmatpush1.bf16.msra.mxu0 0
          %1848 = vmatprep.subr.bf16.mxu0 0
          %1849 = vmatpush1.bf16.msra.mxu0 0
          %1850 = vmatprep.subr.bf16.mxu0 0
          %1851 = vmatpush1.bf16.msra.mxu0 0
          %1852 = vmatprep.subr.bf16.mxu0 0
          %1853 = vmatpush1.bf16.msra.mxu0 0
          %1854 = vmatprep.mubr.bf16.mxu0 0
          %1855 = vmatmul.mubr.bf16.gmra.mrb[0].mxu0 %v1330
          %v1856 = vpop.f32.mrb[0].mxu0
          %v1857 = vadd.f32 %v1814, %v1856
          %v1858 = vpop.f32.mrb[0].mxu0
          %v1859 = vadd.f32 %v1816, %v1858
          %v1860 = vpop.f32.mrb[0].mxu0
          %v1861 = vadd.f32 %v1818, %v1860
          %v1862 = vpop.f32.mrb[0].mxu0
          %v1863 = vadd.f32 %v1820, %v1862
          %1864 = vdwg.mxu0
          %1865 = vst [vmem:[#allocation26] sm:$0xff] %v1857
          %1866 = vst [vmem:[#allocation26 + $0x8] sm:$0xff] %v1859
          %1867 = vst [vmem:[#allocation26 + $0x10] sm:$0xff] %v1861
          %1868 = vst [vmem:[#allocation26 + $0x18] sm:$0xff] %v1863
        $region184: #{tpu_custom_call.1} parent=99 // pred_fallthru
          _
        %v1869 = vld [vmem:[#allocation26] sm:$0xff]
        %v1870 = vld [vmem:[#allocation26 + $0x8] sm:$0xff]
        %v1871 = vld [vmem:[#allocation26 + $0x10] sm:$0xff]
        %v1872 = vld [vmem:[#allocation26 + $0x18] sm:$0xff]
        %v1873 = vld [vmem:[%s970] sm:$0x3]
        %v1874 = vld [vmem:[%s979] sm:$0x3]
        %v1875 = vadd.f32 %v1869, %v1870
        %1876 = vadd.xlane.f32.xlu0 %v1875
        %v1877 = vpop.xlane.xlu0 %1876
        %v1878 = vadd.f32 %v1871, %v1872
        %1879 = vadd.xlane.f32.xlu0 %v1878
        %v1880 = vpop.xlane.xlu0 %1879
        %v1881 = vrcp.pop 256.0
        %v1882 = vmul.f32 %v1877, %v1881
        %v1883 = vmul.f32 %v1880, %v1881
        %v1884 = vsub.f32 %v1869, %v1882
        %v1885 = vsub.f32 %v1870, %v1882
        %v1886 = vsub.f32 %v1871, %v1883
        %v1887 = vsub.f32 %v1872, %v1883
        %v1888 = vmul.f32 %v1884, %v1884
        %v1889 = vmul.f32 %v1885, %v1885
        %v1890 = vmul.f32 %v1886, %v1886
        %v1891 = vmul.f32 %v1887, %v1887
        %v1892 = vadd.f32 %v1888, %v1889
        %1893 = vadd.xlane.f32.xlu0 %v1892
        %v1894 = vpop.xlane.xlu0 %1893
        %v1895 = vadd.f32 %v1890, %v1891
        %1896 = vadd.xlane.f32.xlu0 %v1895
        %v1897 = vpop.xlane.xlu0 %1896
        %v1898 = vmul.f32 %v1894, %v1881
        %v1899 = vmul.f32 %v1897, %v1881
        %v1900 = vadd.f32 %v1898, 1e-06
        %v1901 = vadd.f32 %v1899, 1e-06
        %v1902 = vrsqrt.pop %v1900
        %v1903 = vrsqrt.pop %v1901
        %v1904 = vmul.f32 %v1884, %v1902
        %v1905 = vmul.f32 %v1885, %v1902
        %v1906 = vmul.f32 %v1886, %v1903
        %v1907 = vmul.f32 %v1887, %v1903
        %v1909 = vlaneseq
        %v1910 = vshrl.u32 %v1909, 7
        %v1911 = vsub.s32 0, %v1910
        %v1912 = vrot.slane %v1873, %v1911
        %v1913 = vlaneseq
        %v1914 = vshrl.u32 %v1913, 7
        %v1915 = vsub.s32 1, %v1914
        %v1916 = vrot.slane %v1873, %v1915
        %v1919 = vmul.f32 %v1904, %v1912
        %v1920 = vmul.f32 %v1905, %v1916
        %v1921 = vmul.f32 %v1906, %v1912
        %v1922 = vmul.f32 %v1907, %v1916
        %v1924 = vlaneseq
        %v1925 = vshrl.u32 %v1924, 7
        %v1926 = vsub.s32 0, %v1925
        %v1927 = vrot.slane %v1874, %v1926
        %v1928 = vlaneseq
        %v1929 = vshrl.u32 %v1928, 7
        %v1930 = vsub.s32 1, %v1929
        %v1931 = vrot.slane %v1874, %v1930
        %v1934 = vadd.f32 %v1919, %v1927
        %v1935 = vadd.f32 %v1920, %v1931
        %v1936 = vadd.f32 %v1921, %v1927
        %v1937 = vadd.f32 %v1922, %v1931
        %v1938 = vpack.c.bf16 %v1936, %v1934
        %v1939 = vpack.c.bf16 %v1937, %v1935
        %v1940 = vld [vmem:[%s988] sm:$0xff]
        %v1941 = vld [vmem:[%s988 + $0x8] sm:$0xff]
        %v1942 = vld [vmem:[%s988 + $0x10] sm:$0xff]
        %v1943 = vld [vmem:[%s988 + $0x18] sm:$0xff]
        %v1944 = vld [vmem:[%s988 + $0x20] sm:$0xff]
        %v1945 = vld [vmem:[%s988 + $0x28] sm:$0xff]
        %v1946 = vld [vmem:[%s988 + $0x30] sm:$0xff]
        %v1947 = vld [vmem:[%s988 + $0x38] sm:$0xff]
        %v1948 = vld [vmem:[%s988 + $0x40] sm:$0xff]
        %v1949 = vld [vmem:[%s988 + $0x48] sm:$0xff]
        %v1950 = vld [vmem:[%s988 + $0x50] sm:$0xff]
        %v1951 = vld [vmem:[%s988 + $0x58] sm:$0xff]
        %v1952 = vld [vmem:[%s988 + $0x60] sm:$0xff]
        %v1953 = vld [vmem:[%s988 + $0x68] sm:$0xff]
        %v1954 = vld [vmem:[%s988 + $0x70] sm:$0xff]
        %v1955 = vld [vmem:[%s988 + $0x78] sm:$0xff]
        %v1956 = vld [vmem:[%s988 + $0x80] sm:$0xff]
        %v1957 = vld [vmem:[%s988 + $0x88] sm:$0xff]
        %v1958 = vld [vmem:[%s988 + $0x90] sm:$0xff]
        %v1959 = vld [vmem:[%s988 + $0x98] sm:$0xff]
        %v1960 = vld [vmem:[%s988 + $0xa0] sm:$0xff]
        %v1961 = vld [vmem:[%s988 + $0xa8] sm:$0xff]
        %v1962 = vld [vmem:[%s988 + $0xb0] sm:$0xff]
        %v1963 = vld [vmem:[%s988 + $0xb8] sm:$0xff]
        %v1964 = vld [vmem:[%s988 + $0xc0] sm:$0xff]
        %v1965 = vld [vmem:[%s988 + $0xc8] sm:$0xff]
        %v1966 = vld [vmem:[%s988 + $0xd0] sm:$0xff]
        %v1967 = vld [vmem:[%s988 + $0xd8] sm:$0xff]
        %v1968 = vld [vmem:[%s988 + $0xe0] sm:$0xff]
        %v1969 = vld [vmem:[%s988 + $0xe8] sm:$0xff]
        %v1970 = vld [vmem:[%s988 + $0xf0] sm:$0xff]
        %v1971 = vld [vmem:[%s988 + $0xf8] sm:$0xff]
        %v1972 = vld [vmem:[%s988 + $0x100] sm:$0xff]
        %v1973 = vld [vmem:[%s988 + $0x108] sm:$0xff]
        %v1974 = vld [vmem:[%s988 + $0x110] sm:$0xff]
        %v1975 = vld [vmem:[%s988 + $0x118] sm:$0xff]
        %v1976 = vld [vmem:[%s988 + $0x120] sm:$0xff]
        %v1977 = vld [vmem:[%s988 + $0x128] sm:$0xff]
        %v1978 = vld [vmem:[%s988 + $0x130] sm:$0xff]
        %v1979 = vld [vmem:[%s988 + $0x138] sm:$0xff]
        %v1980 = vld [vmem:[%s988 + $0x140] sm:$0xff]
        %v1981 = vld [vmem:[%s988 + $0x148] sm:$0xff]
        %v1982 = vld [vmem:[%s988 + $0x150] sm:$0xff]
        %v1983 = vld [vmem:[%s988 + $0x158] sm:$0xff]
        %v1984 = vld [vmem:[%s988 + $0x160] sm:$0xff]
        %v1985 = vld [vmem:[%s988 + $0x168] sm:$0xff]
        %v1986 = vld [vmem:[%s988 + $0x170] sm:$0xff]
        %v1987 = vld [vmem:[%s988 + $0x178] sm:$0xff]
        %v1988 = vld [vmem:[%s988 + $0x180] sm:$0xff]
        %v1989 = vld [vmem:[%s988 + $0x188] sm:$0xff]
        %v1990 = vld [vmem:[%s988 + $0x190] sm:$0xff]
        %v1991 = vld [vmem:[%s988 + $0x198] sm:$0xff]
        %v1992 = vld [vmem:[%s988 + $0x1a0] sm:$0xff]
        %v1993 = vld [vmem:[%s988 + $0x1a8] sm:$0xff]
        %v1994 = vld [vmem:[%s988 + $0x1b0] sm:$0xff]
        %v1995 = vld [vmem:[%s988 + $0x1b8] sm:$0xff]
        %v1996 = vld [vmem:[%s988 + $0x1c0] sm:$0xff]
        %v1997 = vld [vmem:[%s988 + $0x1c8] sm:$0xff]
        %v1998 = vld [vmem:[%s988 + $0x1d0] sm:$0xff]
        %v1999 = vld [vmem:[%s988 + $0x1d8] sm:$0xff]
        %v2000 = vld [vmem:[%s988 + $0x1e0] sm:$0xff]
        %v2001 = vld [vmem:[%s988 + $0x1e8] sm:$0xff]
        %v2002 = vld [vmem:[%s988 + $0x1f0] sm:$0xff]
        %v2003 = vld [vmem:[%s988 + $0x1f8] sm:$0xff]
        %v2004 = vld [vmem:[%s988 + $0x200] sm:$0xff]
        %v2005 = vld [vmem:[%s988 + $0x208] sm:$0xff]
        %v2006 = vld [vmem:[%s988 + $0x210] sm:$0xff]
        %v2007 = vld [vmem:[%s988 + $0x218] sm:$0xff]
        %v2008 = vld [vmem:[%s988 + $0x220] sm:$0xff]
        %v2009 = vld [vmem:[%s988 + $0x228] sm:$0xff]
        %v2010 = vld [vmem:[%s988 + $0x230] sm:$0xff]
        %v2011 = vld [vmem:[%s988 + $0x238] sm:$0xff]
        %v2012 = vld [vmem:[%s988 + $0x240] sm:$0xff]
        %v2013 = vld [vmem:[%s988 + $0x248] sm:$0xff]
        %v2014 = vld [vmem:[%s988 + $0x250] sm:$0xff]
        %v2015 = vld [vmem:[%s988 + $0x258] sm:$0xff]
        %v2016 = vld [vmem:[%s988 + $0x260] sm:$0xff]
        %v2017 = vld [vmem:[%s988 + $0x268] sm:$0xff]
        %v2018 = vld [vmem:[%s988 + $0x270] sm:$0xff]
        %v2019 = vld [vmem:[%s988 + $0x278] sm:$0xff]
        %v2020 = vld [vmem:[%s988 + $0x280] sm:$0xff]
        %v2021 = vld [vmem:[%s988 + $0x288] sm:$0xff]
        %v2022 = vld [vmem:[%s988 + $0x290] sm:$0xff]
        %v2023 = vld [vmem:[%s988 + $0x298] sm:$0xff]
        %v2024 = vld [vmem:[%s988 + $0x2a0] sm:$0xff]
        %v2025 = vld [vmem:[%s988 + $0x2a8] sm:$0xff]
        %v2026 = vld [vmem:[%s988 + $0x2b0] sm:$0xff]
        %v2027 = vld [vmem:[%s988 + $0x2b8] sm:$0xff]
        %v2028 = vld [vmem:[%s988 + $0x2c0] sm:$0xff]
        %v2029 = vld [vmem:[%s988 + $0x2c8] sm:$0xff]
        %v2030 = vld [vmem:[%s988 + $0x2d0] sm:$0xff]
        %v2031 = vld [vmem:[%s988 + $0x2d8] sm:$0xff]
        %v2032 = vld [vmem:[%s988 + $0x2e0] sm:$0xff]
        %v2033 = vld [vmem:[%s988 + $0x2e8] sm:$0xff]
        %v2034 = vld [vmem:[%s988 + $0x2f0] sm:$0xff]
        %v2035 = vld [vmem:[%s988 + $0x2f8] sm:$0xff]
        %v2036 = vld [vmem:[%s997] sm:$0x3f]
        %v2038 = vlaneseq
        %v2039 = vshrl.u32 %v2038, 7
        %v2040 = vsub.s32 0, %v2039
        %v2041 = vrot.slane %v2036, %v2040
        %v2042 = vlaneseq
        %v2043 = vshrl.u32 %v2042, 7
        %v2044 = vsub.s32 1, %v2043
        %v2045 = vrot.slane %v2036, %v2044
        %v2046 = vlaneseq
        %v2047 = vshrl.u32 %v2046, 7
        %v2048 = vsub.s32 2, %v2047
        %v2049 = vrot.slane %v2036, %v2048
        %v2050 = vlaneseq
        %v2051 = vshrl.u32 %v2050, 7
        %v2052 = vsub.s32 3, %v2051
        %v2053 = vrot.slane %v2036, %v2052
        %v2054 = vlaneseq
        %v2055 = vshrl.u32 %v2054, 7
        %v2056 = vsub.s32 4, %v2055
        %v2057 = vrot.slane %v2036, %v2056
        %v2058 = vlaneseq
        %v2059 = vshrl.u32 %v2058, 7
        %v2060 = vsub.s32 5, %v2059
        %v2061 = vrot.slane %v2036, %v2060
        %v2164 = vunpack.c.l.b16 %v1940
        %v2165 = vunpack.c.h.b16 %v1940
        %v2166 = vunpack.c.l.b16 %v1941
        %v2167 = vunpack.c.h.b16 %v1941
        %v2168 = vunpack.c.l.b16 %v1942
        %v2169 = vunpack.c.h.b16 %v1942
        %v2170 = vunpack.c.l.b16 %v1943
        %v2171 = vunpack.c.h.b16 %v1943
        %v2172 = vunpack.c.l.b16 %v1944
        %v2173 = vunpack.c.h.b16 %v1944
        %v2174 = vunpack.c.l.b16 %v1945
        %v2175 = vunpack.c.h.b16 %v1945
        %v2176 = vunpack.c.l.b16 %v1946
        %v2177 = vunpack.c.h.b16 %v1946
        %v2178 = vunpack.c.l.b16 %v1947
        %v2179 = vunpack.c.h.b16 %v1947
        %v2180 = vunpack.c.l.b16 %v1948
        %v2181 = vunpack.c.h.b16 %v1948
        %v2182 = vunpack.c.l.b16 %v1949
        %v2183 = vunpack.c.h.b16 %v1949
        %v2184 = vunpack.c.l.b16 %v1950
        %v2185 = vunpack.c.h.b16 %v1950
        %v2186 = vunpack.c.l.b16 %v1951
        %v2187 = vunpack.c.h.b16 %v1951
        %v2188 = vunpack.c.l.b16 %v1952
        %v2189 = vunpack.c.h.b16 %v1952
        %v2190 = vunpack.c.l.b16 %v1953
        %v2191 = vunpack.c.h.b16 %v1953
        %v2192 = vunpack.c.l.b16 %v1954
        %v2193 = vunpack.c.h.b16 %v1954
        %v2194 = vunpack.c.l.b16 %v1955
        %v2195 = vunpack.c.h.b16 %v1955
        %v2196 = vunpack.c.l.b16 %v1956
        %v2197 = vunpack.c.h.b16 %v1956
        %v2198 = vunpack.c.l.b16 %v1957
        %v2199 = vunpack.c.h.b16 %v1957
        %v2200 = vunpack.c.l.b16 %v1958
        %v2201 = vunpack.c.h.b16 %v1958
        %v2202 = vunpack.c.l.b16 %v1959
        %v2203 = vunpack.c.h.b16 %v1959
        %v2204 = vunpack.c.l.b16 %v1960
        %v2205 = vunpack.c.h.b16 %v1960
        %v2206 = vunpack.c.l.b16 %v1961
        %v2207 = vunpack.c.h.b16 %v1961
        %v2208 = vunpack.c.l.b16 %v1962
        %v2209 = vunpack.c.h.b16 %v1962
        %v2210 = vunpack.c.l.b16 %v1963
        %v2211 = vunpack.c.h.b16 %v1963
        %v2212 = vunpack.c.l.b16 %v1964
        %v2213 = vunpack.c.h.b16 %v1964
        %v2214 = vunpack.c.l.b16 %v1965
        %v2215 = vunpack.c.h.b16 %v1965
        %v2216 = vunpack.c.l.b16 %v1966
        %v2217 = vunpack.c.h.b16 %v1966
        %v2218 = vunpack.c.l.b16 %v1967
        %v2219 = vunpack.c.h.b16 %v1967
        %v2220 = vunpack.c.l.b16 %v1968
        %v2221 = vunpack.c.h.b16 %v1968
        %v2222 = vunpack.c.l.b16 %v1969
        %v2223 = vunpack.c.h.b16 %v1969
        %v2224 = vunpack.c.l.b16 %v1970
        %v2225 = vunpack.c.h.b16 %v1970
        %v2226 = vunpack.c.l.b16 %v1971
        %v2227 = vunpack.c.h.b16 %v1971
        %v2228 = vunpack.c.l.b16 %v1972
        %v2229 = vunpack.c.h.b16 %v1972
        %v2230 = vunpack.c.l.b16 %v1973
        %v2231 = vunpack.c.h.b16 %v1973
        %v2232 = vunpack.c.l.b16 %v1974
        %v2233 = vunpack.c.h.b16 %v1974
        %v2234 = vunpack.c.l.b16 %v1975
        %v2235 = vunpack.c.h.b16 %v1975
        %v2236 = vunpack.c.l.b16 %v1976
        %v2237 = vunpack.c.h.b16 %v1976
        %v2238 = vunpack.c.l.b16 %v1977
        %v2239 = vunpack.c.h.b16 %v1977
        %v2240 = vunpack.c.l.b16 %v1978
        %v2241 = vunpack.c.h.b16 %v1978
        %v2242 = vunpack.c.l.b16 %v1979
        %v2243 = vunpack.c.h.b16 %v1979
        %v2244 = vunpack.c.l.b16 %v1980
        %v2245 = vunpack.c.h.b16 %v1980
        %v2246 = vunpack.c.l.b16 %v1981
        %v2247 = vunpack.c.h.b16 %v1981
        %v2248 = vunpack.c.l.b16 %v1982
        %v2249 = vunpack.c.h.b16 %v1982
        %v2250 = vunpack.c.l.b16 %v1983
        %v2251 = vunpack.c.h.b16 %v1983
        %v2252 = vunpack.c.l.b16 %v1984
        %v2253 = vunpack.c.h.b16 %v1984
        %v2254 = vunpack.c.l.b16 %v1985
        %v2255 = vunpack.c.h.b16 %v1985
        %v2256 = vunpack.c.l.b16 %v1986
        %v2257 = vunpack.c.h.b16 %v1986
        %v2258 = vunpack.c.l.b16 %v1987
        %v2259 = vunpack.c.h.b16 %v1987
        %v2260 = vunpack.c.l.b16 %v1988
        %v2261 = vunpack.c.h.b16 %v1988
        %v2262 = vunpack.c.l.b16 %v1989
        %v2263 = vunpack.c.h.b16 %v1989
        %v2264 = vunpack.c.l.b16 %v1990
        %v2265 = vunpack.c.h.b16 %v1990
        %v2266 = vunpack.c.l.b16 %v1991
        %v2267 = vunpack.c.h.b16 %v1991
        %v2268 = vunpack.c.l.b16 %v1992
        %v2269 = vunpack.c.h.b16 %v1992
        %v2270 = vunpack.c.l.b16 %v1993
        %v2271 = vunpack.c.h.b16 %v1993
        %v2272 = vunpack.c.l.b16 %v1994
        %v2273 = vunpack.c.h.b16 %v1994
        %v2274 = vunpack.c.l.b16 %v1995
        %v2275 = vunpack.c.h.b16 %v1995
        %v2276 = vunpack.c.l.b16 %v1996
        %v2277 = vunpack.c.h.b16 %v1996
        %v2278 = vunpack.c.l.b16 %v1997
        %v2279 = vunpack.c.h.b16 %v1997
        %v2280 = vunpack.c.l.b16 %v1998
        %v2281 = vunpack.c.h.b16 %v1998
        %v2282 = vunpack.c.l.b16 %v1999
        %v2283 = vunpack.c.h.b16 %v1999
        %v2284 = vunpack.c.l.b16 %v2000
        %v2285 = vunpack.c.h.b16 %v2000
        %v2286 = vunpack.c.l.b16 %v2001
        %v2287 = vunpack.c.h.b16 %v2001
        %v2288 = vunpack.c.l.b16 %v2002
        %v2289 = vunpack.c.h.b16 %v2002
        %v2290 = vunpack.c.l.b16 %v2003
        %v2291 = vunpack.c.h.b16 %v2003
        %v2292 = vunpack.c.l.b16 %v2004
        %v2293 = vunpack.c.h.b16 %v2004
        %v2294 = vunpack.c.l.b16 %v2005
        %v2295 = vunpack.c.h.b16 %v2005
        %v2296 = vunpack.c.l.b16 %v2006
        %v2297 = vunpack.c.h.b16 %v2006
        %v2298 = vunpack.c.l.b16 %v2007
        %v2299 = vunpack.c.h.b16 %v2007
        %v2300 = vunpack.c.l.b16 %v2008
        %v2301 = vunpack.c.h.b16 %v2008
        %v2302 = vunpack.c.l.b16 %v2009
        %v2303 = vunpack.c.h.b16 %v2009
        %v2304 = vunpack.c.l.b16 %v2010
        %v2305 = vunpack.c.h.b16 %v2010
        %v2306 = vunpack.c.l.b16 %v2011
        %v2307 = vunpack.c.h.b16 %v2011
        %v2308 = vunpack.c.l.b16 %v2012
        %v2309 = vunpack.c.h.b16 %v2012
        %v2310 = vunpack.c.l.b16 %v2013
        %v2311 = vunpack.c.h.b16 %v2013
        %v2312 = vunpack.c.l.b16 %v2014
        %v2313 = vunpack.c.h.b16 %v2014
        %v2314 = vunpack.c.l.b16 %v2015
        %v2315 = vunpack.c.h.b16 %v2015
        %v2316 = vunpack.c.l.b16 %v2016
        %v2317 = vunpack.c.h.b16 %v2016
        %v2318 = vunpack.c.l.b16 %v2017
        %v2319 = vunpack.c.h.b16 %v2017
        %v2320 = vunpack.c.l.b16 %v2018
        %v2321 = vunpack.c.h.b16 %v2018
        %v2322 = vunpack.c.l.b16 %v2019
        %v2323 = vunpack.c.h.b16 %v2019
        %v2324 = vunpack.c.l.b16 %v2020
        %v2325 = vunpack.c.h.b16 %v2020
        %v2326 = vunpack.c.l.b16 %v2021
        %v2327 = vunpack.c.h.b16 %v2021
        %v2328 = vunpack.c.l.b16 %v2022
        %v2329 = vunpack.c.h.b16 %v2022
        %v2330 = vunpack.c.l.b16 %v2023
        %v2331 = vunpack.c.h.b16 %v2023
        %v2332 = vunpack.c.l.b16 %v2024
        %v2333 = vunpack.c.h.b16 %v2024
        %v2334 = vunpack.c.l.b16 %v2025
        %v2335 = vunpack.c.h.b16 %v2025
        %v2336 = vunpack.c.l.b16 %v2026
        %v2337 = vunpack.c.h.b16 %v2026
        %v2338 = vunpack.c.l.b16 %v2027
        %v2339 = vunpack.c.h.b16 %v2027
        %v2340 = vunpack.c.l.b16 %v2028
        %v2341 = vunpack.c.h.b16 %v2028
        %v2342 = vunpack.c.l.b16 %v2029
        %v2343 = vunpack.c.h.b16 %v2029
        %v2344 = vunpack.c.l.b16 %v2030
        %v2345 = vunpack.c.h.b16 %v2030
        %v2346 = vunpack.c.l.b16 %v2031
        %v2347 = vunpack.c.h.b16 %v2031
        %v2348 = vunpack.c.l.b16 %v2032
        %v2349 = vunpack.c.h.b16 %v2032
        %v2350 = vunpack.c.l.b16 %v2033
        %v2351 = vunpack.c.h.b16 %v2033
        %v2352 = vunpack.c.l.b16 %v2034
        %v2353 = vunpack.c.h.b16 %v2034
        %v2354 = vunpack.c.l.b16 %v2035
        %v2355 = vunpack.c.h.b16 %v2035
        %v2356 = vpack.c.b16 %v2170, %v2164
        %v2357 = vpack.c.b16 %v2171, %v2165
        %v2358 = vpack.c.b16 %v2172, %v2166
        %v2359 = vpack.c.b16 %v2173, %v2167
        %v2360 = vpack.c.b16 %v2174, %v2168
        %v2361 = vpack.c.b16 %v2175, %v2169
        %v2362 = vpack.c.b16 %v2182, %v2176
        %v2363 = vpack.c.b16 %v2183, %v2177
        %v2364 = vpack.c.b16 %v2184, %v2178
        %v2365 = vpack.c.b16 %v2185, %v2179
        %v2366 = vpack.c.b16 %v2186, %v2180
        %v2367 = vpack.c.b16 %v2187, %v2181
        %v2368 = vpack.c.b16 %v2194, %v2188
        %v2369 = vpack.c.b16 %v2195, %v2189
        %v2370 = vpack.c.b16 %v2196, %v2190
        %v2371 = vpack.c.b16 %v2197, %v2191
        %v2372 = vpack.c.b16 %v2198, %v2192
        %v2373 = vpack.c.b16 %v2199, %v2193
        %v2374 = vpack.c.b16 %v2206, %v2200
        %v2375 = vpack.c.b16 %v2207, %v2201
        %v2376 = vpack.c.b16 %v2208, %v2202
        %v2377 = vpack.c.b16 %v2209, %v2203
        %v2378 = vpack.c.b16 %v2210, %v2204
        %v2379 = vpack.c.b16 %v2211, %v2205
        %v2380 = vpack.c.b16 %v2218, %v2212
        %v2381 = vpack.c.b16 %v2219, %v2213
        %v2382 = vpack.c.b16 %v2220, %v2214
        %v2383 = vpack.c.b16 %v2221, %v2215
        %v2384 = vpack.c.b16 %v2222, %v2216
        %v2385 = vpack.c.b16 %v2223, %v2217
        %v2386 = vpack.c.b16 %v2230, %v2224
        %v2387 = vpack.c.b16 %v2231, %v2225
        %v2388 = vpack.c.b16 %v2232, %v2226
        %v2389 = vpack.c.b16 %v2233, %v2227
        %v2390 = vpack.c.b16 %v2234, %v2228
        %v2391 = vpack.c.b16 %v2235, %v2229
        %v2392 = vpack.c.b16 %v2242, %v2236
        %v2393 = vpack.c.b16 %v2243, %v2237
        %v2394 = vpack.c.b16 %v2244, %v2238
        %v2395 = vpack.c.b16 %v2245, %v2239
        %v2396 = vpack.c.b16 %v2246, %v2240
        %v2397 = vpack.c.b16 %v2247, %v2241
        %v2398 = vpack.c.b16 %v2254, %v2248
        %v2399 = vpack.c.b16 %v2255, %v2249
        %v2400 = vpack.c.b16 %v2256, %v2250
        %v2401 = vpack.c.b16 %v2257, %v2251
        %v2402 = vpack.c.b16 %v2258, %v2252
        %v2403 = vpack.c.b16 %v2259, %v2253
        %v2404 = vpack.c.b16 %v2266, %v2260
        %v2405 = vpack.c.b16 %v2267, %v2261
        %v2406 = vpack.c.b16 %v2268, %v2262
        %v2407 = vpack.c.b16 %v2269, %v2263
        %v2408 = vpack.c.b16 %v2270, %v2264
        %v2409 = vpack.c.b16 %v2271, %v2265
        %v2410 = vpack.c.b16 %v2278, %v2272
        %v2411 = vpack.c.b16 %v2279, %v2273
        %v2412 = vpack.c.b16 %v2280, %v2274
        %v2413 = vpack.c.b16 %v2281, %v2275
        %v2414 = vpack.c.b16 %v2282, %v2276
        %v2415 = vpack.c.b16 %v2283, %v2277
        %v2416 = vpack.c.b16 %v2290, %v2284
        %v2417 = vpack.c.b16 %v2291, %v2285
        %v2418 = vpack.c.b16 %v2292, %v2286
        %v2419 = vpack.c.b16 %v2293, %v2287
        %v2420 = vpack.c.b16 %v2294, %v2288
        %v2421 = vpack.c.b16 %v2295, %v2289
        %v2422 = vpack.c.b16 %v2302, %v2296
        %v2423 = vpack.c.b16 %v2303, %v2297
        %v2424 = vpack.c.b16 %v2304, %v2298
        %v2425 = vpack.c.b16 %v2305, %v2299
        %v2426 = vpack.c.b16 %v2306, %v2300
        %v2427 = vpack.c.b16 %v2307, %v2301
        %v2428 = vpack.c.b16 %v2314, %v2308
        %v2429 = vpack.c.b16 %v2315, %v2309
        %v2430 = vpack.c.b16 %v2316, %v2310
        %v2431 = vpack.c.b16 %v2317, %v2311
        %v2432 = vpack.c.b16 %v2318, %v2312
        %v2433 = vpack.c.b16 %v2319, %v2313
        %v2434 = vpack.c.b16 %v2326, %v2320
        %v2435 = vpack.c.b16 %v2327, %v2321
        %v2436 = vpack.c.b16 %v2328, %v2322
        %v2437 = vpack.c.b16 %v2329, %v2323
        %v2438 = vpack.c.b16 %v2330, %v2324
        %v2439 = vpack.c.b16 %v2331, %v2325
        %v2440 = vpack.c.b16 %v2338, %v2332
        %v2441 = vpack.c.b16 %v2339, %v2333
        %v2442 = vpack.c.b16 %v2340, %v2334
        %v2443 = vpack.c.b16 %v2341, %v2335
        %v2444 = vpack.c.b16 %v2342, %v2336
        %v2445 = vpack.c.b16 %v2343, %v2337
        %v2446 = vpack.c.b16 %v2350, %v2344
        %v2447 = vpack.c.b16 %v2351, %v2345
        %v2448 = vpack.c.b16 %v2352, %v2346
        %v2449 = vpack.c.b16 %v2353, %v2347
        %v2450 = vpack.c.b16 %v2354, %v2348
        %v2451 = vpack.c.b16 %v2355, %v2349
        %2548 = vmatprep.subr.bf16.mxu0 %v2357
        %2549 = vmatpush1.bf16.msra.mxu0 %v2356
        %2550 = vmatprep.subr.bf16.mxu0 %v2363
        %2551 = vmatpush1.bf16.msra.mxu0 %v2362
        %2552 = vmatprep.subr.bf16.mxu0 %v2369
        %2553 = vmatpush1.bf16.msra.mxu0 %v2368
        %2554 = vmatprep.subr.bf16.mxu0 %v2375
        %2555 = vmatpush1.bf16.msra.mxu0 %v2374
        %2556 = vmatprep.subr.bf16.mxu0 %v2381
        %2557 = vmatpush1.bf16.msra.mxu0 %v2380
        %2558 = vmatprep.subr.bf16.mxu0 %v2387
        %2559 = vmatpush1.bf16.msra.mxu0 %v2386
        %2560 = vmatprep.subr.bf16.mxu0 %v2393
        %2561 = vmatpush1.bf16.msra.mxu0 %v2392
        %2562 = vmatprep.subr.bf16.mxu0 %v2399
        %2563 = vmatpush1.bf16.msra.mxu0 %v2398
        %2564 = vmatprep.subr.bf16.mxu0 %v2405
        %2565 = vmatpush1.bf16.msra.mxu0 %v2404
        %2566 = vmatprep.subr.bf16.mxu0 %v2411
        %2567 = vmatpush1.bf16.msra.mxu0 %v2410
        %2568 = vmatprep.subr.bf16.mxu0 %v2417
        %2569 = vmatpush1.bf16.msra.mxu0 %v2416
        %2570 = vmatprep.subr.bf16.mxu0 %v2423
        %2571 = vmatpush1.bf16.msra.mxu0 %v2422
        %2572 = vmatprep.subr.bf16.mxu0 %v2429
        %2573 = vmatpush1.bf16.msra.mxu0 %v2428
        %2574 = vmatprep.subr.bf16.mxu0 %v2435
        %2575 = vmatpush1.bf16.msra.mxu0 %v2434
        %2576 = vmatprep.subr.bf16.mxu0 %v2441
        %2577 = vmatpush1.bf16.msra.mxu0 %v2440
        %2578 = vmatprep.subr.bf16.mxu0 %v2447
        %2579 = vmatpush1.bf16.msra.mxu0 %v2446
        %2580 = vmatprep.mubr.bf16.mxu0 %v1939
        %2581 = vmatmul.mubr.bf16.gmra.mrb[0].mxu0 %v1938
        %v2582 = vpop.f32.mrb[0].mxu0
        %v2583 = vadd.f32 %v2041, %v2582
        %v2584 = vpop.f32.mrb[0].mxu0
        %v2585 = vadd.f32 %v2045, %v2584
        %v2586 = vpop.f32.mrb[0].mxu0
        %v2587 = vadd.f32 %v2041, %v2586
        %v2588 = vpop.f32.mrb[0].mxu0
        %v2589 = vadd.f32 %v2045, %v2588
        %2590 = vdwg.mxu0
        %2591 = vmatprep.subr.bf16.mxu0 %v2359
        %2592 = vmatpush1.bf16.msra.mxu0 %v2358
        %2593 = vmatprep.subr.bf16.mxu0 %v2365
        %2594 = vmatpush1.bf16.msra.mxu0 %v2364
        %2595 = vmatprep.subr.bf16.mxu0 %v2371
        %2596 = vmatpush1.bf16.msra.mxu0 %v2370
        %2597 = vmatprep.subr.bf16.mxu0 %v2377
        %2598 = vmatpush1.bf16.msra.mxu0 %v2376
        %2599 = vmatprep.subr.bf16.mxu0 %v2383
        %2600 = vmatpush1.bf16.msra.mxu0 %v2382
        %2601 = vmatprep.subr.bf16.mxu0 %v2389
        %2602 = vmatpush1.bf16.msra.mxu0 %v2388
        %2603 = vmatprep.subr.bf16.mxu0 %v2395
        %2604 = vmatpush1.bf16.msra.mxu0 %v2394
        %2605 = vmatprep.subr.bf16.mxu0 %v2401
        %2606 = vmatpush1.bf16.msra.mxu0 %v2400
        %2607 = vmatprep.subr.bf16.mxu0 %v2407
        %2608 = vmatpush1.bf16.msra.mxu0 %v2406
        %2609 = vmatprep.subr.bf16.mxu0 %v2413
        %2610 = vmatpush1.bf16.msra.mxu0 %v2412
        %2611 = vmatprep.subr.bf16.mxu0 %v2419
        %2612 = vmatpush1.bf16.msra.mxu0 %v2418
        %2613 = vmatprep.subr.bf16.mxu0 %v2425
        %2614 = vmatpush1.bf16.msra.mxu0 %v2424
        %2615 = vmatprep.subr.bf16.mxu0 %v2431
        %2616 = vmatpush1.bf16.msra.mxu0 %v2430
        %2617 = vmatprep.subr.bf16.mxu0 %v2437
        %2618 = vmatpush1.bf16.msra.mxu0 %v2436
        %2619 = vmatprep.subr.bf16.mxu0 %v2443
        %2620 = vmatpush1.bf16.msra.mxu0 %v2442
        %2621 = vmatprep.subr.bf16.mxu0 %v2449
        %2622 = vmatpush1.bf16.msra.mxu0 %v2448
        %2623 = vmatprep.mubr.bf16.mxu0 %v1939
        %2624 = vmatmul.mubr.bf16.gmra.mrb[0].mxu0 %v1938
        %v2625 = vpop.f32.mrb[0].mxu0
        %v2626 = vadd.f32 %v2049, %v2625
        %v2627 = vpop.f32.mrb[0].mxu0
        %v2628 = vadd.f32 %v2053, %v2627
        %v2629 = vpop.f32.mrb[0].mxu0
        %v2630 = vadd.f32 %v2049, %v2629
        %v2631 = vpop.f32.mrb[0].mxu0
        %v2632 = vadd.f32 %v2053, %v2631
        %2633 = vdwg.mxu0
        %2634 = vmatprep.subr.bf16.mxu0 %v2361
        %2635 = vmatpush1.bf16.msra.mxu0 %v2360
        %2636 = vmatprep.subr.bf16.mxu0 %v2367
        %2637 = vmatpush1.bf16.msra.mxu0 %v2366
        %2638 = vmatprep.subr.bf16.mxu0 %v2373
        %2639 = vmatpush1.bf16.msra.mxu0 %v2372
        %2640 = vmatprep.subr.bf16.mxu0 %v2379
        %2641 = vmatpush1.bf16.msra.mxu0 %v2378
        %2642 = vmatprep.subr.bf16.mxu0 %v2385
        %2643 = vmatpush1.bf16.msra.mxu0 %v2384
        %2644 = vmatprep.subr.bf16.mxu0 %v2391
        %2645 = vmatpush1.bf16.msra.mxu0 %v2390
        %2646 = vmatprep.subr.bf16.mxu0 %v2397
        %2647 = vmatpush1.bf16.msra.mxu0 %v2396
        %2648 = vmatprep.subr.bf16.mxu0 %v2403
        %2649 = vmatpush1.bf16.msra.mxu0 %v2402
        %2650 = vmatprep.subr.bf16.mxu0 %v2409
        %2651 = vmatpush1.bf16.msra.mxu0 %v2408
        %2652 = vmatprep.subr.bf16.mxu0 %v2415
        %2653 = vmatpush1.bf16.msra.mxu0 %v2414
        %2654 = vmatprep.subr.bf16.mxu0 %v2421
        %2655 = vmatpush1.bf16.msra.mxu0 %v2420
        %2656 = vmatprep.subr.bf16.mxu0 %v2427
        %2657 = vmatpush1.bf16.msra.mxu0 %v2426
        %2658 = vmatprep.subr.bf16.mxu0 %v2433
        %2659 = vmatpush1.bf16.msra.mxu0 %v2432
        %2660 = vmatprep.subr.bf16.mxu0 %v2439
        %2661 = vmatpush1.bf16.msra.mxu0 %v2438
        %2662 = vmatprep.subr.bf16.mxu0 %v2445
        %2663 = vmatpush1.bf16.msra.mxu0 %v2444
        %2664 = vmatprep.subr.bf16.mxu0 %v2451
        %2665 = vmatpush1.bf16.msra.mxu0 %v2450
        %2666 = vmatprep.mubr.bf16.mxu0 %v1939
        %2667 = vmatmul.mubr.bf16.gmra.mrb[0].mxu0 %v1938
        %v2668 = vpop.f32.mrb[0].mxu0
        %v2669 = vadd.f32 %v2057, %v2668
        %v2670 = vpop.f32.mrb[0].mxu0
        %v2671 = vadd.f32 %v2061, %v2670
        %v2672 = vpop.f32.mrb[0].mxu0
        %v2673 = vadd.f32 %v2057, %v2672
        %v2674 = vpop.f32.mrb[0].mxu0
        %v2675 = vadd.f32 %v2061, %v2674
        %2676 = vdwg.mxu0
        %v2677 = vld [vmem:[#allocation8] sm:$0xff]
        %v2678 = vld [vmem:[#allocation8 + $0x8] sm:$0xff]
        %v2679 = vpack.c.bf16 %v2587, %v2583
        %v2680 = vpack.c.bf16 %v2630, %v2626
        %v2681 = vpack.c.bf16 %v2673, %v2669
        %2682 = vmatprep.subr.bf16.mxu0 0
        %2683 = vmatpush1.bf16.xpose.msra.mxu0 %v2680
        %2684 = vmatprep.subr.bf16.mxu0 0
        %2685 = vmatpush1.bf16.xpose.msra.mxu0 0
        %2686 = vmatprep.subr.bf16.mxu0 0
        %2687 = vmatpush1.bf16.xpose.msra.mxu0 0
        %2688 = vmatprep.subr.bf16.mxu0 0
        %2689 = vmatpush1.bf16.xpose.msra.mxu0 0
        %2690 = vmatprep.subr.bf16.mxu0 0
        %2691 = vmatpush1.bf16.xpose.msra.mxu0 0
        %2692 = vmatprep.subr.bf16.mxu0 0
        %2693 = vmatpush1.bf16.xpose.msra.mxu0 0
        %2694 = vmatprep.subr.bf16.mxu0 0
        %2695 = vmatpush1.bf16.xpose.msra.mxu0 0
        %2696 = vmatprep.subr.bf16.mxu0 0
        %2697 = vmatpush1.bf16.xpose.msra.mxu0 0
        %2698 = vmatprep.subr.bf16.mxu0 0
        %2699 = vmatpush1.bf16.xpose.msra.mxu0 0
        %2700 = vmatprep.subr.bf16.mxu0 0
        %2701 = vmatpush1.bf16.xpose.msra.mxu0 0
        %2702 = vmatprep.subr.bf16.mxu0 0
        %2703 = vmatpush1.bf16.xpose.msra.mxu0 0
        %2704 = vmatprep.subr.bf16.mxu0 0
        %2705 = vmatpush1.bf16.xpose.msra.mxu0 0
        %2706 = vmatprep.subr.bf16.mxu0 0
        %2707 = vmatpush1.bf16.xpose.msra.mxu0 0
        %2708 = vmatprep.subr.bf16.mxu0 0
        %2709 = vmatpush1.bf16.xpose.msra.mxu0 0
        %2710 = vmatprep.subr.bf16.mxu0 0
        %2711 = vmatpush1.bf16.xpose.msra.mxu0 0
        %2712 = vmatprep.subr.bf16.mxu0 0
        %2713 = vmatpush1.bf16.xpose.msra.mxu0 0
        %2714 = vmatprep.mubr.bf16.mxu0 0
        %2715 = vmatmul.mubr.bf16.gmra.mrb[0].mxu0 %v2679
        %v2716 = vpop.f32.mrb[0].mxu0
        %v2717 = vadd.f32 %v2677, %v2716
        %v2718 = vpop.f32.mrb[0].mxu0
        %v2719 = vpop.f32.mrb[0].mxu0
        %v2720 = vadd.f32 %v2678, %v2719
        %v2721 = vpop.f32.mrb[0].mxu0
        %2722 = vdwg.mxu0
        %vm2723 = vcmask 130048
        %v2724 = vsel %vm2723, %v2717, -inf
        %2725 = vmax.xlane.f32.xlu0 %v2724
        %v2726 = vpop.xlane.xlu0 %2725
        %v2727 = vsel %vm2723, %v2720, -inf
        %2728 = vmax.xlane.f32.xlu0 %v2727
        %v2729 = vpop.xlane.xlu0 %2728
        %v2730 = vsub.f32 %v2717, %v2726
        %v2731 = vsub.f32 %v2720, %v2729
        %v2732 = vmul.f32 %v2730, 1.442695
        %v2733 = vpow.pop %v2732
        %v2734 = vmul.f32 %v2731, 1.442695
        %v2735 = vpow.pop %v2734
        %v2736 = vsel %vm2723, %v2733, 0.0
        %2737 = vadd.xlane.f32.xlu0 %v2736
        %v2738 = vpop.xlane.xlu0 %2737
        %v2739 = vsel %vm2723, %v2735, 0.0
        %2740 = vadd.xlane.f32.xlu0 %v2739
        %v2741 = vpop.xlane.xlu0 %2740
        %v2742 = vpack.c.bf16 %v2735, %v2733
        %v2744 = vsel %vm2723, %v2742, 0
        %2746 = vmatprep.subr.bf16.mxu0 0
        %2747 = vmatpush1.bf16.msra.mxu0 %v2681
        %2748 = vmatprep.subr.bf16.mxu0 0
        %2749 = vmatpush1.bf16.msra.mxu0 0
        %2750 = vmatprep.subr.bf16.mxu0 0
        %2751 = vmatpush1.bf16.msra.mxu0 0
        %2752 = vmatprep.subr.bf16.mxu0 0
        %2753 = vmatpush1.bf16.msra.mxu0 0
        %2754 = vmatprep.subr.bf16.mxu0 0
        %2755 = vmatpush1.bf16.msra.mxu0 0
        %2756 = vmatprep.subr.bf16.mxu0 0
        %2757 = vmatpush1.bf16.msra.mxu0 0
        %2758 = vmatprep.subr.bf16.mxu0 0
        %2759 = vmatpush1.bf16.msra.mxu0 0
        %2760 = vmatprep.subr.bf16.mxu0 0
        %2761 = vmatpush1.bf16.msra.mxu0 0
        %2762 = vmatprep.subr.bf16.mxu0 0
        %2763 = vmatpush1.bf16.msra.mxu0 0
        %2764 = vmatprep.subr.bf16.mxu0 0
        %2765 = vmatpush1.bf16.msra.mxu0 0
        %2766 = vmatprep.subr.bf16.mxu0 0
        %2767 = vmatpush1.bf16.msra.mxu0 0
        %2768 = vmatprep.subr.bf16.mxu0 0
        %2769 = vmatpush1.bf16.msra.mxu0 0
        %2770 = vmatprep.subr.bf16.mxu0 0
        %2771 = vmatpush1.bf16.msra.mxu0 0
        %2772 = vmatprep.subr.bf16.mxu0 0
        %2773 = vmatpush1.bf16.msra.mxu0 0
        %2774 = vmatprep.subr.bf16.mxu0 0
        %2775 = vmatpush1.bf16.msra.mxu0 0
        %2776 = vmatprep.subr.bf16.mxu0 0
        %2777 = vmatpush1.bf16.msra.mxu0 0
        %2778 = vmatprep.mubr.bf16.mxu0 0
        %2779 = vmatmul.mubr.bf16.gmra.mrb[0].mxu0 %v2744
        %v2780 = vpop.f32.mrb[0].mxu0
        %v2781 = vadd.f32 0.0, %v2780
        %v2782 = vpop.f32.mrb[0].mxu0
        %v2783 = vpop.f32.mrb[0].mxu0
        %v2784 = vadd.f32 0.0, %v2783
        %v2785 = vpop.f32.mrb[0].mxu0
        %2786 = vdwg.mxu0
        %v2787 = vrcp.pop %v2738
        %v2788 = vrcp.pop %v2741
        %v2789 = vmul.f32 %v2781, %v2787
        %v2790 = vmul.f32 %v2784, %v2788
        %v2791 = vpack.c.bf16 %v2790, %v2789
        %v2792 = vpack.c.bf16 %v2589, %v2585
        %v2793 = vpack.c.bf16 %v2632, %v2628
        %v2794 = vpack.c.bf16 %v2675, %v2671
        %2795 = vmatprep.subr.bf16.mxu0 0
        %2796 = vmatpush1.bf16.xpose.msra.mxu0 %v2793
        %2797 = vmatprep.subr.bf16.mxu0 0
        %2798 = vmatpush1.bf16.xpose.msra.mxu0 0
        %2799 = vmatprep.subr.bf16.mxu0 0
        %2800 = vmatpush1.bf16.xpose.msra.mxu0 0
        %2801 = vmatprep.subr.bf16.mxu0 0
        %2802 = vmatpush1.bf16.xpose.msra.mxu0 0
        %2803 = vmatprep.subr.bf16.mxu0 0
        %2804 = vmatpush1.bf16.xpose.msra.mxu0 0
        %2805 = vmatprep.subr.bf16.mxu0 0
        %2806 = vmatpush1.bf16.xpose.msra.mxu0 0
        %2807 = vmatprep.subr.bf16.mxu0 0
        %2808 = vmatpush1.bf16.xpose.msra.mxu0 0
        %2809 = vmatprep.subr.bf16.mxu0 0
        %2810 = vmatpush1.bf16.xpose.msra.mxu0 0
        %2811 = vmatprep.subr.bf16.mxu0 0
        %2812 = vmatpush1.bf16.xpose.msra.mxu0 0
        %2813 = vmatprep.subr.bf16.mxu0 0
        %2814 = vmatpush1.bf16.xpose.msra.mxu0 0
        %2815 = vmatprep.subr.bf16.mxu0 0
        %2816 = vmatpush1.bf16.xpose.msra.mxu0 0
        %2817 = vmatprep.subr.bf16.mxu0 0
        %2818 = vmatpush1.bf16.xpose.msra.mxu0 0
        %2819 = vmatprep.subr.bf16.mxu0 0
        %2820 = vmatpush1.bf16.xpose.msra.mxu0 0
        %2821 = vmatprep.subr.bf16.mxu0 0
        %2822 = vmatpush1.bf16.xpose.msra.mxu0 0
        %2823 = vmatprep.subr.bf16.mxu0 0
        %2824 = vmatpush1.bf16.xpose.msra.mxu0 0
        %2825 = vmatprep.subr.bf16.mxu0 0
        %2826 = vmatpush1.bf16.xpose.msra.mxu0 0
        %2827 = vmatprep.mubr.bf16.mxu0 0
        %2828 = vmatmul.mubr.bf16.gmra.mrb[0].mxu0 %v2792
        %v2829 = vpop.f32.mrb[0].mxu0
        %v2830 = vadd.f32 %v2677, %v2829
        %v2831 = vpop.f32.mrb[0].mxu0
        %v2832 = vpop.f32.mrb[0].mxu0
        %v2833 = vadd.f32 %v2678, %v2832
        %v2834 = vpop.f32.mrb[0].mxu0
        %2835 = vdwg.mxu0
        %v2836 = vsel %vm2723, %v2830, -inf
        %2837 = vmax.xlane.f32.xlu0 %v2836
        %v2838 = vpop.xlane.xlu0 %2837
        %v2839 = vsel %vm2723, %v2833, -inf
        %2840 = vmax.xlane.f32.xlu0 %v2839
        %v2841 = vpop.xlane.xlu0 %2840
        %v2842 = vsub.f32 %v2830, %v2838
        %v2843 = vsub.f32 %v2833, %v2841
        %v2844 = vmul.f32 %v2842, 1.442695
        %v2845 = vpow.pop %v2844
        %v2846 = vmul.f32 %v2843, 1.442695
        %v2847 = vpow.pop %v2846
        %v2848 = vsel %vm2723, %v2845, 0.0
        %2849 = vadd.xlane.f32.xlu0 %v2848
        %v2850 = vpop.xlane.xlu0 %2849
        %v2851 = vsel %vm2723, %v2847, 0.0
        %2852 = vadd.xlane.f32.xlu0 %v2851
        %v2853 = vpop.xlane.xlu0 %2852
        %v2854 = vpack.c.bf16 %v2847, %v2845
        %v2856 = vsel %vm2723, %v2854, 0
        %2858 = vmatprep.subr.bf16.mxu0 0
        %2859 = vmatpush1.bf16.msra.mxu0 %v2794
        %2860 = vmatprep.subr.bf16.mxu0 0
        %2861 = vmatpush1.bf16.msra.mxu0 0
        %2862 = vmatprep.subr.bf16.mxu0 0
        %2863 = vmatpush1.bf16.msra.mxu0 0
        %2864 = vmatprep.subr.bf16.mxu0 0
        %2865 = vmatpush1.bf16.msra.mxu0 0
        %2866 = vmatprep.subr.bf16.mxu0 0
        %2867 = vmatpush1.bf16.msra.mxu0 0
        %2868 = vmatprep.subr.bf16.mxu0 0
        %2869 = vmatpush1.bf16.msra.mxu0 0
        %2870 = vmatprep.subr.bf16.mxu0 0
        %2871 = vmatpush1.bf16.msra.mxu0 0
        %2872 = vmatprep.subr.bf16.mxu0 0
        %2873 = vmatpush1.bf16.msra.mxu0 0
        %2874 = vmatprep.subr.bf16.mxu0 0
        %2875 = vmatpush1.bf16.msra.mxu0 0
        %2876 = vmatprep.subr.bf16.mxu0 0
        %2877 = vmatpush1.bf16.msra.mxu0 0
        %2878 = vmatprep.subr.bf16.mxu0 0
        %2879 = vmatpush1.bf16.msra.mxu0 0
        %2880 = vmatprep.subr.bf16.mxu0 0
        %2881 = vmatpush1.bf16.msra.mxu0 0
        %2882 = vmatprep.subr.bf16.mxu0 0
        %2883 = vmatpush1.bf16.msra.mxu0 0
        %2884 = vmatprep.subr.bf16.mxu0 0
        %2885 = vmatpush1.bf16.msra.mxu0 0
        %2886 = vmatprep.subr.bf16.mxu0 0
        %2887 = vmatpush1.bf16.msra.mxu0 0
        %2888 = vmatprep.subr.bf16.mxu0 0
        %2889 = vmatpush1.bf16.msra.mxu0 0
        %2890 = vmatprep.mubr.bf16.mxu0 0
        %2891 = vmatmul.mubr.bf16.gmra.mrb[0].mxu0 %v2856
        %v2892 = vpop.f32.mrb[0].mxu0
        %v2893 = vadd.f32 0.0, %v2892
        %v2894 = vpop.f32.mrb[0].mxu0
        %v2895 = vpop.f32.mrb[0].mxu0
        %v2896 = vadd.f32 0.0, %v2895
        %v2897 = vpop.f32.mrb[0].mxu0
        %2898 = vdwg.mxu0
        %v2899 = vrcp.pop %v2850
        %v2900 = vrcp.pop %v2853
        %v2901 = vmul.f32 %v2893, %v2899
        %v2902 = vmul.f32 %v2896, %v2900
        %v2903 = vpack.c.bf16 %v2902, %v2901
        %v2904 = vld [vmem:[%s1006] sm:$0xff]
        %v2905 = vld [vmem:[%s1006 + $0x8] sm:$0xff]
        %v2906 = vld [vmem:[%s1006 + $0x10] sm:$0xff]
        %v2907 = vld [vmem:[%s1006 + $0x18] sm:$0xff]
        %v2908 = vld [vmem:[%s1006 + $0x20] sm:$0xff]
        %v2909 = vld [vmem:[%s1006 + $0x28] sm:$0xff]
        %v2910 = vld [vmem:[%s1006 + $0x30] sm:$0xff]
        %v2911 = vld [vmem:[%s1006 + $0x38] sm:$0xff]
        %v2912 = vld [vmem:[%s1006 + $0x40] sm:$0xff]
        %v2913 = vld [vmem:[%s1006 + $0x48] sm:$0xff]
        %v2914 = vld [vmem:[%s1006 + $0x50] sm:$0xff]
        %v2915 = vld [vmem:[%s1006 + $0x58] sm:$0xff]
        %v2916 = vld [vmem:[%s1006 + $0x60] sm:$0xff]
        %v2917 = vld [vmem:[%s1006 + $0x68] sm:$0xff]
        %v2918 = vld [vmem:[%s1006 + $0x70] sm:$0xff]
        %v2919 = vld [vmem:[%s1006 + $0x78] sm:$0xff]
        %v2920 = vld [vmem:[%s1006 + $0x80] sm:$0xff]
        %v2921 = vld [vmem:[%s1006 + $0x88] sm:$0xff]
        %v2922 = vld [vmem:[%s1006 + $0x90] sm:$0xff]
        %v2923 = vld [vmem:[%s1006 + $0x98] sm:$0xff]
        %v2924 = vld [vmem:[%s1006 + $0xa0] sm:$0xff]
        %v2925 = vld [vmem:[%s1006 + $0xa8] sm:$0xff]
        %v2926 = vld [vmem:[%s1006 + $0xb0] sm:$0xff]
        %v2927 = vld [vmem:[%s1006 + $0xb8] sm:$0xff]
        %v2928 = vld [vmem:[%s1006 + $0xc0] sm:$0xff]
        %v2929 = vld [vmem:[%s1006 + $0xc8] sm:$0xff]
        %v2930 = vld [vmem:[%s1006 + $0xd0] sm:$0xff]
        %v2931 = vld [vmem:[%s1006 + $0xd8] sm:$0xff]
        %v2932 = vld [vmem:[%s1006 + $0xe0] sm:$0xff]
        %v2933 = vld [vmem:[%s1006 + $0xe8] sm:$0xff]
        %v2934 = vld [vmem:[%s1006 + $0xf0] sm:$0xff]
        %v2935 = vld [vmem:[%s1006 + $0xf8] sm:$0xff]
        %v2936 = vld [vmem:[%s1015] sm:$0x3]
        %v2938 = vlaneseq
        %v2939 = vshrl.u32 %v2938, 7
        %v2940 = vsub.s32 0, %v2939
        %v2941 = vrot.slane %v2936, %v2940
        %v2942 = vlaneseq
        %v2943 = vshrl.u32 %v2942, 7
        %v2944 = vsub.s32 1, %v2943
        %v2945 = vrot.slane %v2936, %v2944
        %v2980 = vunpack.c.l.b16 %v2904
        %v2981 = vunpack.c.h.b16 %v2904
        %v2982 = vunpack.c.l.b16 %v2905
        %v2983 = vunpack.c.h.b16 %v2905
        %v2984 = vunpack.c.l.b16 %v2906
        %v2985 = vunpack.c.h.b16 %v2906
        %v2986 = vunpack.c.l.b16 %v2907
        %v2987 = vunpack.c.h.b16 %v2907
        %v2988 = vunpack.c.l.b16 %v2908
        %v2989 = vunpack.c.h.b16 %v2908
        %v2990 = vunpack.c.l.b16 %v2909
        %v2991 = vunpack.c.h.b16 %v2909
        %v2992 = vunpack.c.l.b16 %v2910
        %v2993 = vunpack.c.h.b16 %v2910
        %v2994 = vunpack.c.l.b16 %v2911
        %v2995 = vunpack.c.h.b16 %v2911
        %v2996 = vunpack.c.l.b16 %v2912
        %v2997 = vunpack.c.h.b16 %v2912
        %v2998 = vunpack.c.l.b16 %v2913
        %v2999 = vunpack.c.h.b16 %v2913
        %v3000 = vunpack.c.l.b16 %v2914
        %v3001 = vunpack.c.h.b16 %v2914
        %v3002 = vunpack.c.l.b16 %v2915
        %v3003 = vunpack.c.h.b16 %v2915
        %v3004 = vunpack.c.l.b16 %v2916
        %v3005 = vunpack.c.h.b16 %v2916
        %v3006 = vunpack.c.l.b16 %v2917
        %v3007 = vunpack.c.h.b16 %v2917
        %v3008 = vunpack.c.l.b16 %v2918
        %v3009 = vunpack.c.h.b16 %v2918
        %v3010 = vunpack.c.l.b16 %v2919
        %v3011 = vunpack.c.h.b16 %v2919
        %v3012 = vunpack.c.l.b16 %v2920
        %v3013 = vunpack.c.h.b16 %v2920
        %v3014 = vunpack.c.l.b16 %v2921
        %v3015 = vunpack.c.h.b16 %v2921
        %v3016 = vunpack.c.l.b16 %v2922
        %v3017 = vunpack.c.h.b16 %v2922
        %v3018 = vunpack.c.l.b16 %v2923
        %v3019 = vunpack.c.h.b16 %v2923
        %v3020 = vunpack.c.l.b16 %v2924
        %v3021 = vunpack.c.h.b16 %v2924
        %v3022 = vunpack.c.l.b16 %v2925
        %v3023 = vunpack.c.h.b16 %v2925
        %v3024 = vunpack.c.l.b16 %v2926
        %v3025 = vunpack.c.h.b16 %v2926
        %v3026 = vunpack.c.l.b16 %v2927
        %v3027 = vunpack.c.h.b16 %v2927
        %v3028 = vunpack.c.l.b16 %v2928
        %v3029 = vunpack.c.h.b16 %v2928
        %v3030 = vunpack.c.l.b16 %v2929
        %v3031 = vunpack.c.h.b16 %v2929
        %v3032 = vunpack.c.l.b16 %v2930
        %v3033 = vunpack.c.h.b16 %v2930
        %v3034 = vunpack.c.l.b16 %v2931
        %v3035 = vunpack.c.h.b16 %v2931
        %v3036 = vunpack.c.l.b16 %v2932
        %v3037 = vunpack.c.h.b16 %v2932
        %v3038 = vunpack.c.l.b16 %v2933
        %v3039 = vunpack.c.h.b16 %v2933
        %v3040 = vunpack.c.l.b16 %v2934
        %v3041 = vunpack.c.h.b16 %v2934
        %v3042 = vunpack.c.l.b16 %v2935
        %v3043 = vunpack.c.h.b16 %v2935
        %v3044 = vpack.c.b16 %v2982, %v2980
        %v3045 = vpack.c.b16 %v2983, %v2981
        %v3046 = vpack.c.b16 %v2986, %v2984
        %v3047 = vpack.c.b16 %v2987, %v2985
        %v3048 = vpack.c.b16 %v2990, %v2988
        %v3049 = vpack.c.b16 %v2991, %v2989
        %v3050 = vpack.c.b16 %v2994, %v2992
        %v3051 = vpack.c.b16 %v2995, %v2993
        %v3052 = vpack.c.b16 %v2998, %v2996
        %v3053 = vpack.c.b16 %v2999, %v2997
        %v3054 = vpack.c.b16 %v3002, %v3000
        %v3055 = vpack.c.b16 %v3003, %v3001
        %v3056 = vpack.c.b16 %v3006, %v3004
        %v3057 = vpack.c.b16 %v3007, %v3005
        %v3058 = vpack.c.b16 %v3010, %v3008
        %v3059 = vpack.c.b16 %v3011, %v3009
        %v3060 = vpack.c.b16 %v3014, %v3012
        %v3061 = vpack.c.b16 %v3015, %v3013
        %v3062 = vpack.c.b16 %v3018, %v3016
        %v3063 = vpack.c.b16 %v3019, %v3017
        %v3064 = vpack.c.b16 %v3022, %v3020
        %v3065 = vpack.c.b16 %v3023, %v3021
        %v3066 = vpack.c.b16 %v3026, %v3024
        %v3067 = vpack.c.b16 %v3027, %v3025
        %v3068 = vpack.c.b16 %v3030, %v3028
        %v3069 = vpack.c.b16 %v3031, %v3029
        %v3070 = vpack.c.b16 %v3034, %v3032
        %v3071 = vpack.c.b16 %v3035, %v3033
        %v3072 = vpack.c.b16 %v3038, %v3036
        %v3073 = vpack.c.b16 %v3039, %v3037
        %v3074 = vpack.c.b16 %v3042, %v3040
        %v3075 = vpack.c.b16 %v3043, %v3041
        %3108 = vmatprep.subr.bf16.mxu0 %v3045
        %3109 = vmatpush1.bf16.msra.mxu0 %v3044
        %3110 = vmatprep.subr.bf16.mxu0 %v3047
        %3111 = vmatpush1.bf16.msra.mxu0 %v3046
        %3112 = vmatprep.subr.bf16.mxu0 %v3049
        %3113 = vmatpush1.bf16.msra.mxu0 %v3048
        %3114 = vmatprep.subr.bf16.mxu0 %v3051
        %3115 = vmatpush1.bf16.msra.mxu0 %v3050
        %3116 = vmatprep.subr.bf16.mxu0 %v3053
        %3117 = vmatpush1.bf16.msra.mxu0 %v3052
        %3118 = vmatprep.subr.bf16.mxu0 %v3055
        %3119 = vmatpush1.bf16.msra.mxu0 %v3054
        %3120 = vmatprep.subr.bf16.mxu0 %v3057
        %3121 = vmatpush1.bf16.msra.mxu0 %v3056
        %3122 = vmatprep.subr.bf16.mxu0 %v3059
        %3123 = vmatpush1.bf16.msra.mxu0 %v3058
        %3124 = vmatprep.subr.bf16.mxu0 %v3061
        %3125 = vmatpush1.bf16.msra.mxu0 %v3060
        %3126 = vmatprep.subr.bf16.mxu0 %v3063
        %3127 = vmatpush1.bf16.msra.mxu0 %v3062
        %3128 = vmatprep.subr.bf16.mxu0 %v3065
        %3129 = vmatpush1.bf16.msra.mxu0 %v3064
        %3130 = vmatprep.subr.bf16.mxu0 %v3067
        %3131 = vmatpush1.bf16.msra.mxu0 %v3066
        %3132 = vmatprep.subr.bf16.mxu0 %v3069
        %3133 = vmatpush1.bf16.msra.mxu0 %v3068
        %3134 = vmatprep.subr.bf16.mxu0 %v3071
        %3135 = vmatpush1.bf16.msra.mxu0 %v3070
        %3136 = vmatprep.subr.bf16.mxu0 %v3073
        %3137 = vmatpush1.bf16.msra.mxu0 %v3072
        %3138 = vmatprep.subr.bf16.mxu0 %v3075
        %3139 = vmatpush1.bf16.msra.mxu0 %v3074
        %3140 = vmatprep.mubr.bf16.mxu0 %v2903
        %3141 = vmatmul.mubr.bf16.gmra.mrb[0].mxu0 %v2791
        %v3142 = vpop.f32.mrb[0].mxu0
        %v3143 = vadd.f32 %v2941, %v3142
        %v3144 = vpop.f32.mrb[0].mxu0
        %v3145 = vadd.f32 %v2945, %v3144
        %v3146 = vpop.f32.mrb[0].mxu0
        %v3147 = vadd.f32 %v2941, %v3146
        %v3148 = vpop.f32.mrb[0].mxu0
        %v3149 = vadd.f32 %v2945, %v3148
        %3150 = vdwg.mxu0
        %v3151 = vld [vmem:[%s1024] sm:$0x3]
        %v3153 = vlaneseq
        %v3154 = vshrl.u32 %v3153, 7
        %v3155 = vsub.s32 0, %v3154
        %v3156 = vrot.slane %v3151, %v3155
        %v3157 = vlaneseq
        %v3158 = vshrl.u32 %v3157, 7
        %v3159 = vsub.s32 1, %v3158
        %v3160 = vrot.slane %v3151, %v3159
        %v3163 = vmul.f32 %v3156, %v3143
        %v3164 = vmul.f32 %v3160, %v3145
        %v3165 = vmul.f32 %v3156, %v3147
        %v3166 = vmul.f32 %v3160, %v3149
        %v3167 = vadd.f32 %v1869, %v3163
        %v3168 = vadd.f32 %v1870, %v3164
        %v3169 = vadd.f32 %v1871, %v3165
        %v3170 = vadd.f32 %v1872, %v3166
        %v3171 = vld [vmem:[%s1033] sm:$0x3]
        %v3172 = vld [vmem:[%s1042] sm:$0x3]
        %v3173 = vadd.f32 %v3167, %v3168
        %3174 = vadd.xlane.f32.xlu0 %v3173
        %v3175 = vpop.xlane.xlu0 %3174
        %v3176 = vadd.f32 %v3169, %v3170
        %3177 = vadd.xlane.f32.xlu0 %v3176
        %v3178 = vpop.xlane.xlu0 %3177
        %v3179 = vmul.f32 %v3175, %v1881
        %v3180 = vmul.f32 %v3178, %v1881
        %v3181 = vsub.f32 %v3167, %v3179
        %v3182 = vsub.f32 %v3168, %v3179
        %v3183 = vsub.f32 %v3169, %v3180
        %v3184 = vsub.f32 %v3170, %v3180
        %v3185 = vmul.f32 %v3181, %v3181
        %v3186 = vmul.f32 %v3182, %v3182
        %v3187 = vmul.f32 %v3183, %v3183
        %v3188 = vmul.f32 %v3184, %v3184
        %v3189 = vadd.f32 %v3185, %v3186
        %3190 = vadd.xlane.f32.xlu0 %v3189
        %v3191 = vpop.xlane.xlu0 %3190
        %v3192 = vadd.f32 %v3187, %v3188
        %3193 = vadd.xlane.f32.xlu0 %v3192
        %v3194 = vpop.xlane.xlu0 %3193
        %v3195 = vmul.f32 %v3191, %v1881
        %v3196 = vmul.f32 %v3194, %v1881
        %v3197 = vadd.f32 %v3195, 1e-06
        %v3198 = vadd.f32 %v3196, 1e-06
        %v3199 = vrsqrt.pop %v3197
        %v3200 = vrsqrt.pop %v3198
        %v3201 = vmul.f32 %v3181, %v3199
        %v3202 = vmul.f32 %v3182, %v3199
        %v3203 = vmul.f32 %v3183, %v3200
        %v3204 = vmul.f32 %v3184, %v3200
        %v3206 = vlaneseq
        %v3207 = vshrl.u32 %v3206, 7
        %v3208 = vsub.s32 0, %v3207
        %v3209 = vrot.slane %v3171, %v3208
        %v3210 = vlaneseq
        %v3211 = vshrl.u32 %v3210, 7
        %v3212 = vsub.s32 1, %v3211
        %v3213 = vrot.slane %v3171, %v3212
        %v3216 = vmul.f32 %v3201, %v3209
        %v3217 = vmul.f32 %v3202, %v3213
        %v3218 = vmul.f32 %v3203, %v3209
        %v3219 = vmul.f32 %v3204, %v3213
        %v3221 = vlaneseq
        %v3222 = vshrl.u32 %v3221, 7
        %v3223 = vsub.s32 0, %v3222
        %v3224 = vrot.slane %v3172, %v3223
        %v3225 = vlaneseq
        %v3226 = vshrl.u32 %v3225, 7
        %v3227 = vsub.s32 1, %v3226
        %v3228 = vrot.slane %v3172, %v3227
        %v3231 = vadd.f32 %v3216, %v3224
        %v3232 = vadd.f32 %v3217, %v3228
        %v3233 = vadd.f32 %v3218, %v3224
        %v3234 = vadd.f32 %v3219, %v3228
        %v3235 = vpack.c.bf16 %v3233, %v3231
        %v3236 = vpack.c.bf16 %v3234, %v3232
        %v3237 = vld [vmem:[%s1051] sm:$0xff]
        %v3238 = vld [vmem:[%s1051 + $0x8] sm:$0xff]
        %v3239 = vld [vmem:[%s1051 + $0x10] sm:$0xff]
        %v3240 = vld [vmem:[%s1051 + $0x18] sm:$0xff]
        %v3241 = vld [vmem:[%s1051 + $0x20] sm:$0xff]
        %v3242 = vld [vmem:[%s1051 + $0x28] sm:$0xff]
        %v3243 = vld [vmem:[%s1051 + $0x30] sm:$0xff]
        %v3244 = vld [vmem:[%s1051 + $0x38] sm:$0xff]
        %v3245 = vld [vmem:[%s1051 + $0x40] sm:$0xff]
        %v3246 = vld [vmem:[%s1051 + $0x48] sm:$0xff]
        %v3247 = vld [vmem:[%s1051 + $0x50] sm:$0xff]
        %v3248 = vld [vmem:[%s1051 + $0x58] sm:$0xff]
        %v3249 = vld [vmem:[%s1051 + $0x60] sm:$0xff]
        %v3250 = vld [vmem:[%s1051 + $0x68] sm:$0xff]
        %v3251 = vld [vmem:[%s1051 + $0x70] sm:$0xff]
        %v3252 = vld [vmem:[%s1051 + $0x78] sm:$0xff]
        %v3253 = vld [vmem:[%s1051 + $0x80] sm:$0xff]
        %v3254 = vld [vmem:[%s1051 + $0x88] sm:$0xff]
        %v3255 = vld [vmem:[%s1051 + $0x90] sm:$0xff]
        %v3256 = vld [vmem:[%s1051 + $0x98] sm:$0xff]
        %v3257 = vld [vmem:[%s1051 + $0xa0] sm:$0xff]
        %v3258 = vld [vmem:[%s1051 + $0xa8] sm:$0xff]
        %v3259 = vld [vmem:[%s1051 + $0xb0] sm:$0xff]
        %v3260 = vld [vmem:[%s1051 + $0xb8] sm:$0xff]
        %v3261 = vld [vmem:[%s1051 + $0xc0] sm:$0xff]
        %v3262 = vld [vmem:[%s1051 + $0xc8] sm:$0xff]
        %v3263 = vld [vmem:[%s1051 + $0xd0] sm:$0xff]
        %v3264 = vld [vmem:[%s1051 + $0xd8] sm:$0xff]
        %v3265 = vld [vmem:[%s1051 + $0xe0] sm:$0xff]
        %v3266 = vld [vmem:[%s1051 + $0xe8] sm:$0xff]
        %v3267 = vld [vmem:[%s1051 + $0xf0] sm:$0xff]
        %v3268 = vld [vmem:[%s1051 + $0xf8] sm:$0xff]
        %v3269 = vld [vmem:[%s1051 + $0x100] sm:$0xff]
        %v3270 = vld [vmem:[%s1051 + $0x108] sm:$0xff]
        %v3271 = vld [vmem:[%s1051 + $0x110] sm:$0xff]
        %v3272 = vld [vmem:[%s1051 + $0x118] sm:$0xff]
        %v3273 = vld [vmem:[%s1051 + $0x120] sm:$0xff]
        %v3274 = vld [vmem:[%s1051 + $0x128] sm:$0xff]
        %v3275 = vld [vmem:[%s1051 + $0x130] sm:$0xff]
        %v3276 = vld [vmem:[%s1051 + $0x138] sm:$0xff]
        %v3277 = vld [vmem:[%s1051 + $0x140] sm:$0xff]
        %v3278 = vld [vmem:[%s1051 + $0x148] sm:$0xff]
        %v3279 = vld [vmem:[%s1051 + $0x150] sm:$0xff]
        %v3280 = vld [vmem:[%s1051 + $0x158] sm:$0xff]
        %v3281 = vld [vmem:[%s1051 + $0x160] sm:$0xff]
        %v3282 = vld [vmem:[%s1051 + $0x168] sm:$0xff]
        %v3283 = vld [vmem:[%s1051 + $0x170] sm:$0xff]
        %v3284 = vld [vmem:[%s1051 + $0x178] sm:$0xff]
        %v3285 = vld [vmem:[%s1051 + $0x180] sm:$0xff]
        %v3286 = vld [vmem:[%s1051 + $0x188] sm:$0xff]
        %v3287 = vld [vmem:[%s1051 + $0x190] sm:$0xff]
        %v3288 = vld [vmem:[%s1051 + $0x198] sm:$0xff]
        %v3289 = vld [vmem:[%s1051 + $0x1a0] sm:$0xff]
        %v3290 = vld [vmem:[%s1051 + $0x1a8] sm:$0xff]
        %v3291 = vld [vmem:[%s1051 + $0x1b0] sm:$0xff]
        %v3292 = vld [vmem:[%s1051 + $0x1b8] sm:$0xff]
        %v3293 = vld [vmem:[%s1051 + $0x1c0] sm:$0xff]
        %v3294 = vld [vmem:[%s1051 + $0x1c8] sm:$0xff]
        %v3295 = vld [vmem:[%s1051 + $0x1d0] sm:$0xff]
        %v3296 = vld [vmem:[%s1051 + $0x1d8] sm:$0xff]
        %v3297 = vld [vmem:[%s1051 + $0x1e0] sm:$0xff]
        %v3298 = vld [vmem:[%s1051 + $0x1e8] sm:$0xff]
        %v3299 = vld [vmem:[%s1051 + $0x1f0] sm:$0xff]
        %v3300 = vld [vmem:[%s1051 + $0x1f8] sm:$0xff]
        %v3301 = vld [vmem:[%s1051 + $0x200] sm:$0xff]
        %v3302 = vld [vmem:[%s1051 + $0x208] sm:$0xff]
        %v3303 = vld [vmem:[%s1051 + $0x210] sm:$0xff]
        %v3304 = vld [vmem:[%s1051 + $0x218] sm:$0xff]
        %v3305 = vld [vmem:[%s1051 + $0x220] sm:$0xff]
        %v3306 = vld [vmem:[%s1051 + $0x228] sm:$0xff]
        %v3307 = vld [vmem:[%s1051 + $0x230] sm:$0xff]
        %v3308 = vld [vmem:[%s1051 + $0x238] sm:$0xff]
        %v3309 = vld [vmem:[%s1051 + $0x240] sm:$0xff]
        %v3310 = vld [vmem:[%s1051 + $0x248] sm:$0xff]
        %v3311 = vld [vmem:[%s1051 + $0x250] sm:$0xff]
        %v3312 = vld [vmem:[%s1051 + $0x258] sm:$0xff]
        %v3313 = vld [vmem:[%s1051 + $0x260] sm:$0xff]
        %v3314 = vld [vmem:[%s1051 + $0x268] sm:$0xff]
        %v3315 = vld [vmem:[%s1051 + $0x270] sm:$0xff]
        %v3316 = vld [vmem:[%s1051 + $0x278] sm:$0xff]
        %v3317 = vld [vmem:[%s1051 + $0x280] sm:$0xff]
        %v3318 = vld [vmem:[%s1051 + $0x288] sm:$0xff]
        %v3319 = vld [vmem:[%s1051 + $0x290] sm:$0xff]
        %v3320 = vld [vmem:[%s1051 + $0x298] sm:$0xff]
        %v3321 = vld [vmem:[%s1051 + $0x2a0] sm:$0xff]
        %v3322 = vld [vmem:[%s1051 + $0x2a8] sm:$0xff]
        %v3323 = vld [vmem:[%s1051 + $0x2b0] sm:$0xff]
        %v3324 = vld [vmem:[%s1051 + $0x2b8] sm:$0xff]
        %v3325 = vld [vmem:[%s1051 + $0x2c0] sm:$0xff]
        %v3326 = vld [vmem:[%s1051 + $0x2c8] sm:$0xff]
        %v3327 = vld [vmem:[%s1051 + $0x2d0] sm:$0xff]
        %v3328 = vld [vmem:[%s1051 + $0x2d8] sm:$0xff]
        %v3329 = vld [vmem:[%s1051 + $0x2e0] sm:$0xff]
        %v3330 = vld [vmem:[%s1051 + $0x2e8] sm:$0xff]
        %v3331 = vld [vmem:[%s1051 + $0x2f0] sm:$0xff]
        %v3332 = vld [vmem:[%s1051 + $0x2f8] sm:$0xff]
        %v3333 = vld [vmem:[%s1051 + $0x300] sm:$0xff]
        %v3334 = vld [vmem:[%s1051 + $0x308] sm:$0xff]
        %v3335 = vld [vmem:[%s1051 + $0x310] sm:$0xff]
        %v3336 = vld [vmem:[%s1051 + $0x318] sm:$0xff]
        %v3337 = vld [vmem:[%s1051 + $0x320] sm:$0xff]
        %v3338 = vld [vmem:[%s1051 + $0x328] sm:$0xff]
        %v3339 = vld [vmem:[%s1051 + $0x330] sm:$0xff]
        %v3340 = vld [vmem:[%s1051 + $0x338] sm:$0xff]
        %v3341 = vld [vmem:[%s1051 + $0x340] sm:$0xff]
        %v3342 = vld [vmem:[%s1051 + $0x348] sm:$0xff]
        %v3343 = vld [vmem:[%s1051 + $0x350] sm:$0xff]
        %v3344 = vld [vmem:[%s1051 + $0x358] sm:$0xff]
        %v3345 = vld [vmem:[%s1051 + $0x360] sm:$0xff]
        %v3346 = vld [vmem:[%s1051 + $0x368] sm:$0xff]
        %v3347 = vld [vmem:[%s1051 + $0x370] sm:$0xff]
        %v3348 = vld [vmem:[%s1051 + $0x378] sm:$0xff]
        %v3349 = vld [vmem:[%s1051 + $0x380] sm:$0xff]
        %v3350 = vld [vmem:[%s1051 + $0x388] sm:$0xff]
        %v3351 = vld [vmem:[%s1051 + $0x390] sm:$0xff]
        %v3352 = vld [vmem:[%s1051 + $0x398] sm:$0xff]
        %v3353 = vld [vmem:[%s1051 + $0x3a0] sm:$0xff]
        %v3354 = vld [vmem:[%s1051 + $0x3a8] sm:$0xff]
        %v3355 = vld [vmem:[%s1051 + $0x3b0] sm:$0xff]
        %v3356 = vld [vmem:[%s1051 + $0x3b8] sm:$0xff]
        %v3357 = vld [vmem:[%s1051 + $0x3c0] sm:$0xff]
        %v3358 = vld [vmem:[%s1051 + $0x3c8] sm:$0xff]
        %v3359 = vld [vmem:[%s1051 + $0x3d0] sm:$0xff]
        %v3360 = vld [vmem:[%s1051 + $0x3d8] sm:$0xff]
        %v3361 = vld [vmem:[%s1051 + $0x3e0] sm:$0xff]
        %v3362 = vld [vmem:[%s1051 + $0x3e8] sm:$0xff]
        %v3363 = vld [vmem:[%s1051 + $0x3f0] sm:$0xff]
        %v3364 = vld [vmem:[%s1051 + $0x3f8] sm:$0xff]
        %v3365 = vld [vmem:[%s1060] sm:$0xff]
        %v3367 = vlaneseq
        %v3368 = vshrl.u32 %v3367, 7
        %v3369 = vsub.s32 0, %v3368
        %v3370 = vrot.slane %v3365, %v3369
        %v3371 = vlaneseq
        %v3372 = vshrl.u32 %v3371, 7
        %v3373 = vsub.s32 1, %v3372
        %v3374 = vrot.slane %v3365, %v3373
        %v3375 = vlaneseq
        %v3376 = vshrl.u32 %v3375, 7
        %v3377 = vsub.s32 2, %v3376
        %v3378 = vrot.slane %v3365, %v3377
        %v3379 = vlaneseq
        %v3380 = vshrl.u32 %v3379, 7
        %v3381 = vsub.s32 3, %v3380
        %v3382 = vrot.slane %v3365, %v3381
        %v3383 = vlaneseq
        %v3384 = vshrl.u32 %v3383, 7
        %v3385 = vsub.s32 4, %v3384
        %v3386 = vrot.slane %v3365, %v3385
        %v3387 = vlaneseq
        %v3388 = vshrl.u32 %v3387, 7
        %v3389 = vsub.s32 5, %v3388
        %v3390 = vrot.slane %v3365, %v3389
        %v3391 = vlaneseq
        %v3392 = vshrl.u32 %v3391, 7
        %v3393 = vsub.s32 6, %v3392
        %v3394 = vrot.slane %v3365, %v3393
        %v3395 = vlaneseq
        %v3396 = vshrl.u32 %v3395, 7
        %v3397 = vsub.s32 7, %v3396
        %v3398 = vrot.slane %v3365, %v3397
        %v3535 = vunpack.c.l.b16 %v3237
        %v3536 = vunpack.c.h.b16 %v3237
        %v3537 = vunpack.c.l.b16 %v3238
        %v3538 = vunpack.c.h.b16 %v3238
        %v3539 = vunpack.c.l.b16 %v3239
        %v3540 = vunpack.c.h.b16 %v3239
        %v3541 = vunpack.c.l.b16 %v3240
        %v3542 = vunpack.c.h.b16 %v3240
        %v3543 = vunpack.c.l.b16 %v3241
        %v3544 = vunpack.c.h.b16 %v3241
        %v3545 = vunpack.c.l.b16 %v3242
        %v3546 = vunpack.c.h.b16 %v3242
        %v3547 = vunpack.c.l.b16 %v3243
        %v3548 = vunpack.c.h.b16 %v3243
        %v3549 = vunpack.c.l.b16 %v3244
        %v3550 = vunpack.c.h.b16 %v3244
        %v3551 = vunpack.c.l.b16 %v3245
        %v3552 = vunpack.c.h.b16 %v3245
        %v3553 = vunpack.c.l.b16 %v3246
        %v3554 = vunpack.c.h.b16 %v3246
        %v3555 = vunpack.c.l.b16 %v3247
        %v3556 = vunpack.c.h.b16 %v3247
        %v3557 = vunpack.c.l.b16 %v3248
        %v3558 = vunpack.c.h.b16 %v3248
        %v3559 = vunpack.c.l.b16 %v3249
        %v3560 = vunpack.c.h.b16 %v3249
        %v3561 = vunpack.c.l.b16 %v3250
        %v3562 = vunpack.c.h.b16 %v3250
        %v3563 = vunpack.c.l.b16 %v3251
        %v3564 = vunpack.c.h.b16 %v3251
        %v3565 = vunpack.c.l.b16 %v3252
        %v3566 = vunpack.c.h.b16 %v3252
        %v3567 = vunpack.c.l.b16 %v3253
        %v3568 = vunpack.c.h.b16 %v3253
        %v3569 = vunpack.c.l.b16 %v3254
        %v3570 = vunpack.c.h.b16 %v3254
        %v3571 = vunpack.c.l.b16 %v3255
        %v3572 = vunpack.c.h.b16 %v3255
        %v3573 = vunpack.c.l.b16 %v3256
        %v3574 = vunpack.c.h.b16 %v3256
        %v3575 = vunpack.c.l.b16 %v3257
        %v3576 = vunpack.c.h.b16 %v3257
        %v3577 = vunpack.c.l.b16 %v3258
        %v3578 = vunpack.c.h.b16 %v3258
        %v3579 = vunpack.c.l.b16 %v3259
        %v3580 = vunpack.c.h.b16 %v3259
        %v3581 = vunpack.c.l.b16 %v3260
        %v3582 = vunpack.c.h.b16 %v3260
        %v3583 = vunpack.c.l.b16 %v3261
        %v3584 = vunpack.c.h.b16 %v3261
        %v3585 = vunpack.c.l.b16 %v3262
        %v3586 = vunpack.c.h.b16 %v3262
        %v3587 = vunpack.c.l.b16 %v3263
        %v3588 = vunpack.c.h.b16 %v3263
        %v3589 = vunpack.c.l.b16 %v3264
        %v3590 = vunpack.c.h.b16 %v3264
        %v3591 = vunpack.c.l.b16 %v3265
        %v3592 = vunpack.c.h.b16 %v3265
        %v3593 = vunpack.c.l.b16 %v3266
        %v3594 = vunpack.c.h.b16 %v3266
        %v3595 = vunpack.c.l.b16 %v3267
        %v3596 = vunpack.c.h.b16 %v3267
        %v3597 = vunpack.c.l.b16 %v3268
        %v3598 = vunpack.c.h.b16 %v3268
        %v3599 = vunpack.c.l.b16 %v3269
        %v3600 = vunpack.c.h.b16 %v3269
        %v3601 = vunpack.c.l.b16 %v3270
        %v3602 = vunpack.c.h.b16 %v3270
        %v3603 = vunpack.c.l.b16 %v3271
        %v3604 = vunpack.c.h.b16 %v3271
        %v3605 = vunpack.c.l.b16 %v3272
        %v3606 = vunpack.c.h.b16 %v3272
        %v3607 = vunpack.c.l.b16 %v3273
        %v3608 = vunpack.c.h.b16 %v3273
        %v3609 = vunpack.c.l.b16 %v3274
        %v3610 = vunpack.c.h.b16 %v3274
        %v3611 = vunpack.c.l.b16 %v3275
        %v3612 = vunpack.c.h.b16 %v3275
        %v3613 = vunpack.c.l.b16 %v3276
        %v3614 = vunpack.c.h.b16 %v3276
        %v3615 = vunpack.c.l.b16 %v3277
        %v3616 = vunpack.c.h.b16 %v3277
        %v3617 = vunpack.c.l.b16 %v3278
        %v3618 = vunpack.c.h.b16 %v3278
        %v3619 = vunpack.c.l.b16 %v3279
        %v3620 = vunpack.c.h.b16 %v3279
        %v3621 = vunpack.c.l.b16 %v3280
        %v3622 = vunpack.c.h.b16 %v3280
        %v3623 = vunpack.c.l.b16 %v3281
        %v3624 = vunpack.c.h.b16 %v3281
        %v3625 = vunpack.c.l.b16 %v3282
        %v3626 = vunpack.c.h.b16 %v3282
        %v3627 = vunpack.c.l.b16 %v3283
        %v3628 = vunpack.c.h.b16 %v3283
        %v3629 = vunpack.c.l.b16 %v3284
        %v3630 = vunpack.c.h.b16 %v3284
        %v3631 = vunpack.c.l.b16 %v3285
        %v3632 = vunpack.c.h.b16 %v3285
        %v3633 = vunpack.c.l.b16 %v3286
        %v3634 = vunpack.c.h.b16 %v3286
        %v3635 = vunpack.c.l.b16 %v3287
        %v3636 = vunpack.c.h.b16 %v3287
        %v3637 = vunpack.c.l.b16 %v3288
        %v3638 = vunpack.c.h.b16 %v3288
        %v3639 = vunpack.c.l.b16 %v3289
        %v3640 = vunpack.c.h.b16 %v3289
        %v3641 = vunpack.c.l.b16 %v3290
        %v3642 = vunpack.c.h.b16 %v3290
        %v3643 = vunpack.c.l.b16 %v3291
        %v3644 = vunpack.c.h.b16 %v3291
        %v3645 = vunpack.c.l.b16 %v3292
        %v3646 = vunpack.c.h.b16 %v3292
        %v3647 = vunpack.c.l.b16 %v3293
        %v3648 = vunpack.c.h.b16 %v3293
        %v3649 = vunpack.c.l.b16 %v3294
        %v3650 = vunpack.c.h.b16 %v3294
        %v3651 = vunpack.c.l.b16 %v3295
        %v3652 = vunpack.c.h.b16 %v3295
        %v3653 = vunpack.c.l.b16 %v3296
        %v3654 = vunpack.c.h.b16 %v3296
        %v3655 = vunpack.c.l.b16 %v3297
        %v3656 = vunpack.c.h.b16 %v3297
        %v3657 = vunpack.c.l.b16 %v3298
        %v3658 = vunpack.c.h.b16 %v3298
        %v3659 = vunpack.c.l.b16 %v3299
        %v3660 = vunpack.c.h.b16 %v3299
        %v3661 = vunpack.c.l.b16 %v3300
        %v3662 = vunpack.c.h.b16 %v3300
        %v3663 = vunpack.c.l.b16 %v3301
        %v3664 = vunpack.c.h.b16 %v3301
        %v3665 = vunpack.c.l.b16 %v3302
        %v3666 = vunpack.c.h.b16 %v3302
        %v3667 = vunpack.c.l.b16 %v3303
        %v3668 = vunpack.c.h.b16 %v3303
        %v3669 = vunpack.c.l.b16 %v3304
        %v3670 = vunpack.c.h.b16 %v3304
        %v3671 = vunpack.c.l.b16 %v3305
        %v3672 = vunpack.c.h.b16 %v3305
        %v3673 = vunpack.c.l.b16 %v3306
        %v3674 = vunpack.c.h.b16 %v3306
        %v3675 = vunpack.c.l.b16 %v3307
        %v3676 = vunpack.c.h.b16 %v3307
        %v3677 = vunpack.c.l.b16 %v3308
        %v3678 = vunpack.c.h.b16 %v3308
        %v3679 = vunpack.c.l.b16 %v3309
        %v3680 = vunpack.c.h.b16 %v3309
        %v3681 = vunpack.c.l.b16 %v3310
        %v3682 = vunpack.c.h.b16 %v3310
        %v3683 = vunpack.c.l.b16 %v3311
        %v3684 = vunpack.c.h.b16 %v3311
        %v3685 = vunpack.c.l.b16 %v3312
        %v3686 = vunpack.c.h.b16 %v3312
        %v3687 = vunpack.c.l.b16 %v3313
        %v3688 = vunpack.c.h.b16 %v3313
        %v3689 = vunpack.c.l.b16 %v3314
        %v3690 = vunpack.c.h.b16 %v3314
        %v3691 = vunpack.c.l.b16 %v3315
        %v3692 = vunpack.c.h.b16 %v3315
        %v3693 = vunpack.c.l.b16 %v3316
        %v3694 = vunpack.c.h.b16 %v3316
        %v3695 = vunpack.c.l.b16 %v3317
        %v3696 = vunpack.c.h.b16 %v3317
        %v3697 = vunpack.c.l.b16 %v3318
        %v3698 = vunpack.c.h.b16 %v3318
        %v3699 = vunpack.c.l.b16 %v3319
        %v3700 = vunpack.c.h.b16 %v3319
        %v3701 = vunpack.c.l.b16 %v3320
        %v3702 = vunpack.c.h.b16 %v3320
        %v3703 = vunpack.c.l.b16 %v3321
        %v3704 = vunpack.c.h.b16 %v3321
        %v3705 = vunpack.c.l.b16 %v3322
        %v3706 = vunpack.c.h.b16 %v3322
        %v3707 = vunpack.c.l.b16 %v3323
        %v3708 = vunpack.c.h.b16 %v3323
        %v3709 = vunpack.c.l.b16 %v3324
        %v3710 = vunpack.c.h.b16 %v3324
        %v3711 = vunpack.c.l.b16 %v3325
        %v3712 = vunpack.c.h.b16 %v3325
        %v3713 = vunpack.c.l.b16 %v3326
        %v3714 = vunpack.c.h.b16 %v3326
        %v3715 = vunpack.c.l.b16 %v3327
        %v3716 = vunpack.c.h.b16 %v3327
        %v3717 = vunpack.c.l.b16 %v3328
        %v3718 = vunpack.c.h.b16 %v3328
        %v3719 = vunpack.c.l.b16 %v3329
        %v3720 = vunpack.c.h.b16 %v3329
        %v3721 = vunpack.c.l.b16 %v3330
        %v3722 = vunpack.c.h.b16 %v3330
        %v3723 = vunpack.c.l.b16 %v3331
        %v3724 = vunpack.c.h.b16 %v3331
        %v3725 = vunpack.c.l.b16 %v3332
        %v3726 = vunpack.c.h.b16 %v3332
        %v3727 = vunpack.c.l.b16 %v3333
        %v3728 = vunpack.c.h.b16 %v3333
        %v3729 = vunpack.c.l.b16 %v3334
        %v3730 = vunpack.c.h.b16 %v3334
        %v3731 = vunpack.c.l.b16 %v3335
        %v3732 = vunpack.c.h.b16 %v3335
        %v3733 = vunpack.c.l.b16 %v3336
        %v3734 = vunpack.c.h.b16 %v3336
        %v3735 = vunpack.c.l.b16 %v3337
        %v3736 = vunpack.c.h.b16 %v3337
        %v3737 = vunpack.c.l.b16 %v3338
        %v3738 = vunpack.c.h.b16 %v3338
        %v3739 = vunpack.c.l.b16 %v3339
        %v3740 = vunpack.c.h.b16 %v3339
        %v3741 = vunpack.c.l.b16 %v3340
        %v3742 = vunpack.c.h.b16 %v3340
        %v3743 = vunpack.c.l.b16 %v3341
        %v3744 = vunpack.c.h.b16 %v3341
        %v3745 = vunpack.c.l.b16 %v3342
        %v3746 = vunpack.c.h.b16 %v3342
        %v3747 = vunpack.c.l.b16 %v3343
        %v3748 = vunpack.c.h.b16 %v3343
        %v3749 = vunpack.c.l.b16 %v3344
        %v3750 = vunpack.c.h.b16 %v3344
        %v3751 = vunpack.c.l.b16 %v3345
        %v3752 = vunpack.c.h.b16 %v3345
        %v3753 = vunpack.c.l.b16 %v3346
        %v3754 = vunpack.c.h.b16 %v3346
        %v3755 = vunpack.c.l.b16 %v3347
        %v3756 = vunpack.c.h.b16 %v3347
        %v3757 = vunpack.c.l.b16 %v3348
        %v3758 = vunpack.c.h.b16 %v3348
        %v3759 = vunpack.c.l.b16 %v3349
        %v3760 = vunpack.c.h.b16 %v3349
        %v3761 = vunpack.c.l.b16 %v3350
        %v3762 = vunpack.c.h.b16 %v3350
        %v3763 = vunpack.c.l.b16 %v3351
        %v3764 = vunpack.c.h.b16 %v3351
        %v3765 = vunpack.c.l.b16 %v3352
        %v3766 = vunpack.c.h.b16 %v3352
        %v3767 = vunpack.c.l.b16 %v3353
        %v3768 = vunpack.c.h.b16 %v3353
        %v3769 = vunpack.c.l.b16 %v3354
        %v3770 = vunpack.c.h.b16 %v3354
        %v3771 = vunpack.c.l.b16 %v3355
        %v3772 = vunpack.c.h.b16 %v3355
        %v3773 = vunpack.c.l.b16 %v3356
        %v3774 = vunpack.c.h.b16 %v3356
        %v3775 = vunpack.c.l.b16 %v3357
        %v3776 = vunpack.c.h.b16 %v3357
        %v3777 = vunpack.c.l.b16 %v3358
        %v3778 = vunpack.c.h.b16 %v3358
        %v3779 = vunpack.c.l.b16 %v3359
        %v3780 = vunpack.c.h.b16 %v3359
        %v3781 = vunpack.c.l.b16 %v3360
        %v3782 = vunpack.c.h.b16 %v3360
        %v3783 = vunpack.c.l.b16 %v3361
        %v3784 = vunpack.c.h.b16 %v3361
        %v3785 = vunpack.c.l.b16 %v3362
        %v3786 = vunpack.c.h.b16 %v3362
        %v3787 = vunpack.c.l.b16 %v3363
        %v3788 = vunpack.c.h.b16 %v3363
        %v3789 = vunpack.c.l.b16 %v3364
        %v3790 = vunpack.c.h.b16 %v3364
        %v3791 = vpack.c.b16 %v3543, %v3535
        %v3792 = vpack.c.b16 %v3544, %v3536
        %v3793 = vpack.c.b16 %v3545, %v3537
        %v3794 = vpack.c.b16 %v3546, %v3538
        %v3795 = vpack.c.b16 %v3547, %v3539
        %v3796 = vpack.c.b16 %v3548, %v3540
        %v3797 = vpack.c.b16 %v3549, %v3541
        %v3798 = vpack.c.b16 %v3550, %v3542
        %v3799 = vpack.c.b16 %v3559, %v3551
        %v3800 = vpack.c.b16 %v3560, %v3552
        %v3801 = vpack.c.b16 %v3561, %v3553
        %v3802 = vpack.c.b16 %v3562, %v3554
        %v3803 = vpack.c.b16 %v3563, %v3555
        %v3804 = vpack.c.b16 %v3564, %v3556
        %v3805 = vpack.c.b16 %v3565, %v3557
        %v3806 = vpack.c.b16 %v3566, %v3558
        %v3807 = vpack.c.b16 %v3575, %v3567
        %v3808 = vpack.c.b16 %v3576, %v3568
        %v3809 = vpack.c.b16 %v3577, %v3569
        %v3810 = vpack.c.b16 %v3578, %v3570
        %v3811 = vpack.c.b16 %v3579, %v3571
        %v3812 = vpack.c.b16 %v3580, %v3572
        %v3813 = vpack.c.b16 %v3581, %v3573
        %v3814 = vpack.c.b16 %v3582, %v3574
        %v3815 = vpack.c.b16 %v3591, %v3583
        %v3816 = vpack.c.b16 %v3592, %v3584
        %v3817 = vpack.c.b16 %v3593, %v3585
        %v3818 = vpack.c.b16 %v3594, %v3586
        %v3819 = vpack.c.b16 %v3595, %v3587
        %v3820 = vpack.c.b16 %v3596, %v3588
        %v3821 = vpack.c.b16 %v3597, %v3589
        %v3822 = vpack.c.b16 %v3598, %v3590
        %v3823 = vpack.c.b16 %v3607, %v3599
        %v3824 = vpack.c.b16 %v3608, %v3600
        %v3825 = vpack.c.b16 %v3609, %v3601
        %v3826 = vpack.c.b16 %v3610, %v3602
        %v3827 = vpack.c.b16 %v3611, %v3603
        %v3828 = vpack.c.b16 %v3612, %v3604
        %v3829 = vpack.c.b16 %v3613, %v3605
        %v3830 = vpack.c.b16 %v3614, %v3606
        %v3831 = vpack.c.b16 %v3623, %v3615
        %v3832 = vpack.c.b16 %v3624, %v3616
        %v3833 = vpack.c.b16 %v3625, %v3617
        %v3834 = vpack.c.b16 %v3626, %v3618
        %v3835 = vpack.c.b16 %v3627, %v3619
        %v3836 = vpack.c.b16 %v3628, %v3620
        %v3837 = vpack.c.b16 %v3629, %v3621
        %v3838 = vpack.c.b16 %v3630, %v3622
        %v3839 = vpack.c.b16 %v3639, %v3631
        %v3840 = vpack.c.b16 %v3640, %v3632
        %v3841 = vpack.c.b16 %v3641, %v3633
        %v3842 = vpack.c.b16 %v3642, %v3634
        %v3843 = vpack.c.b16 %v3643, %v3635
        %v3844 = vpack.c.b16 %v3644, %v3636
        %v3845 = vpack.c.b16 %v3645, %v3637
        %v3846 = vpack.c.b16 %v3646, %v3638
        %v3847 = vpack.c.b16 %v3655, %v3647
        %v3848 = vpack.c.b16 %v3656, %v3648
        %v3849 = vpack.c.b16 %v3657, %v3649
        %v3850 = vpack.c.b16 %v3658, %v3650
        %v3851 = vpack.c.b16 %v3659, %v3651
        %v3852 = vpack.c.b16 %v3660, %v3652
        %v3853 = vpack.c.b16 %v3661, %v3653
        %v3854 = vpack.c.b16 %v3662, %v3654
        %v3855 = vpack.c.b16 %v3671, %v3663
        %v3856 = vpack.c.b16 %v3672, %v3664
        %v3857 = vpack.c.b16 %v3673, %v3665
        %v3858 = vpack.c.b16 %v3674, %v3666
        %v3859 = vpack.c.b16 %v3675, %v3667
        %v3860 = vpack.c.b16 %v3676, %v3668
        %v3861 = vpack.c.b16 %v3677, %v3669
        %v3862 = vpack.c.b16 %v3678, %v3670
        %v3863 = vpack.c.b16 %v3687, %v3679
        %v3864 = vpack.c.b16 %v3688, %v3680
        %v3865 = vpack.c.b16 %v3689, %v3681
        %v3866 = vpack.c.b16 %v3690, %v3682
        %v3867 = vpack.c.b16 %v3691, %v3683
        %v3868 = vpack.c.b16 %v3692, %v3684
        %v3869 = vpack.c.b16 %v3693, %v3685
        %v3870 = vpack.c.b16 %v3694, %v3686
        %v3871 = vpack.c.b16 %v3703, %v3695
        %v3872 = vpack.c.b16 %v3704, %v3696
        %v3873 = vpack.c.b16 %v3705, %v3697
        %v3874 = vpack.c.b16 %v3706, %v3698
        %v3875 = vpack.c.b16 %v3707, %v3699
        %v3876 = vpack.c.b16 %v3708, %v3700
        %v3877 = vpack.c.b16 %v3709, %v3701
        %v3878 = vpack.c.b16 %v3710, %v3702
        %v3879 = vpack.c.b16 %v3719, %v3711
        %v3880 = vpack.c.b16 %v3720, %v3712
        %v3881 = vpack.c.b16 %v3721, %v3713
        %v3882 = vpack.c.b16 %v3722, %v3714
        %v3883 = vpack.c.b16 %v3723, %v3715
        %v3884 = vpack.c.b16 %v3724, %v3716
        %v3885 = vpack.c.b16 %v3725, %v3717
        %v3886 = vpack.c.b16 %v3726, %v3718
        %v3887 = vpack.c.b16 %v3735, %v3727
        %v3888 = vpack.c.b16 %v3736, %v3728
        %v3889 = vpack.c.b16 %v3737, %v3729
        %v3890 = vpack.c.b16 %v3738, %v3730
        %v3891 = vpack.c.b16 %v3739, %v3731
        %v3892 = vpack.c.b16 %v3740, %v3732
        %v3893 = vpack.c.b16 %v3741, %v3733
        %v3894 = vpack.c.b16 %v3742, %v3734
        %v3895 = vpack.c.b16 %v3751, %v3743
        %v3896 = vpack.c.b16 %v3752, %v3744
        %v3897 = vpack.c.b16 %v3753, %v3745
        %v3898 = vpack.c.b16 %v3754, %v3746
        %v3899 = vpack.c.b16 %v3755, %v3747
        %v3900 = vpack.c.b16 %v3756, %v3748
        %v3901 = vpack.c.b16 %v3757, %v3749
        %v3902 = vpack.c.b16 %v3758, %v3750
        %v3903 = vpack.c.b16 %v3767, %v3759
        %v3904 = vpack.c.b16 %v3768, %v3760
        %v3905 = vpack.c.b16 %v3769, %v3761
        %v3906 = vpack.c.b16 %v3770, %v3762
        %v3907 = vpack.c.b16 %v3771, %v3763
        %v3908 = vpack.c.b16 %v3772, %v3764
        %v3909 = vpack.c.b16 %v3773, %v3765
        %v3910 = vpack.c.b16 %v3774, %v3766
        %v3911 = vpack.c.b16 %v3783, %v3775
        %v3912 = vpack.c.b16 %v3784, %v3776
        %v3913 = vpack.c.b16 %v3785, %v3777
        %v3914 = vpack.c.b16 %v3786, %v3778
        %v3915 = vpack.c.b16 %v3787, %v3779
        %v3916 = vpack.c.b16 %v3788, %v3780
        %v3917 = vpack.c.b16 %v3789, %v3781
        %v3918 = vpack.c.b16 %v3790, %v3782
        %4047 = vmatprep.subr.bf16.mxu0 %v3792
        %4048 = vmatpush1.bf16.msra.mxu0 %v3791
        %4049 = vmatprep.subr.bf16.mxu0 %v3800
        %4050 = vmatpush1.bf16.msra.mxu0 %v3799
        %4051 = vmatprep.subr.bf16.mxu0 %v3808
        %4052 = vmatpush1.bf16.msra.mxu0 %v3807
        %4053 = vmatprep.subr.bf16.mxu0 %v3816
        %4054 = vmatpush1.bf16.msra.mxu0 %v3815
        %4055 = vmatprep.subr.bf16.mxu0 %v3824
        %4056 = vmatpush1.bf16.msra.mxu0 %v3823
        %4057 = vmatprep.subr.bf16.mxu0 %v3832
        %4058 = vmatpush1.bf16.msra.mxu0 %v3831
        %4059 = vmatprep.subr.bf16.mxu0 %v3840
        %4060 = vmatpush1.bf16.msra.mxu0 %v3839
        %4061 = vmatprep.subr.bf16.mxu0 %v3848
        %4062 = vmatpush1.bf16.msra.mxu0 %v3847
        %4063 = vmatprep.subr.bf16.mxu0 %v3856
        %4064 = vmatpush1.bf16.msra.mxu0 %v3855
        %4065 = vmatprep.subr.bf16.mxu0 %v3864
        %4066 = vmatpush1.bf16.msra.mxu0 %v3863
        %4067 = vmatprep.subr.bf16.mxu0 %v3872
        %4068 = vmatpush1.bf16.msra.mxu0 %v3871
        %4069 = vmatprep.subr.bf16.mxu0 %v3880
        %4070 = vmatpush1.bf16.msra.mxu0 %v3879
        %4071 = vmatprep.subr.bf16.mxu0 %v3888
        %4072 = vmatpush1.bf16.msra.mxu0 %v3887
        %4073 = vmatprep.subr.bf16.mxu0 %v3896
        %4074 = vmatpush1.bf16.msra.mxu0 %v3895
        %4075 = vmatprep.subr.bf16.mxu0 %v3904
        %4076 = vmatpush1.bf16.msra.mxu0 %v3903
        %4077 = vmatprep.subr.bf16.mxu0 %v3912
        %4078 = vmatpush1.bf16.msra.mxu0 %v3911
        %4079 = vmatprep.mubr.bf16.mxu0 %v3236
        %4080 = vmatmul.mubr.bf16.gmra.mrb[0].mxu0 %v3235
        %v4081 = vpop.f32.mrb[0].mxu0
        %v4082 = vadd.f32 %v3370, %v4081
        %v4083 = vpop.f32.mrb[0].mxu0
        %v4084 = vadd.f32 %v3374, %v4083
        %v4085 = vpop.f32.mrb[0].mxu0
        %v4086 = vadd.f32 %v3370, %v4085
        %v4087 = vpop.f32.mrb[0].mxu0
        %v4088 = vadd.f32 %v3374, %v4087
        %4089 = vdwg.mxu0
        %4090 = vmatprep.subr.bf16.mxu0 %v3794
        %4091 = vmatpush1.bf16.msra.mxu0 %v3793
        %4092 = vmatprep.subr.bf16.mxu0 %v3802
        %4093 = vmatpush1.bf16.msra.mxu0 %v3801
        %4094 = vmatprep.subr.bf16.mxu0 %v3810
        %4095 = vmatpush1.bf16.msra.mxu0 %v3809
        %4096 = vmatprep.subr.bf16.mxu0 %v3818
        %4097 = vmatpush1.bf16.msra.mxu0 %v3817
        %4098 = vmatprep.subr.bf16.mxu0 %v3826
        %4099 = vmatpush1.bf16.msra.mxu0 %v3825
        %4100 = vmatprep.subr.bf16.mxu0 %v3834
        %4101 = vmatpush1.bf16.msra.mxu0 %v3833
        %4102 = vmatprep.subr.bf16.mxu0 %v3842
        %4103 = vmatpush1.bf16.msra.mxu0 %v3841
        %4104 = vmatprep.subr.bf16.mxu0 %v3850
        %4105 = vmatpush1.bf16.msra.mxu0 %v3849
        %4106 = vmatprep.subr.bf16.mxu0 %v3858
        %4107 = vmatpush1.bf16.msra.mxu0 %v3857
        %4108 = vmatprep.subr.bf16.mxu0 %v3866
        %4109 = vmatpush1.bf16.msra.mxu0 %v3865
        %4110 = vmatprep.subr.bf16.mxu0 %v3874
        %4111 = vmatpush1.bf16.msra.mxu0 %v3873
        %4112 = vmatprep.subr.bf16.mxu0 %v3882
        %4113 = vmatpush1.bf16.msra.mxu0 %v3881
        %4114 = vmatprep.subr.bf16.mxu0 %v3890
        %4115 = vmatpush1.bf16.msra.mxu0 %v3889
        %4116 = vmatprep.subr.bf16.mxu0 %v3898
        %4117 = vmatpush1.bf16.msra.mxu0 %v3897
        %4118 = vmatprep.subr.bf16.mxu0 %v3906
        %4119 = vmatpush1.bf16.msra.mxu0 %v3905
        %4120 = vmatprep.subr.bf16.mxu0 %v3914
        %4121 = vmatpush1.bf16.msra.mxu0 %v3913
        %4122 = vmatprep.mubr.bf16.mxu0 %v3236
        %4123 = vmatmul.mubr.bf16.gmra.mrb[0].mxu0 %v3235
        %v4124 = vpop.f32.mrb[0].mxu0
        %v4125 = vadd.f32 %v3378, %v4124
        %v4126 = vpop.f32.mrb[0].mxu0
        %v4127 = vadd.f32 %v3382, %v4126
        %v4128 = vpop.f32.mrb[0].mxu0
        %v4129 = vadd.f32 %v3378, %v4128
        %v4130 = vpop.f32.mrb[0].mxu0
        %v4131 = vadd.f32 %v3382, %v4130
        %4132 = vdwg.mxu0
        %4133 = vmatprep.subr.bf16.mxu0 %v3796
        %4134 = vmatpush1.bf16.msra.mxu0 %v3795
        %4135 = vmatprep.subr.bf16.mxu0 %v3804
        %4136 = vmatpush1.bf16.msra.mxu0 %v3803
        %4137 = vmatprep.subr.bf16.mxu0 %v3812
        %4138 = vmatpush1.bf16.msra.mxu0 %v3811
        %4139 = vmatprep.subr.bf16.mxu0 %v3820
        %4140 = vmatpush1.bf16.msra.mxu0 %v3819
        %4141 = vmatprep.subr.bf16.mxu0 %v3828
        %4142 = vmatpush1.bf16.msra.mxu0 %v3827
        %4143 = vmatprep.subr.bf16.mxu0 %v3836
        %4144 = vmatpush1.bf16.msra.mxu0 %v3835
        %4145 = vmatprep.subr.bf16.mxu0 %v3844
        %4146 = vmatpush1.bf16.msra.mxu0 %v3843
        %4147 = vmatprep.subr.bf16.mxu0 %v3852
        %4148 = vmatpush1.bf16.msra.mxu0 %v3851
        %4149 = vmatprep.subr.bf16.mxu0 %v3860
        %4150 = vmatpush1.bf16.msra.mxu0 %v3859
        %4151 = vmatprep.subr.bf16.mxu0 %v3868
        %4152 = vmatpush1.bf16.msra.mxu0 %v3867
        %4153 = vmatprep.subr.bf16.mxu0 %v3876
        %4154 = vmatpush1.bf16.msra.mxu0 %v3875
        %4155 = vmatprep.subr.bf16.mxu0 %v3884
        %4156 = vmatpush1.bf16.msra.mxu0 %v3883
        %4157 = vmatprep.subr.bf16.mxu0 %v3892
        %4158 = vmatpush1.bf16.msra.mxu0 %v3891
        %4159 = vmatprep.subr.bf16.mxu0 %v3900
        %4160 = vmatpush1.bf16.msra.mxu0 %v3899
        %4161 = vmatprep.subr.bf16.mxu0 %v3908
        %4162 = vmatpush1.bf16.msra.mxu0 %v3907
        %4163 = vmatprep.subr.bf16.mxu0 %v3916
        %4164 = vmatpush1.bf16.msra.mxu0 %v3915
        %4165 = vmatprep.mubr.bf16.mxu0 %v3236
        %4166 = vmatmul.mubr.bf16.gmra.mrb[0].mxu0 %v3235
        %v4167 = vpop.f32.mrb[0].mxu0
        %v4168 = vadd.f32 %v3386, %v4167
        %v4169 = vpop.f32.mrb[0].mxu0
        %v4170 = vadd.f32 %v3390, %v4169
        %v4171 = vpop.f32.mrb[0].mxu0
        %v4172 = vadd.f32 %v3386, %v4171
        %v4173 = vpop.f32.mrb[0].mxu0
        %v4174 = vadd.f32 %v3390, %v4173
        %4175 = vdwg.mxu0
        %4176 = vmatprep.subr.bf16.mxu0 %v3798
        %4177 = vmatpush1.bf16.msra.mxu0 %v3797
        %4178 = vmatprep.subr.bf16.mxu0 %v3806
        %4179 = vmatpush1.bf16.msra.mxu0 %v3805
        %4180 = vmatprep.subr.bf16.mxu0 %v3814
        %4181 = vmatpush1.bf16.msra.mxu0 %v3813
        %4182 = vmatprep.subr.bf16.mxu0 %v3822
        %4183 = vmatpush1.bf16.msra.mxu0 %v3821
        %4184 = vmatprep.subr.bf16.mxu0 %v3830
        %4185 = vmatpush1.bf16.msra.mxu0 %v3829
        %4186 = vmatprep.subr.bf16.mxu0 %v3838
        %4187 = vmatpush1.bf16.msra.mxu0 %v3837
        %4188 = vmatprep.subr.bf16.mxu0 %v3846
        %4189 = vmatpush1.bf16.msra.mxu0 %v3845
        %4190 = vmatprep.subr.bf16.mxu0 %v3854
        %4191 = vmatpush1.bf16.msra.mxu0 %v3853
        %4192 = vmatprep.subr.bf16.mxu0 %v3862
        %4193 = vmatpush1.bf16.msra.mxu0 %v3861
        %4194 = vmatprep.subr.bf16.mxu0 %v3870
        %4195 = vmatpush1.bf16.msra.mxu0 %v3869
        %4196 = vmatprep.subr.bf16.mxu0 %v3878
        %4197 = vmatpush1.bf16.msra.mxu0 %v3877
        %4198 = vmatprep.subr.bf16.mxu0 %v3886
        %4199 = vmatpush1.bf16.msra.mxu0 %v3885
        %4200 = vmatprep.subr.bf16.mxu0 %v3894
        %4201 = vmatpush1.bf16.msra.mxu0 %v3893
        %4202 = vmatprep.subr.bf16.mxu0 %v3902
        %4203 = vmatpush1.bf16.msra.mxu0 %v3901
        %4204 = vmatprep.subr.bf16.mxu0 %v3910
        %4205 = vmatpush1.bf16.msra.mxu0 %v3909
        %4206 = vmatprep.subr.bf16.mxu0 %v3918
        %4207 = vmatpush1.bf16.msra.mxu0 %v3917
        %4208 = vmatprep.mubr.bf16.mxu0 %v3236
        %4209 = vmatmul.mubr.bf16.gmra.mrb[0].mxu0 %v3235
        %v4210 = vpop.f32.mrb[0].mxu0
        %v4211 = vadd.f32 %v3394, %v4210
        %v4212 = vpop.f32.mrb[0].mxu0
        %v4213 = vadd.f32 %v3398, %v4212
        %v4214 = vpop.f32.mrb[0].mxu0
        %v4215 = vadd.f32 %v3394, %v4214
        %v4216 = vpop.f32.mrb[0].mxu0
        %v4217 = vadd.f32 %v3398, %v4216
        %4218 = vdwg.mxu0
        %v4219 = vmul.f32 %v4082, 0.5
        %v4220 = vmul.f32 %v4084, 0.5
        %v4221 = vmul.f32 %v4125, 0.5
        %v4222 = vmul.f32 %v4127, 0.5
        %v4223 = vmul.f32 %v4168, 0.5
        %v4224 = vmul.f32 %v4170, 0.5
        %v4225 = vmul.f32 %v4211, 0.5
        %v4226 = vmul.f32 %v4213, 0.5
        %v4227 = vmul.f32 %v4086, 0.5
        %v4228 = vmul.f32 %v4088, 0.5
        %v4229 = vmul.f32 %v4129, 0.5
        %v4230 = vmul.f32 %v4131, 0.5
        %v4231 = vmul.f32 %v4172, 0.5
        %v4232 = vmul.f32 %v4174, 0.5
        %v4233 = vmul.f32 %v4215, 0.5
        %v4234 = vmul.f32 %v4217, 0.5
        %v4235 = vmul.f32 %v4082, 0.70710677
        %v4236 = vmul.f32 %v4084, 0.70710677
        %v4237 = vmul.f32 %v4125, 0.70710677
        %v4238 = vmul.f32 %v4127, 0.70710677
        %v4239 = vmul.f32 %v4168, 0.70710677
        %v4240 = vmul.f32 %v4170, 0.70710677
        %v4241 = vmul.f32 %v4211, 0.70710677
        %v4242 = vmul.f32 %v4213, 0.70710677
        %v4243 = vmul.f32 %v4086, 0.70710677
        %v4244 = vmul.f32 %v4088, 0.70710677
        %v4245 = vmul.f32 %v4129, 0.70710677
        %v4246 = vmul.f32 %v4131, 0.70710677
        %v4247 = vmul.f32 %v4172, 0.70710677
        %v4248 = vmul.f32 %v4174, 0.70710677
        %v4249 = vmul.f32 %v4215, 0.70710677
        %v4250 = vmul.f32 %v4217, 0.70710677
        %v4251 = vand.u32 2147483647, %v4235
        %v4252 = vand.u32 2147483647, %v4236
        %v4253 = vand.u32 2147483647, %v4237
        %v4254 = vand.u32 2147483647, %v4238
        %v4255 = vand.u32 2147483647, %v4239
        %v4256 = vand.u32 2147483647, %v4240
        %v4257 = vand.u32 2147483647, %v4241
        %v4258 = vand.u32 2147483647, %v4242
        %v4259 = vand.u32 2147483647, %v4243
        %v4260 = vand.u32 2147483647, %v4244
        %v4261 = vand.u32 2147483647, %v4245
        %v4262 = vand.u32 2147483647, %v4246
        %v4263 = vand.u32 2147483647, %v4247
        %v4264 = vand.u32 2147483647, %v4248
        %v4265 = vand.u32 2147483647, %v4249
        %v4266 = vand.u32 2147483647, %v4250
        %v4267 = vmul.f32 %v4251, 0.3275911
        %v4268 = vmul.f32 %v4252, 0.3275911
        %v4269 = vmul.f32 %v4253, 0.3275911
        %v4270 = vmul.f32 %v4254, 0.3275911
        %v4271 = vmul.f32 %v4255, 0.3275911
        %v4272 = vmul.f32 %v4256, 0.3275911
        %v4273 = vmul.f32 %v4257, 0.3275911
        %v4274 = vmul.f32 %v4258, 0.3275911
        %v4275 = vmul.f32 %v4259, 0.3275911
        %v4276 = vmul.f32 %v4260, 0.3275911
        %v4277 = vmul.f32 %v4261, 0.3275911
        %v4278 = vmul.f32 %v4262, 0.3275911
        %v4279 = vmul.f32 %v4263, 0.3275911
        %v4280 = vmul.f32 %v4264, 0.3275911
        %v4281 = vmul.f32 %v4265, 0.3275911
        %v4282 = vmul.f32 %v4266, 0.3275911
        %v4283 = vadd.f32 %v4267, 1.0
        %v4284 = vadd.f32 %v4268, 1.0
        %v4285 = vadd.f32 %v4269, 1.0
        %v4286 = vadd.f32 %v4270, 1.0
        %v4287 = vadd.f32 %v4271, 1.0
        %v4288 = vadd.f32 %v4272, 1.0
        %v4289 = vadd.f32 %v4273, 1.0
        %v4290 = vadd.f32 %v4274, 1.0
        %v4291 = vadd.f32 %v4275, 1.0
        %v4292 = vadd.f32 %v4276, 1.0
        %v4293 = vadd.f32 %v4277, 1.0
        %v4294 = vadd.f32 %v4278, 1.0
        %v4295 = vadd.f32 %v4279, 1.0
        %v4296 = vadd.f32 %v4280, 1.0
        %v4297 = vadd.f32 %v4281, 1.0
        %v4298 = vadd.f32 %v4282, 1.0
        %v4299 = vrcp.pop %v4283
        %v4300 = vmul.f32 1.0, %v4299
        %v4301 = vrcp.pop %v4284
        %v4302 = vmul.f32 1.0, %v4301
        %v4303 = vrcp.pop %v4285
        %v4304 = vmul.f32 1.0, %v4303
        %v4305 = vrcp.pop %v4286
        %v4306 = vmul.f32 1.0, %v4305
        %v4307 = vrcp.pop %v4287
        %v4308 = vmul.f32 1.0, %v4307
        %v4309 = vrcp.pop %v4288
        %v4310 = vmul.f32 1.0, %v4309
        %v4311 = vrcp.pop %v4289
        %v4312 = vmul.f32 1.0, %v4311
        %v4313 = vrcp.pop %v4290
        %v4314 = vmul.f32 1.0, %v4313
        %v4315 = vrcp.pop %v4291
        %v4316 = vmul.f32 1.0, %v4315
        %v4317 = vrcp.pop %v4292
        %v4318 = vmul.f32 1.0, %v4317
        %v4319 = vrcp.pop %v4293
        %v4320 = vmul.f32 1.0, %v4319
        %v4321 = vrcp.pop %v4294
        %v4322 = vmul.f32 1.0, %v4321
        %v4323 = vrcp.pop %v4295
        %v4324 = vmul.f32 1.0, %v4323
        %v4325 = vrcp.pop %v4296
        %v4326 = vmul.f32 1.0, %v4325
        %v4327 = vrcp.pop %v4297
        %v4328 = vmul.f32 1.0, %v4327
        %v4329 = vrcp.pop %v4298
        %v4330 = vmul.f32 1.0, %v4329
        %v4331 = vmul.f32 %v4300, 1.0614054
        %v4332 = vmul.f32 %v4302, 1.0614054
        %v4333 = vmul.f32 %v4304, 1.0614054
        %v4334 = vmul.f32 %v4306, 1.0614054
        %v4335 = vmul.f32 %v4308, 1.0614054
        %v4336 = vmul.f32 %v4310, 1.0614054
        %v4337 = vmul.f32 %v4312, 1.0614054
        %v4338 = vmul.f32 %v4314, 1.0614054
        %v4339 = vmul.f32 %v4316, 1.0614054
        %v4340 = vmul.f32 %v4318, 1.0614054
        %v4341 = vmul.f32 %v4320, 1.0614054
        %v4342 = vmul.f32 %v4322, 1.0614054
        %v4343 = vmul.f32 %v4324, 1.0614054
        %v4344 = vmul.f32 %v4326, 1.0614054
        %v4345 = vmul.f32 %v4328, 1.0614054
        %v4346 = vmul.f32 %v4330, 1.0614054
        %v4347 = vadd.f32 %v4331, -1.4531521
        %v4348 = vadd.f32 %v4332, -1.4531521
        %v4349 = vadd.f32 %v4333, -1.4531521
        %v4350 = vadd.f32 %v4334, -1.4531521
        %v4351 = vadd.f32 %v4335, -1.4531521
        %v4352 = vadd.f32 %v4336, -1.4531521
        %v4353 = vadd.f32 %v4337, -1.4531521
        %v4354 = vadd.f32 %v4338, -1.4531521
        %v4355 = vadd.f32 %v4339, -1.4531521
        %v4356 = vadd.f32 %v4340, -1.4531521
        %v4357 = vadd.f32 %v4341, -1.4531521
        %v4358 = vadd.f32 %v4342, -1.4531521
        %v4359 = vadd.f32 %v4343, -1.4531521
        %v4360 = vadd.f32 %v4344, -1.4531521
        %v4361 = vadd.f32 %v4345, -1.4531521
        %v4362 = vadd.f32 %v4346, -1.4531521
        %v4363 = vmul.f32 %v4347, %v4300
        %v4364 = vmul.f32 %v4348, %v4302
        %v4365 = vmul.f32 %v4349, %v4304
        %v4366 = vmul.f32 %v4350, %v4306
        %v4367 = vmul.f32 %v4351, %v4308
        %v4368 = vmul.f32 %v4352, %v4310
        %v4369 = vmul.f32 %v4353, %v4312
        %v4370 = vmul.f32 %v4354, %v4314
        %v4371 = vmul.f32 %v4355, %v4316
        %v4372 = vmul.f32 %v4356, %v4318
        %v4373 = vmul.f32 %v4357, %v4320
        %v4374 = vmul.f32 %v4358, %v4322
        %v4375 = vmul.f32 %v4359, %v4324
        %v4376 = vmul.f32 %v4360, %v4326
        %v4377 = vmul.f32 %v4361, %v4328
        %v4378 = vmul.f32 %v4362, %v4330
        %v4379 = vadd.f32 %v4363, 1.4214138
        %v4380 = vadd.f32 %v4364, 1.4214138
        %v4381 = vadd.f32 %v4365, 1.4214138
        %v4382 = vadd.f32 %v4366, 1.4214138
        %v4383 = vadd.f32 %v4367, 1.4214138
        %v4384 = vadd.f32 %v4368, 1.4214138
        %v4385 = vadd.f32 %v4369, 1.4214138
        %v4386 = vadd.f32 %v4370, 1.4214138
        %v4387 = vadd.f32 %v4371, 1.4214138
        %v4388 = vadd.f32 %v4372, 1.4214138
        %v4389 = vadd.f32 %v4373, 1.4214138
        %v4390 = vadd.f32 %v4374, 1.4214138
        %v4391 = vadd.f32 %v4375, 1.4214138
        %v4392 = vadd.f32 %v4376, 1.4214138
        %v4393 = vadd.f32 %v4377, 1.4214138
        %v4394 = vadd.f32 %v4378, 1.4214138
        %v4395 = vmul.f32 %v4379, %v4300
        %v4396 = vmul.f32 %v4380, %v4302
        %v4397 = vmul.f32 %v4381, %v4304
        %v4398 = vmul.f32 %v4382, %v4306
        %v4399 = vmul.f32 %v4383, %v4308
        %v4400 = vmul.f32 %v4384, %v4310
        %v4401 = vmul.f32 %v4385, %v4312
        %v4402 = vmul.f32 %v4386, %v4314
        %v4403 = vmul.f32 %v4387, %v4316
        %v4404 = vmul.f32 %v4388, %v4318
        %v4405 = vmul.f32 %v4389, %v4320
        %v4406 = vmul.f32 %v4390, %v4322
        %v4407 = vmul.f32 %v4391, %v4324
        %v4408 = vmul.f32 %v4392, %v4326
        %v4409 = vmul.f32 %v4393, %v4328
        %v4410 = vmul.f32 %v4394, %v4330
        %v4411 = vadd.f32 %v4395, -0.28449672
        %v4412 = vadd.f32 %v4396, -0.28449672
        %v4413 = vadd.f32 %v4397, -0.28449672
        %v4414 = vadd.f32 %v4398, -0.28449672
        %v4415 = vadd.f32 %v4399, -0.28449672
        %v4416 = vadd.f32 %v4400, -0.28449672
        %v4417 = vadd.f32 %v4401, -0.28449672
        %v4418 = vadd.f32 %v4402, -0.28449672
        %v4419 = vadd.f32 %v4403, -0.28449672
        %v4420 = vadd.f32 %v4404, -0.28449672
        %v4421 = vadd.f32 %v4405, -0.28449672
        %v4422 = vadd.f32 %v4406, -0.28449672
        %v4423 = vadd.f32 %v4407, -0.28449672
        %v4424 = vadd.f32 %v4408, -0.28449672
        %v4425 = vadd.f32 %v4409, -0.28449672
        %v4426 = vadd.f32 %v4410, -0.28449672
        %v4427 = vmul.f32 %v4411, %v4300
        %v4428 = vmul.f32 %v4412, %v4302
        %v4429 = vmul.f32 %v4413, %v4304
        %v4430 = vmul.f32 %v4414, %v4306
        %v4431 = vmul.f32 %v4415, %v4308
        %v4432 = vmul.f32 %v4416, %v4310
        %v4433 = vmul.f32 %v4417, %v4312
        %v4434 = vmul.f32 %v4418, %v4314
        %v4435 = vmul.f32 %v4419, %v4316
        %v4436 = vmul.f32 %v4420, %v4318
        %v4437 = vmul.f32 %v4421, %v4320
        %v4438 = vmul.f32 %v4422, %v4322
        %v4439 = vmul.f32 %v4423, %v4324
        %v4440 = vmul.f32 %v4424, %v4326
        %v4441 = vmul.f32 %v4425, %v4328
        %v4442 = vmul.f32 %v4426, %v4330
        %v4443 = vadd.f32 %v4427, 0.2548296
        %v4444 = vadd.f32 %v4428, 0.2548296
        %v4445 = vadd.f32 %v4429, 0.2548296
        %v4446 = vadd.f32 %v4430, 0.2548296
        %v4447 = vadd.f32 %v4431, 0.2548296
        %v4448 = vadd.f32 %v4432, 0.2548296
        %v4449 = vadd.f32 %v4433, 0.2548296
        %v4450 = vadd.f32 %v4434, 0.2548296
        %v4451 = vadd.f32 %v4435, 0.2548296
        %v4452 = vadd.f32 %v4436, 0.2548296
        %v4453 = vadd.f32 %v4437, 0.2548296
        %v4454 = vadd.f32 %v4438, 0.2548296
        %v4455 = vadd.f32 %v4439, 0.2548296
        %v4456 = vadd.f32 %v4440, 0.2548296
        %v4457 = vadd.f32 %v4441, 0.2548296
        %v4458 = vadd.f32 %v4442, 0.2548296
        %v4459 = vmul.f32 %v4443, %v4300
        %v4460 = vmul.f32 %v4444, %v4302
        %v4461 = vmul.f32 %v4445, %v4304
        %v4462 = vmul.f32 %v4446, %v4306
        %v4463 = vmul.f32 %v4447, %v4308
        %v4464 = vmul.f32 %v4448, %v4310
        %v4465 = vmul.f32 %v4449, %v4312
        %v4466 = vmul.f32 %v4450, %v4314
        %v4467 = vmul.f32 %v4451, %v4316
        %v4468 = vmul.f32 %v4452, %v4318
        %v4469 = vmul.f32 %v4453, %v4320
        %v4470 = vmul.f32 %v4454, %v4322
        %v4471 = vmul.f32 %v4455, %v4324
        %v4472 = vmul.f32 %v4456, %v4326
        %v4473 = vmul.f32 %v4457, %v4328
        %v4474 = vmul.f32 %v4458, %v4330
        %v4475 = vsub.f32 0.0, %v4251
        %v4476 = vsub.f32 0.0, %v4252
        %v4477 = vsub.f32 0.0, %v4253
        %v4478 = vsub.f32 0.0, %v4254
        %v4479 = vsub.f32 0.0, %v4255
        %v4480 = vsub.f32 0.0, %v4256
        %v4481 = vsub.f32 0.0, %v4257
        %v4482 = vsub.f32 0.0, %v4258
        %v4483 = vsub.f32 0.0, %v4259
        %v4484 = vsub.f32 0.0, %v4260
        %v4485 = vsub.f32 0.0, %v4261
        %v4486 = vsub.f32 0.0, %v4262
        %v4487 = vsub.f32 0.0, %v4263
        %v4488 = vsub.f32 0.0, %v4264
        %v4489 = vsub.f32 0.0, %v4265
        %v4490 = vsub.f32 0.0, %v4266
        %v4491 = vmul.f32 %v4475, %v4251
        %v4492 = vmul.f32 %v4476, %v4252
        %v4493 = vmul.f32 %v4477, %v4253
        %v4494 = vmul.f32 %v4478, %v4254
        %v4495 = vmul.f32 %v4479, %v4255
        %v4496 = vmul.f32 %v4480, %v4256
        %v4497 = vmul.f32 %v4481, %v4257
        %v4498 = vmul.f32 %v4482, %v4258
        %v4499 = vmul.f32 %v4483, %v4259
        %v4500 = vmul.f32 %v4484, %v4260
        %v4501 = vmul.f32 %v4485, %v4261
        %v4502 = vmul.f32 %v4486, %v4262
        %v4503 = vmul.f32 %v4487, %v4263
        %v4504 = vmul.f32 %v4488, %v4264
        %v4505 = vmul.f32 %v4489, %v4265
        %v4506 = vmul.f32 %v4490, %v4266
        %v4507 = vmul.f32 %v4491, 1.442695
        %v4508 = vpow.pop %v4507
        %v4509 = vmul.f32 %v4492, 1.442695
        %v4510 = vpow.pop %v4509
        %v4511 = vmul.f32 %v4493, 1.442695
        %v4512 = vpow.pop %v4511
        %v4513 = vmul.f32 %v4494, 1.442695
        %v4514 = vpow.pop %v4513
        %v4515 = vmul.f32 %v4495, 1.442695
        %v4516 = vpow.pop %v4515
        %v4517 = vmul.f32 %v4496, 1.442695
        %v4518 = vpow.pop %v4517
        %v4519 = vmul.f32 %v4497, 1.442695
        %v4520 = vpow.pop %v4519
        %v4521 = vmul.f32 %v4498, 1.442695
        %v4522 = vpow.pop %v4521
        %v4523 = vmul.f32 %v4499, 1.442695
        %v4524 = vpow.pop %v4523
        %v4525 = vmul.f32 %v4500, 1.442695
        %v4526 = vpow.pop %v4525
        %v4527 = vmul.f32 %v4501, 1.442695
        %v4528 = vpow.pop %v4527
        %v4529 = vmul.f32 %v4502, 1.442695
        %v4530 = vpow.pop %v4529
        %v4531 = vmul.f32 %v4503, 1.442695
        %v4532 = vpow.pop %v4531
        %v4533 = vmul.f32 %v4504, 1.442695
        %v4534 = vpow.pop %v4533
        %v4535 = vmul.f32 %v4505, 1.442695
        %v4536 = vpow.pop %v4535
        %v4537 = vmul.f32 %v4506, 1.442695
        %v4538 = vpow.pop %v4537
        %v4539 = vmul.f32 %v4459, %v4508
        %v4540 = vmul.f32 %v4460, %v4510
        %v4541 = vmul.f32 %v4461, %v4512
        %v4542 = vmul.f32 %v4462, %v4514
        %v4543 = vmul.f32 %v4463, %v4516
        %v4544 = vmul.f32 %v4464, %v4518
        %v4545 = vmul.f32 %v4465, %v4520
        %v4546 = vmul.f32 %v4466, %v4522
        %v4547 = vmul.f32 %v4467, %v4524
        %v4548 = vmul.f32 %v4468, %v4526
        %v4549 = vmul.f32 %v4469, %v4528
        %v4550 = vmul.f32 %v4470, %v4530
        %v4551 = vmul.f32 %v4471, %v4532
        %v4552 = vmul.f32 %v4472, %v4534
        %v4553 = vmul.f32 %v4473, %v4536
        %v4554 = vmul.f32 %v4474, %v4538
        %v4555 = vsub.f32 1.0, %v4539
        %v4556 = vsub.f32 1.0, %v4540
        %v4557 = vsub.f32 1.0, %v4541
        %v4558 = vsub.f32 1.0, %v4542
        %v4559 = vsub.f32 1.0, %v4543
        %v4560 = vsub.f32 1.0, %v4544
        %v4561 = vsub.f32 1.0, %v4545
        %v4562 = vsub.f32 1.0, %v4546
        %v4563 = vsub.f32 1.0, %v4547
        %v4564 = vsub.f32 1.0, %v4548
        %v4565 = vsub.f32 1.0, %v4549
        %v4566 = vsub.f32 1.0, %v4550
        %v4567 = vsub.f32 1.0, %v4551
        %v4568 = vsub.f32 1.0, %v4552
        %v4569 = vsub.f32 1.0, %v4553
        %v4570 = vsub.f32 1.0, %v4554
        %vm4571 = vcmp.ge.f32.partialorder %v4235, 0.0
        %vm4572 = vcmp.ge.f32.partialorder %v4236, 0.0
        %vm4573 = vcmp.ge.f32.partialorder %v4237, 0.0
        %vm4574 = vcmp.ge.f32.partialorder %v4238, 0.0
        %vm4575 = vcmp.ge.f32.partialorder %v4239, 0.0
        %vm4576 = vcmp.ge.f32.partialorder %v4240, 0.0
        %vm4577 = vcmp.ge.f32.partialorder %v4241, 0.0
        %vm4578 = vcmp.ge.f32.partialorder %v4242, 0.0
        %vm4579 = vcmp.ge.f32.partialorder %v4243, 0.0
        %vm4580 = vcmp.ge.f32.partialorder %v4244, 0.0
        %vm4581 = vcmp.ge.f32.partialorder %v4245, 0.0
        %vm4582 = vcmp.ge.f32.partialorder %v4246, 0.0
        %vm4583 = vcmp.ge.f32.partialorder %v4247, 0.0
        %vm4584 = vcmp.ge.f32.partialorder %v4248, 0.0
        %vm4585 = vcmp.ge.f32.partialorder %v4249, 0.0
        %vm4586 = vcmp.ge.f32.partialorder %v4250, 0.0
        %v4587 = vsub.f32 0.0, %v4555
        %v4588 = vsub.f32 0.0, %v4556
        %v4589 = vsub.f32 0.0, %v4557
        %v4590 = vsub.f32 0.0, %v4558
        %v4591 = vsub.f32 0.0, %v4559
        %v4592 = vsub.f32 0.0, %v4560
        %v4593 = vsub.f32 0.0, %v4561
        %v4594 = vsub.f32 0.0, %v4562
        %v4595 = vsub.f32 0.0, %v4563
        %v4596 = vsub.f32 0.0, %v4564
        %v4597 = vsub.f32 0.0, %v4565
        %v4598 = vsub.f32 0.0, %v4566
        %v4599 = vsub.f32 0.0, %v4567
        %v4600 = vsub.f32 0.0, %v4568
        %v4601 = vsub.f32 0.0, %v4569
        %v4602 = vsub.f32 0.0, %v4570
        %v4603 = vsel %vm4571, %v4555, %v4587
        %v4604 = vsel %vm4572, %v4556, %v4588
        %v4605 = vsel %vm4573, %v4557, %v4589
        %v4606 = vsel %vm4574, %v4558, %v4590
        %v4607 = vsel %vm4575, %v4559, %v4591
        %v4608 = vsel %vm4576, %v4560, %v4592
        %v4609 = vsel %vm4577, %v4561, %v4593
        %v4610 = vsel %vm4578, %v4562, %v4594
        %v4611 = vsel %vm4579, %v4563, %v4595
        %v4612 = vsel %vm4580, %v4564, %v4596
        %v4613 = vsel %vm4581, %v4565, %v4597
        %v4614 = vsel %vm4582, %v4566, %v4598
        %v4615 = vsel %vm4583, %v4567, %v4599
        %v4616 = vsel %vm4584, %v4568, %v4600
        %v4617 = vsel %vm4585, %v4569, %v4601
        %v4618 = vsel %vm4586, %v4570, %v4602
        %v4619 = vadd.f32 %v4603, 1.0
        %v4620 = vadd.f32 %v4604, 1.0
        %v4621 = vadd.f32 %v4605, 1.0
        %v4622 = vadd.f32 %v4606, 1.0
        %v4623 = vadd.f32 %v4607, 1.0
        %v4624 = vadd.f32 %v4608, 1.0
        %v4625 = vadd.f32 %v4609, 1.0
        %v4626 = vadd.f32 %v4610, 1.0
        %v4627 = vadd.f32 %v4611, 1.0
        %v4628 = vadd.f32 %v4612, 1.0
        %v4629 = vadd.f32 %v4613, 1.0
        %v4630 = vadd.f32 %v4614, 1.0
        %v4631 = vadd.f32 %v4615, 1.0
        %v4632 = vadd.f32 %v4616, 1.0
        %v4633 = vadd.f32 %v4617, 1.0
        %v4634 = vadd.f32 %v4618, 1.0
        %v4635 = vmul.f32 %v4219, %v4619
        %v4636 = vmul.f32 %v4220, %v4620
        %v4637 = vmul.f32 %v4221, %v4621
        %v4638 = vmul.f32 %v4222, %v4622
        %v4639 = vmul.f32 %v4223, %v4623
        %v4640 = vmul.f32 %v4224, %v4624
        %v4641 = vmul.f32 %v4225, %v4625
        %v4642 = vmul.f32 %v4226, %v4626
        %v4643 = vmul.f32 %v4227, %v4627
        %v4644 = vmul.f32 %v4228, %v4628
        %v4645 = vmul.f32 %v4229, %v4629
        %v4646 = vmul.f32 %v4230, %v4630
        %v4647 = vmul.f32 %v4231, %v4631
        %v4648 = vmul.f32 %v4232, %v4632
        %v4649 = vmul.f32 %v4233, %v4633
        %v4650 = vmul.f32 %v4234, %v4634
        %v4651 = vpack.c.bf16 %v4643, %v4635
        %v4652 = vpack.c.bf16 %v4644, %v4636
        %v4653 = vpack.c.bf16 %v4645, %v4637
        %v4654 = vpack.c.bf16 %v4646, %v4638
        %v4655 = vpack.c.bf16 %v4647, %v4639
        %v4656 = vpack.c.bf16 %v4648, %v4640
        %v4657 = vpack.c.bf16 %v4649, %v4641
        %v4658 = vpack.c.bf16 %v4650, %v4642
        %v4659 = vld [vmem:[%s1069] sm:$0xff]
        %v4660 = vld [vmem:[%s1069 + $0x8] sm:$0xff]
        %v4661 = vld [vmem:[%s1069 + $0x10] sm:$0xff]
        %v4662 = vld [vmem:[%s1069 + $0x18] sm:$0xff]
        %v4663 = vld [vmem:[%s1069 + $0x20] sm:$0xff]
        %v4664 = vld [vmem:[%s1069 + $0x28] sm:$0xff]
        %v4665 = vld [vmem:[%s1069 + $0x30] sm:$0xff]
        %v4666 = vld [vmem:[%s1069 + $0x38] sm:$0xff]
        %v4667 = vld [vmem:[%s1069 + $0x40] sm:$0xff]
        %v4668 = vld [vmem:[%s1069 + $0x48] sm:$0xff]
        %v4669 = vld [vmem:[%s1069 + $0x50] sm:$0xff]
        %v4670 = vld [vmem:[%s1069 + $0x58] sm:$0xff]
        %v4671 = vld [vmem:[%s1069 + $0x60] sm:$0xff]
        %v4672 = vld [vmem:[%s1069 + $0x68] sm:$0xff]
        %v4673 = vld [vmem:[%s1069 + $0x70] sm:$0xff]
        %v4674 = vld [vmem:[%s1069 + $0x78] sm:$0xff]
        %v4675 = vld [vmem:[%s1069 + $0x80] sm:$0xff]
        %v4676 = vld [vmem:[%s1069 + $0x88] sm:$0xff]
        %v4677 = vld [vmem:[%s1069 + $0x90] sm:$0xff]
        %v4678 = vld [vmem:[%s1069 + $0x98] sm:$0xff]
        %v4679 = vld [vmem:[%s1069 + $0xa0] sm:$0xff]
        %v4680 = vld [vmem:[%s1069 + $0xa8] sm:$0xff]
        %v4681 = vld [vmem:[%s1069 + $0xb0] sm:$0xff]
        %v4682 = vld [vmem:[%s1069 + $0xb8] sm:$0xff]
        %v4683 = vld [vmem:[%s1069 + $0xc0] sm:$0xff]
        %v4684 = vld [vmem:[%s1069 + $0xc8] sm:$0xff]
        %v4685 = vld [vmem:[%s1069 + $0xd0] sm:$0xff]
        %v4686 = vld [vmem:[%s1069 + $0xd8] sm:$0xff]
        %v4687 = vld [vmem:[%s1069 + $0xe0] sm:$0xff]
        %v4688 = vld [vmem:[%s1069 + $0xe8] sm:$0xff]
        %v4689 = vld [vmem:[%s1069 + $0xf0] sm:$0xff]
        %v4690 = vld [vmem:[%s1069 + $0xf8] sm:$0xff]
        %v4691 = vld [vmem:[%s1069 + $0x100] sm:$0xff]
        %v4692 = vld [vmem:[%s1069 + $0x108] sm:$0xff]
        %v4693 = vld [vmem:[%s1069 + $0x110] sm:$0xff]
        %v4694 = vld [vmem:[%s1069 + $0x118] sm:$0xff]
        %v4695 = vld [vmem:[%s1069 + $0x120] sm:$0xff]
        %v4696 = vld [vmem:[%s1069 + $0x128] sm:$0xff]
        %v4697 = vld [vmem:[%s1069 + $0x130] sm:$0xff]
        %v4698 = vld [vmem:[%s1069 + $0x138] sm:$0xff]
        %v4699 = vld [vmem:[%s1069 + $0x140] sm:$0xff]
        %v4700 = vld [vmem:[%s1069 + $0x148] sm:$0xff]
        %v4701 = vld [vmem:[%s1069 + $0x150] sm:$0xff]
        %v4702 = vld [vmem:[%s1069 + $0x158] sm:$0xff]
        %v4703 = vld [vmem:[%s1069 + $0x160] sm:$0xff]
        %v4704 = vld [vmem:[%s1069 + $0x168] sm:$0xff]
        %v4705 = vld [vmem:[%s1069 + $0x170] sm:$0xff]
        %v4706 = vld [vmem:[%s1069 + $0x178] sm:$0xff]
        %v4707 = vld [vmem:[%s1069 + $0x180] sm:$0xff]
        %v4708 = vld [vmem:[%s1069 + $0x188] sm:$0xff]
        %v4709 = vld [vmem:[%s1069 + $0x190] sm:$0xff]
        %v4710 = vld [vmem:[%s1069 + $0x198] sm:$0xff]
        %v4711 = vld [vmem:[%s1069 + $0x1a0] sm:$0xff]
        %v4712 = vld [vmem:[%s1069 + $0x1a8] sm:$0xff]
        %v4713 = vld [vmem:[%s1069 + $0x1b0] sm:$0xff]
        %v4714 = vld [vmem:[%s1069 + $0x1b8] sm:$0xff]
        %v4715 = vld [vmem:[%s1069 + $0x1c0] sm:$0xff]
        %v4716 = vld [vmem:[%s1069 + $0x1c8] sm:$0xff]
        %v4717 = vld [vmem:[%s1069 + $0x1d0] sm:$0xff]
        %v4718 = vld [vmem:[%s1069 + $0x1d8] sm:$0xff]
        %v4719 = vld [vmem:[%s1069 + $0x1e0] sm:$0xff]
        %v4720 = vld [vmem:[%s1069 + $0x1e8] sm:$0xff]
        %v4721 = vld [vmem:[%s1069 + $0x1f0] sm:$0xff]
        %v4722 = vld [vmem:[%s1069 + $0x1f8] sm:$0xff]
        %v4723 = vld [vmem:[%s1069 + $0x200] sm:$0xff]
        %v4724 = vld [vmem:[%s1069 + $0x208] sm:$0xff]
        %v4725 = vld [vmem:[%s1069 + $0x210] sm:$0xff]
        %v4726 = vld [vmem:[%s1069 + $0x218] sm:$0xff]
        %v4727 = vld [vmem:[%s1069 + $0x220] sm:$0xff]
        %v4728 = vld [vmem:[%s1069 + $0x228] sm:$0xff]
        %v4729 = vld [vmem:[%s1069 + $0x230] sm:$0xff]
        %v4730 = vld [vmem:[%s1069 + $0x238] sm:$0xff]
        %v4731 = vld [vmem:[%s1069 + $0x240] sm:$0xff]
        %v4732 = vld [vmem:[%s1069 + $0x248] sm:$0xff]
        %v4733 = vld [vmem:[%s1069 + $0x250] sm:$0xff]
        %v4734 = vld [vmem:[%s1069 + $0x258] sm:$0xff]
        %v4735 = vld [vmem:[%s1069 + $0x260] sm:$0xff]
        %v4736 = vld [vmem:[%s1069 + $0x268] sm:$0xff]
        %v4737 = vld [vmem:[%s1069 + $0x270] sm:$0xff]
        %v4738 = vld [vmem:[%s1069 + $0x278] sm:$0xff]
        %v4739 = vld [vmem:[%s1069 + $0x280] sm:$0xff]
        %v4740 = vld [vmem:[%s1069 + $0x288] sm:$0xff]
        %v4741 = vld [vmem:[%s1069 + $0x290] sm:$0xff]
        %v4742 = vld [vmem:[%s1069 + $0x298] sm:$0xff]
        %v4743 = vld [vmem:[%s1069 + $0x2a0] sm:$0xff]
        %v4744 = vld [vmem:[%s1069 + $0x2a8] sm:$0xff]
        %v4745 = vld [vmem:[%s1069 + $0x2b0] sm:$0xff]
        %v4746 = vld [vmem:[%s1069 + $0x2b8] sm:$0xff]
        %v4747 = vld [vmem:[%s1069 + $0x2c0] sm:$0xff]
        %v4748 = vld [vmem:[%s1069 + $0x2c8] sm:$0xff]
        %v4749 = vld [vmem:[%s1069 + $0x2d0] sm:$0xff]
        %v4750 = vld [vmem:[%s1069 + $0x2d8] sm:$0xff]
        %v4751 = vld [vmem:[%s1069 + $0x2e0] sm:$0xff]
        %v4752 = vld [vmem:[%s1069 + $0x2e8] sm:$0xff]
        %v4753 = vld [vmem:[%s1069 + $0x2f0] sm:$0xff]
        %v4754 = vld [vmem:[%s1069 + $0x2f8] sm:$0xff]
        %v4755 = vld [vmem:[%s1069 + $0x300] sm:$0xff]
        %v4756 = vld [vmem:[%s1069 + $0x308] sm:$0xff]
        %v4757 = vld [vmem:[%s1069 + $0x310] sm:$0xff]
        %v4758 = vld [vmem:[%s1069 + $0x318] sm:$0xff]
        %v4759 = vld [vmem:[%s1069 + $0x320] sm:$0xff]
        %v4760 = vld [vmem:[%s1069 + $0x328] sm:$0xff]
        %v4761 = vld [vmem:[%s1069 + $0x330] sm:$0xff]
        %v4762 = vld [vmem:[%s1069 + $0x338] sm:$0xff]
        %v4763 = vld [vmem:[%s1069 + $0x340] sm:$0xff]
        %v4764 = vld [vmem:[%s1069 + $0x348] sm:$0xff]
        %v4765 = vld [vmem:[%s1069 + $0x350] sm:$0xff]
        %v4766 = vld [vmem:[%s1069 + $0x358] sm:$0xff]
        %v4767 = vld [vmem:[%s1069 + $0x360] sm:$0xff]
        %v4768 = vld [vmem:[%s1069 + $0x368] sm:$0xff]
        %v4769 = vld [vmem:[%s1069 + $0x370] sm:$0xff]
        %v4770 = vld [vmem:[%s1069 + $0x378] sm:$0xff]
        %v4771 = vld [vmem:[%s1069 + $0x380] sm:$0xff]
        %v4772 = vld [vmem:[%s1069 + $0x388] sm:$0xff]
        %v4773 = vld [vmem:[%s1069 + $0x390] sm:$0xff]
        %v4774 = vld [vmem:[%s1069 + $0x398] sm:$0xff]
        %v4775 = vld [vmem:[%s1069 + $0x3a0] sm:$0xff]
        %v4776 = vld [vmem:[%s1069 + $0x3a8] sm:$0xff]
        %v4777 = vld [vmem:[%s1069 + $0x3b0] sm:$0xff]
        %v4778 = vld [vmem:[%s1069 + $0x3b8] sm:$0xff]
        %v4779 = vld [vmem:[%s1069 + $0x3c0] sm:$0xff]
        %v4780 = vld [vmem:[%s1069 + $0x3c8] sm:$0xff]
        %v4781 = vld [vmem:[%s1069 + $0x3d0] sm:$0xff]
        %v4782 = vld [vmem:[%s1069 + $0x3d8] sm:$0xff]
        %v4783 = vld [vmem:[%s1069 + $0x3e0] sm:$0xff]
        %v4784 = vld [vmem:[%s1069 + $0x3e8] sm:$0xff]
        %v4785 = vld [vmem:[%s1069 + $0x3f0] sm:$0xff]
        %v4786 = vld [vmem:[%s1069 + $0x3f8] sm:$0xff]
        %v4787 = vld [vmem:[%s1078] sm:$0x3]
        %v4789 = vlaneseq
        %v4790 = vshrl.u32 %v4789, 7
        %v4791 = vsub.s32 0, %v4790
        %v4792 = vrot.slane %v4787, %v4791
        %v4793 = vlaneseq
        %v4794 = vshrl.u32 %v4793, 7
        %v4795 = vsub.s32 1, %v4794
        %v4796 = vrot.slane %v4787, %v4795
        %v4927 = vunpack.c.l.b16 %v4659
        %v4928 = vunpack.c.h.b16 %v4659
        %v4929 = vunpack.c.l.b16 %v4660
        %v4930 = vunpack.c.h.b16 %v4660
        %v4931 = vunpack.c.l.b16 %v4661
        %v4932 = vunpack.c.h.b16 %v4661
        %v4933 = vunpack.c.l.b16 %v4662
        %v4934 = vunpack.c.h.b16 %v4662
        %v4935 = vunpack.c.l.b16 %v4663
        %v4936 = vunpack.c.h.b16 %v4663
        %v4937 = vunpack.c.l.b16 %v4664
        %v4938 = vunpack.c.h.b16 %v4664
        %v4939 = vunpack.c.l.b16 %v4665
        %v4940 = vunpack.c.h.b16 %v4665
        %v4941 = vunpack.c.l.b16 %v4666
        %v4942 = vunpack.c.h.b16 %v4666
        %v4943 = vunpack.c.l.b16 %v4667
        %v4944 = vunpack.c.h.b16 %v4667
        %v4945 = vunpack.c.l.b16 %v4668
        %v4946 = vunpack.c.h.b16 %v4668
        %v4947 = vunpack.c.l.b16 %v4669
        %v4948 = vunpack.c.h.b16 %v4669
        %v4949 = vunpack.c.l.b16 %v4670
        %v4950 = vunpack.c.h.b16 %v4670
        %v4951 = vunpack.c.l.b16 %v4671
        %v4952 = vunpack.c.h.b16 %v4671
        %v4953 = vunpack.c.l.b16 %v4672
        %v4954 = vunpack.c.h.b16 %v4672
        %v4955 = vunpack.c.l.b16 %v4673
        %v4956 = vunpack.c.h.b16 %v4673
        %v4957 = vunpack.c.l.b16 %v4674
        %v4958 = vunpack.c.h.b16 %v4674
        %v4959 = vunpack.c.l.b16 %v4675
        %v4960 = vunpack.c.h.b16 %v4675
        %v4961 = vunpack.c.l.b16 %v4676
        %v4962 = vunpack.c.h.b16 %v4676
        %v4963 = vunpack.c.l.b16 %v4677
        %v4964 = vunpack.c.h.b16 %v4677
        %v4965 = vunpack.c.l.b16 %v4678
        %v4966 = vunpack.c.h.b16 %v4678
        %v4967 = vunpack.c.l.b16 %v4679
        %v4968 = vunpack.c.h.b16 %v4679
        %v4969 = vunpack.c.l.b16 %v4680
        %v4970 = vunpack.c.h.b16 %v4680
        %v4971 = vunpack.c.l.b16 %v4681
        %v4972 = vunpack.c.h.b16 %v4681
        %v4973 = vunpack.c.l.b16 %v4682
        %v4974 = vunpack.c.h.b16 %v4682
        %v4975 = vunpack.c.l.b16 %v4683
        %v4976 = vunpack.c.h.b16 %v4683
        %v4977 = vunpack.c.l.b16 %v4684
        %v4978 = vunpack.c.h.b16 %v4684
        %v4979 = vunpack.c.l.b16 %v4685
        %v4980 = vunpack.c.h.b16 %v4685
        %v4981 = vunpack.c.l.b16 %v4686
        %v4982 = vunpack.c.h.b16 %v4686
        %v4983 = vunpack.c.l.b16 %v4687
        %v4984 = vunpack.c.h.b16 %v4687
        %v4985 = vunpack.c.l.b16 %v4688
        %v4986 = vunpack.c.h.b16 %v4688
        %v4987 = vunpack.c.l.b16 %v4689
        %v4988 = vunpack.c.h.b16 %v4689
        %v4989 = vunpack.c.l.b16 %v4690
        %v4990 = vunpack.c.h.b16 %v4690
        %v4991 = vunpack.c.l.b16 %v4691
        %v4992 = vunpack.c.h.b16 %v4691
        %v4993 = vunpack.c.l.b16 %v4692
        %v4994 = vunpack.c.h.b16 %v4692
        %v4995 = vunpack.c.l.b16 %v4693
        %v4996 = vunpack.c.h.b16 %v4693
        %v4997 = vunpack.c.l.b16 %v4694
        %v4998 = vunpack.c.h.b16 %v4694
        %v4999 = vunpack.c.l.b16 %v4695
        %v5000 = vunpack.c.h.b16 %v4695
        %v5001 = vunpack.c.l.b16 %v4696
        %v5002 = vunpack.c.h.b16 %v4696
        %v5003 = vunpack.c.l.b16 %v4697
        %v5004 = vunpack.c.h.b16 %v4697
        %v5005 = vunpack.c.l.b16 %v4698
        %v5006 = vunpack.c.h.b16 %v4698
        %v5007 = vunpack.c.l.b16 %v4699
        %v5008 = vunpack.c.h.b16 %v4699
        %v5009 = vunpack.c.l.b16 %v4700
        %v5010 = vunpack.c.h.b16 %v4700
        %v5011 = vunpack.c.l.b16 %v4701
        %v5012 = vunpack.c.h.b16 %v4701
        %v5013 = vunpack.c.l.b16 %v4702
        %v5014 = vunpack.c.h.b16 %v4702
        %v5015 = vunpack.c.l.b16 %v4703
        %v5016 = vunpack.c.h.b16 %v4703
        %v5017 = vunpack.c.l.b16 %v4704
        %v5018 = vunpack.c.h.b16 %v4704
        %v5019 = vunpack.c.l.b16 %v4705
        %v5020 = vunpack.c.h.b16 %v4705
        %v5021 = vunpack.c.l.b16 %v4706
        %v5022 = vunpack.c.h.b16 %v4706
        %v5023 = vunpack.c.l.b16 %v4707
        %v5024 = vunpack.c.h.b16 %v4707
        %v5025 = vunpack.c.l.b16 %v4708
        %v5026 = vunpack.c.h.b16 %v4708
        %v5027 = vunpack.c.l.b16 %v4709
        %v5028 = vunpack.c.h.b16 %v4709
        %v5029 = vunpack.c.l.b16 %v4710
        %v5030 = vunpack.c.h.b16 %v4710
        %v5031 = vunpack.c.l.b16 %v4711
        %v5032 = vunpack.c.h.b16 %v4711
        %v5033 = vunpack.c.l.b16 %v4712
        %v5034 = vunpack.c.h.b16 %v4712
        %v5035 = vunpack.c.l.b16 %v4713
        %v5036 = vunpack.c.h.b16 %v4713
        %v5037 = vunpack.c.l.b16 %v4714
        %v5038 = vunpack.c.h.b16 %v4714
        %v5039 = vunpack.c.l.b16 %v4715
        %v5040 = vunpack.c.h.b16 %v4715
        %v5041 = vunpack.c.l.b16 %v4716
        %v5042 = vunpack.c.h.b16 %v4716
        %v5043 = vunpack.c.l.b16 %v4717
        %v5044 = vunpack.c.h.b16 %v4717
        %v5045 = vunpack.c.l.b16 %v4718
        %v5046 = vunpack.c.h.b16 %v4718
        %v5047 = vunpack.c.l.b16 %v4719
        %v5048 = vunpack.c.h.b16 %v4719
        %v5049 = vunpack.c.l.b16 %v4720
        %v5050 = vunpack.c.h.b16 %v4720
        %v5051 = vunpack.c.l.b16 %v4721
        %v5052 = vunpack.c.h.b16 %v4721
        %v5053 = vunpack.c.l.b16 %v4722
        %v5054 = vunpack.c.h.b16 %v4722
        %v5055 = vunpack.c.l.b16 %v4723
        %v5056 = vunpack.c.h.b16 %v4723
        %v5057 = vunpack.c.l.b16 %v4724
        %v5058 = vunpack.c.h.b16 %v4724
        %v5059 = vunpack.c.l.b16 %v4725
        %v5060 = vunpack.c.h.b16 %v4725
        %v5061 = vunpack.c.l.b16 %v4726
        %v5062 = vunpack.c.h.b16 %v4726
        %v5063 = vunpack.c.l.b16 %v4727
        %v5064 = vunpack.c.h.b16 %v4727
        %v5065 = vunpack.c.l.b16 %v4728
        %v5066 = vunpack.c.h.b16 %v4728
        %v5067 = vunpack.c.l.b16 %v4729
        %v5068 = vunpack.c.h.b16 %v4729
        %v5069 = vunpack.c.l.b16 %v4730
        %v5070 = vunpack.c.h.b16 %v4730
        %v5071 = vunpack.c.l.b16 %v4731
        %v5072 = vunpack.c.h.b16 %v4731
        %v5073 = vunpack.c.l.b16 %v4732
        %v5074 = vunpack.c.h.b16 %v4732
        %v5075 = vunpack.c.l.b16 %v4733
        %v5076 = vunpack.c.h.b16 %v4733
        %v5077 = vunpack.c.l.b16 %v4734
        %v5078 = vunpack.c.h.b16 %v4734
        %v5079 = vunpack.c.l.b16 %v4735
        %v5080 = vunpack.c.h.b16 %v4735
        %v5081 = vunpack.c.l.b16 %v4736
        %v5082 = vunpack.c.h.b16 %v4736
        %v5083 = vunpack.c.l.b16 %v4737
        %v5084 = vunpack.c.h.b16 %v4737
        %v5085 = vunpack.c.l.b16 %v4738
        %v5086 = vunpack.c.h.b16 %v4738
        %v5087 = vunpack.c.l.b16 %v4739
        %v5088 = vunpack.c.h.b16 %v4739
        %v5089 = vunpack.c.l.b16 %v4740
        %v5090 = vunpack.c.h.b16 %v4740
        %v5091 = vunpack.c.l.b16 %v4741
        %v5092 = vunpack.c.h.b16 %v4741
        %v5093 = vunpack.c.l.b16 %v4742
        %v5094 = vunpack.c.h.b16 %v4742
        %v5095 = vunpack.c.l.b16 %v4743
        %v5096 = vunpack.c.h.b16 %v4743
        %v5097 = vunpack.c.l.b16 %v4744
        %v5098 = vunpack.c.h.b16 %v4744
        %v5099 = vunpack.c.l.b16 %v4745
        %v5100 = vunpack.c.h.b16 %v4745
        %v5101 = vunpack.c.l.b16 %v4746
        %v5102 = vunpack.c.h.b16 %v4746
        %v5103 = vunpack.c.l.b16 %v4747
        %v5104 = vunpack.c.h.b16 %v4747
        %v5105 = vunpack.c.l.b16 %v4748
        %v5106 = vunpack.c.h.b16 %v4748
        %v5107 = vunpack.c.l.b16 %v4749
        %v5108 = vunpack.c.h.b16 %v4749
        %v5109 = vunpack.c.l.b16 %v4750
        %v5110 = vunpack.c.h.b16 %v4750
        %v5111 = vunpack.c.l.b16 %v4751
        %v5112 = vunpack.c.h.b16 %v4751
        %v5113 = vunpack.c.l.b16 %v4752
        %v5114 = vunpack.c.h.b16 %v4752
        %v5115 = vunpack.c.l.b16 %v4753
        %v5116 = vunpack.c.h.b16 %v4753
        %v5117 = vunpack.c.l.b16 %v4754
        %v5118 = vunpack.c.h.b16 %v4754
        %v5119 = vunpack.c.l.b16 %v4755
        %v5120 = vunpack.c.h.b16 %v4755
        %v5121 = vunpack.c.l.b16 %v4756
        %v5122 = vunpack.c.h.b16 %v4756
        %v5123 = vunpack.c.l.b16 %v4757
        %v5124 = vunpack.c.h.b16 %v4757
        %v5125 = vunpack.c.l.b16 %v4758
        %v5126 = vunpack.c.h.b16 %v4758
        %v5127 = vunpack.c.l.b16 %v4759
        %v5128 = vunpack.c.h.b16 %v4759
        %v5129 = vunpack.c.l.b16 %v4760
        %v5130 = vunpack.c.h.b16 %v4760
        %v5131 = vunpack.c.l.b16 %v4761
        %v5132 = vunpack.c.h.b16 %v4761
        %v5133 = vunpack.c.l.b16 %v4762
        %v5134 = vunpack.c.h.b16 %v4762
        %v5135 = vunpack.c.l.b16 %v4763
        %v5136 = vunpack.c.h.b16 %v4763
        %v5137 = vunpack.c.l.b16 %v4764
        %v5138 = vunpack.c.h.b16 %v4764
        %v5139 = vunpack.c.l.b16 %v4765
        %v5140 = vunpack.c.h.b16 %v4765
        %v5141 = vunpack.c.l.b16 %v4766
        %v5142 = vunpack.c.h.b16 %v4766
        %v5143 = vunpack.c.l.b16 %v4767
        %v5144 = vunpack.c.h.b16 %v4767
        %v5145 = vunpack.c.l.b16 %v4768
        %v5146 = vunpack.c.h.b16 %v4768
        %v5147 = vunpack.c.l.b16 %v4769
        %v5148 = vunpack.c.h.b16 %v4769
        %v5149 = vunpack.c.l.b16 %v4770
        %v5150 = vunpack.c.h.b16 %v4770
        %v5151 = vunpack.c.l.b16 %v4771
        %v5152 = vunpack.c.h.b16 %v4771
        %v5153 = vunpack.c.l.b16 %v4772
        %v5154 = vunpack.c.h.b16 %v4772
        %v5155 = vunpack.c.l.b16 %v4773
        %v5156 = vunpack.c.h.b16 %v4773
        %v5157 = vunpack.c.l.b16 %v4774
        %v5158 = vunpack.c.h.b16 %v4774
        %v5159 = vunpack.c.l.b16 %v4775
        %v5160 = vunpack.c.h.b16 %v4775
        %v5161 = vunpack.c.l.b16 %v4776
        %v5162 = vunpack.c.h.b16 %v4776
        %v5163 = vunpack.c.l.b16 %v4777
        %v5164 = vunpack.c.h.b16 %v4777
        %v5165 = vunpack.c.l.b16 %v4778
        %v5166 = vunpack.c.h.b16 %v4778
        %v5167 = vunpack.c.l.b16 %v4779
        %v5168 = vunpack.c.h.b16 %v4779
        %v5169 = vunpack.c.l.b16 %v4780
        %v5170 = vunpack.c.h.b16 %v4780
        %v5171 = vunpack.c.l.b16 %v4781
        %v5172 = vunpack.c.h.b16 %v4781
        %v5173 = vunpack.c.l.b16 %v4782
        %v5174 = vunpack.c.h.b16 %v4782
        %v5175 = vunpack.c.l.b16 %v4783
        %v5176 = vunpack.c.h.b16 %v4783
        %v5177 = vunpack.c.l.b16 %v4784
        %v5178 = vunpack.c.h.b16 %v4784
        %v5179 = vunpack.c.l.b16 %v4785
        %v5180 = vunpack.c.h.b16 %v4785
        %v5181 = vunpack.c.l.b16 %v4786
        %v5182 = vunpack.c.h.b16 %v4786
        %v5183 = vpack.c.b16 %v4929, %v4927
        %v5184 = vpack.c.b16 %v4930, %v4928
        %v5185 = vpack.c.b16 %v4933, %v4931
        %v5186 = vpack.c.b16 %v4934, %v4932
        %v5187 = vpack.c.b16 %v4937, %v4935
        %v5188 = vpack.c.b16 %v4938, %v4936
        %v5189 = vpack.c.b16 %v4941, %v4939
        %v5190 = vpack.c.b16 %v4942, %v4940
        %v5191 = vpack.c.b16 %v4945, %v4943
        %v5192 = vpack.c.b16 %v4946, %v4944
        %v5193 = vpack.c.b16 %v4949, %v4947
        %v5194 = vpack.c.b16 %v4950, %v4948
        %v5195 = vpack.c.b16 %v4953, %v4951
        %v5196 = vpack.c.b16 %v4954, %v4952
        %v5197 = vpack.c.b16 %v4957, %v4955
        %v5198 = vpack.c.b16 %v4958, %v4956
        %v5199 = vpack.c.b16 %v4961, %v4959
        %v5200 = vpack.c.b16 %v4962, %v4960
        %v5201 = vpack.c.b16 %v4965, %v4963
        %v5202 = vpack.c.b16 %v4966, %v4964
        %v5203 = vpack.c.b16 %v4969, %v4967
        %v5204 = vpack.c.b16 %v4970, %v4968
        %v5205 = vpack.c.b16 %v4973, %v4971
        %v5206 = vpack.c.b16 %v4974, %v4972
        %v5207 = vpack.c.b16 %v4977, %v4975
        %v5208 = vpack.c.b16 %v4978, %v4976
        %v5209 = vpack.c.b16 %v4981, %v4979
        %v5210 = vpack.c.b16 %v4982, %v4980
        %v5211 = vpack.c.b16 %v4985, %v4983
        %v5212 = vpack.c.b16 %v4986, %v4984
        %v5213 = vpack.c.b16 %v4989, %v4987
        %v5214 = vpack.c.b16 %v4990, %v4988
        %v5215 = vpack.c.b16 %v4993, %v4991
        %v5216 = vpack.c.b16 %v4994, %v4992
        %v5217 = vpack.c.b16 %v4997, %v4995
        %v5218 = vpack.c.b16 %v4998, %v4996
        %v5219 = vpack.c.b16 %v5001, %v4999
        %v5220 = vpack.c.b16 %v5002, %v5000
        %v5221 = vpack.c.b16 %v5005, %v5003
        %v5222 = vpack.c.b16 %v5006, %v5004
        %v5223 = vpack.c.b16 %v5009, %v5007
        %v5224 = vpack.c.b16 %v5010, %v5008
        %v5225 = vpack.c.b16 %v5013, %v5011
        %v5226 = vpack.c.b16 %v5014, %v5012
        %v5227 = vpack.c.b16 %v5017, %v5015
        %v5228 = vpack.c.b16 %v5018, %v5016
        %v5229 = vpack.c.b16 %v5021, %v5019
        %v5230 = vpack.c.b16 %v5022, %v5020
        %v5231 = vpack.c.b16 %v5025, %v5023
        %v5232 = vpack.c.b16 %v5026, %v5024
        %v5233 = vpack.c.b16 %v5029, %v5027
        %v5234 = vpack.c.b16 %v5030, %v5028
        %v5235 = vpack.c.b16 %v5033, %v5031
        %v5236 = vpack.c.b16 %v5034, %v5032
        %v5237 = vpack.c.b16 %v5037, %v5035
        %v5238 = vpack.c.b16 %v5038, %v5036
        %v5239 = vpack.c.b16 %v5041, %v5039
        %v5240 = vpack.c.b16 %v5042, %v5040
        %v5241 = vpack.c.b16 %v5045, %v5043
        %v5242 = vpack.c.b16 %v5046, %v5044
        %v5243 = vpack.c.b16 %v5049, %v5047
        %v5244 = vpack.c.b16 %v5050, %v5048
        %v5245 = vpack.c.b16 %v5053, %v5051
        %v5246 = vpack.c.b16 %v5054, %v5052
        %v5247 = vpack.c.b16 %v5057, %v5055
        %v5248 = vpack.c.b16 %v5058, %v5056
        %v5249 = vpack.c.b16 %v5061, %v5059
        %v5250 = vpack.c.b16 %v5062, %v5060
        %v5251 = vpack.c.b16 %v5065, %v5063
        %v5252 = vpack.c.b16 %v5066, %v5064
        %v5253 = vpack.c.b16 %v5069, %v5067
        %v5254 = vpack.c.b16 %v5070, %v5068
        %v5255 = vpack.c.b16 %v5073, %v5071
        %v5256 = vpack.c.b16 %v5074, %v5072
        %v5257 = vpack.c.b16 %v5077, %v5075
        %v5258 = vpack.c.b16 %v5078, %v5076
        %v5259 = vpack.c.b16 %v5081, %v5079
        %v5260 = vpack.c.b16 %v5082, %v5080
        %v5261 = vpack.c.b16 %v5085, %v5083
        %v5262 = vpack.c.b16 %v5086, %v5084
        %v5263 = vpack.c.b16 %v5089, %v5087
        %v5264 = vpack.c.b16 %v5090, %v5088
        %v5265 = vpack.c.b16 %v5093, %v5091
        %v5266 = vpack.c.b16 %v5094, %v5092
        %v5267 = vpack.c.b16 %v5097, %v5095
        %v5268 = vpack.c.b16 %v5098, %v5096
        %v5269 = vpack.c.b16 %v5101, %v5099
        %v5270 = vpack.c.b16 %v5102, %v5100
        %v5271 = vpack.c.b16 %v5105, %v5103
        %v5272 = vpack.c.b16 %v5106, %v5104
        %v5273 = vpack.c.b16 %v5109, %v5107
        %v5274 = vpack.c.b16 %v5110, %v5108
        %v5275 = vpack.c.b16 %v5113, %v5111
        %v5276 = vpack.c.b16 %v5114, %v5112
        %v5277 = vpack.c.b16 %v5117, %v5115
        %v5278 = vpack.c.b16 %v5118, %v5116
        %v5279 = vpack.c.b16 %v5121, %v5119
        %v5280 = vpack.c.b16 %v5122, %v5120
        %v5281 = vpack.c.b16 %v5125, %v5123
        %v5282 = vpack.c.b16 %v5126, %v5124
        %v5283 = vpack.c.b16 %v5129, %v5127
        %v5284 = vpack.c.b16 %v5130, %v5128
        %v5285 = vpack.c.b16 %v5133, %v5131
        %v5286 = vpack.c.b16 %v5134, %v5132
        %v5287 = vpack.c.b16 %v5137, %v5135
        %v5288 = vpack.c.b16 %v5138, %v5136
        %v5289 = vpack.c.b16 %v5141, %v5139
        %v5290 = vpack.c.b16 %v5142, %v5140
        %v5291 = vpack.c.b16 %v5145, %v5143
        %v5292 = vpack.c.b16 %v5146, %v5144
        %v5293 = vpack.c.b16 %v5149, %v5147
        %v5294 = vpack.c.b16 %v5150, %v5148
        %v5295 = vpack.c.b16 %v5153, %v5151
        %v5296 = vpack.c.b16 %v5154, %v5152
        %v5297 = vpack.c.b16 %v5157, %v5155
        %v5298 = vpack.c.b16 %v5158, %v5156
        %v5299 = vpack.c.b16 %v5161, %v5159
        %v5300 = vpack.c.b16 %v5162, %v5160
        %v5301 = vpack.c.b16 %v5165, %v5163
        %v5302 = vpack.c.b16 %v5166, %v5164
        %v5303 = vpack.c.b16 %v5169, %v5167
        %v5304 = vpack.c.b16 %v5170, %v5168
        %v5305 = vpack.c.b16 %v5173, %v5171
        %v5306 = vpack.c.b16 %v5174, %v5172
        %v5307 = vpack.c.b16 %v5177, %v5175
        %v5308 = vpack.c.b16 %v5178, %v5176
        %v5309 = vpack.c.b16 %v5181, %v5179
        %v5310 = vpack.c.b16 %v5182, %v5180
        %5439 = vmatprep.subr.bf16.mxu0 %v5184
        %5440 = vmatpush1.bf16.msra.mxu0 %v5183
        %5441 = vmatprep.subr.bf16.mxu0 %v5186
        %5442 = vmatpush1.bf16.msra.mxu0 %v5185
        %5443 = vmatprep.subr.bf16.mxu0 %v5188
        %5444 = vmatpush1.bf16.msra.mxu0 %v5187
        %5445 = vmatprep.subr.bf16.mxu0 %v5190
        %5446 = vmatpush1.bf16.msra.mxu0 %v5189
        %5447 = vmatprep.subr.bf16.mxu0 %v5192
        %5448 = vmatpush1.bf16.msra.mxu0 %v5191
        %5449 = vmatprep.subr.bf16.mxu0 %v5194
        %5450 = vmatpush1.bf16.msra.mxu0 %v5193
        %5451 = vmatprep.subr.bf16.mxu0 %v5196
        %5452 = vmatpush1.bf16.msra.mxu0 %v5195
        %5453 = vmatprep.subr.bf16.mxu0 %v5198
        %5454 = vmatpush1.bf16.msra.mxu0 %v5197
        %5455 = vmatprep.subr.bf16.mxu0 %v5200
        %5456 = vmatpush1.bf16.msra.mxu0 %v5199
        %5457 = vmatprep.subr.bf16.mxu0 %v5202
        %5458 = vmatpush1.bf16.msra.mxu0 %v5201
        %5459 = vmatprep.subr.bf16.mxu0 %v5204
        %5460 = vmatpush1.bf16.msra.mxu0 %v5203
        %5461 = vmatprep.subr.bf16.mxu0 %v5206
        %5462 = vmatpush1.bf16.msra.mxu0 %v5205
        %5463 = vmatprep.subr.bf16.mxu0 %v5208
        %5464 = vmatpush1.bf16.msra.mxu0 %v5207
        %5465 = vmatprep.subr.bf16.mxu0 %v5210
        %5466 = vmatpush1.bf16.msra.mxu0 %v5209
        %5467 = vmatprep.subr.bf16.mxu0 %v5212
        %5468 = vmatpush1.bf16.msra.mxu0 %v5211
        %5469 = vmatprep.subr.bf16.mxu0 %v5214
        %5470 = vmatpush1.bf16.msra.mxu0 %v5213
        %5471 = vmatprep.mubr.bf16.mxu0 %v4652
        %5472 = vmatmul.mubr.bf16.gmra.mrb[0].mxu0 %v4651
        %v5473 = vpop.f32.mrb[0].mxu0
        %v5474 = vadd.f32 %v4792, %v5473
        %v5475 = vpop.f32.mrb[0].mxu0
        %v5476 = vadd.f32 %v4796, %v5475
        %v5477 = vpop.f32.mrb[0].mxu0
        %v5478 = vadd.f32 %v4792, %v5477
        %v5479 = vpop.f32.mrb[0].mxu0
        %v5480 = vadd.f32 %v4796, %v5479
        %5481 = vdwg.mxu0
        %5482 = vmatprep.subr.bf16.mxu0 %v5216
        %5483 = vmatpush1.bf16.msra.mxu0 %v5215
        %5484 = vmatprep.subr.bf16.mxu0 %v5218
        %5485 = vmatpush1.bf16.msra.mxu0 %v5217
        %5486 = vmatprep.subr.bf16.mxu0 %v5220
        %5487 = vmatpush1.bf16.msra.mxu0 %v5219
        %5488 = vmatprep.subr.bf16.mxu0 %v5222
        %5489 = vmatpush1.bf16.msra.mxu0 %v5221
        %5490 = vmatprep.subr.bf16.mxu0 %v5224
        %5491 = vmatpush1.bf16.msra.mxu0 %v5223
        %5492 = vmatprep.subr.bf16.mxu0 %v5226
        %5493 = vmatpush1.bf16.msra.mxu0 %v5225
        %5494 = vmatprep.subr.bf16.mxu0 %v5228
        %5495 = vmatpush1.bf16.msra.mxu0 %v5227
        %5496 = vmatprep.subr.bf16.mxu0 %v5230
        %5497 = vmatpush1.bf16.msra.mxu0 %v5229
        %5498 = vmatprep.subr.bf16.mxu0 %v5232
        %5499 = vmatpush1.bf16.msra.mxu0 %v5231
        %5500 = vmatprep.subr.bf16.mxu0 %v5234
        %5501 = vmatpush1.bf16.msra.mxu0 %v5233
        %5502 = vmatprep.subr.bf16.mxu0 %v5236
        %5503 = vmatpush1.bf16.msra.mxu0 %v5235
        %5504 = vmatprep.subr.bf16.mxu0 %v5238
        %5505 = vmatpush1.bf16.msra.mxu0 %v5237
        %5506 = vmatprep.subr.bf16.mxu0 %v5240
        %5507 = vmatpush1.bf16.msra.mxu0 %v5239
        %5508 = vmatprep.subr.bf16.mxu0 %v5242
        %5509 = vmatpush1.bf16.msra.mxu0 %v5241
        %5510 = vmatprep.subr.bf16.mxu0 %v5244
        %5511 = vmatpush1.bf16.msra.mxu0 %v5243
        %5512 = vmatprep.subr.bf16.mxu0 %v5246
        %5513 = vmatpush1.bf16.msra.mxu0 %v5245
        %5514 = vmatprep.mubr.bf16.mxu0 %v4654
        %5515 = vmatmul.mubr.bf16.gmra.mrb[0].mxu0 %v4653
        %v5516 = vpop.f32.mrb[0].mxu0
        %v5517 = vadd.f32 %v5474, %v5516
        %v5518 = vpop.f32.mrb[0].mxu0
        %v5519 = vadd.f32 %v5476, %v5518
        %v5520 = vpop.f32.mrb[0].mxu0
        %v5521 = vadd.f32 %v5478, %v5520
        %v5522 = vpop.f32.mrb[0].mxu0
        %v5523 = vadd.f32 %v5480, %v5522
        %5524 = vdwg.mxu0
        %5525 = vmatprep.subr.bf16.mxu0 %v5248
        %5526 = vmatpush1.bf16.msra.mxu0 %v5247
        %5527 = vmatprep.subr.bf16.mxu0 %v5250
        %5528 = vmatpush1.bf16.msra.mxu0 %v5249
        %5529 = vmatprep.subr.bf16.mxu0 %v5252
        %5530 = vmatpush1.bf16.msra.mxu0 %v5251
        %5531 = vmatprep.subr.bf16.mxu0 %v5254
        %5532 = vmatpush1.bf16.msra.mxu0 %v5253
        %5533 = vmatprep.subr.bf16.mxu0 %v5256
        %5534 = vmatpush1.bf16.msra.mxu0 %v5255
        %5535 = vmatprep.subr.bf16.mxu0 %v5258
        %5536 = vmatpush1.bf16.msra.mxu0 %v5257
        %5537 = vmatprep.subr.bf16.mxu0 %v5260
        %5538 = vmatpush1.bf16.msra.mxu0 %v5259
        %5539 = vmatprep.subr.bf16.mxu0 %v5262
        %5540 = vmatpush1.bf16.msra.mxu0 %v5261
        %5541 = vmatprep.subr.bf16.mxu0 %v5264
        %5542 = vmatpush1.bf16.msra.mxu0 %v5263
        %5543 = vmatprep.subr.bf16.mxu0 %v5266
        %5544 = vmatpush1.bf16.msra.mxu0 %v5265
        %5545 = vmatprep.subr.bf16.mxu0 %v5268
        %5546 = vmatpush1.bf16.msra.mxu0 %v5267
        %5547 = vmatprep.subr.bf16.mxu0 %v5270
        %5548 = vmatpush1.bf16.msra.mxu0 %v5269
        %5549 = vmatprep.subr.bf16.mxu0 %v5272
        %5550 = vmatpush1.bf16.msra.mxu0 %v5271
        %5551 = vmatprep.subr.bf16.mxu0 %v5274
        %5552 = vmatpush1.bf16.msra.mxu0 %v5273
        %5553 = vmatprep.subr.bf16.mxu0 %v5276
        %5554 = vmatpush1.bf16.msra.mxu0 %v5275
        %5555 = vmatprep.subr.bf16.mxu0 %v5278
        %5556 = vmatpush1.bf16.msra.mxu0 %v5277
        %5557 = vmatprep.mubr.bf16.mxu0 %v4656
        %5558 = vmatmul.mubr.bf16.gmra.mrb[0].mxu0 %v4655
        %v5559 = vpop.f32.mrb[0].mxu0
        %v5560 = vadd.f32 %v5517, %v5559
        %v5561 = vpop.f32.mrb[0].mxu0
        %v5562 = vadd.f32 %v5519, %v5561
        %v5563 = vpop.f32.mrb[0].mxu0
        %v5564 = vadd.f32 %v5521, %v5563
        %v5565 = vpop.f32.mrb[0].mxu0
        %v5566 = vadd.f32 %v5523, %v5565
        %5567 = vdwg.mxu0
        %5568 = vmatprep.subr.bf16.mxu0 %v5280
        %5569 = vmatpush1.bf16.msra.mxu0 %v5279
        %5570 = vmatprep.subr.bf16.mxu0 %v5282
        %5571 = vmatpush1.bf16.msra.mxu0 %v5281
        %5572 = vmatprep.subr.bf16.mxu0 %v5284
        %5573 = vmatpush1.bf16.msra.mxu0 %v5283
        %5574 = vmatprep.subr.bf16.mxu0 %v5286
        %5575 = vmatpush1.bf16.msra.mxu0 %v5285
        %5576 = vmatprep.subr.bf16.mxu0 %v5288
        %5577 = vmatpush1.bf16.msra.mxu0 %v5287
        %5578 = vmatprep.subr.bf16.mxu0 %v5290
        %5579 = vmatpush1.bf16.msra.mxu0 %v5289
        %5580 = vmatprep.subr.bf16.mxu0 %v5292
        %5581 = vmatpush1.bf16.msra.mxu0 %v5291
        %5582 = vmatprep.subr.bf16.mxu0 %v5294
        %5583 = vmatpush1.bf16.msra.mxu0 %v5293
        %5584 = vmatprep.subr.bf16.mxu0 %v5296
        %5585 = vmatpush1.bf16.msra.mxu0 %v5295
        %5586 = vmatprep.subr.bf16.mxu0 %v5298
        %5587 = vmatpush1.bf16.msra.mxu0 %v5297
        %5588 = vmatprep.subr.bf16.mxu0 %v5300
        %5589 = vmatpush1.bf16.msra.mxu0 %v5299
        %5590 = vmatprep.subr.bf16.mxu0 %v5302
        %5591 = vmatpush1.bf16.msra.mxu0 %v5301
        %5592 = vmatprep.subr.bf16.mxu0 %v5304
        %5593 = vmatpush1.bf16.msra.mxu0 %v5303
        %5594 = vmatprep.subr.bf16.mxu0 %v5306
        %5595 = vmatpush1.bf16.msra.mxu0 %v5305
        %5596 = vmatprep.subr.bf16.mxu0 %v5308
        %5597 = vmatpush1.bf16.msra.mxu0 %v5307
        %5598 = vmatprep.subr.bf16.mxu0 %v5310
        %5599 = vmatpush1.bf16.msra.mxu0 %v5309
        %5600 = vmatprep.mubr.bf16.mxu0 %v4658
        %5601 = vmatmul.mubr.bf16.gmra.mrb[0].mxu0 %v4657
        %v5602 = vpop.f32.mrb[0].mxu0
        %v5603 = vadd.f32 %v5560, %v5602
        %v5604 = vpop.f32.mrb[0].mxu0
        %v5605 = vadd.f32 %v5562, %v5604
        %v5606 = vpop.f32.mrb[0].mxu0
        %v5607 = vadd.f32 %v5564, %v5606
        %v5608 = vpop.f32.mrb[0].mxu0
        %v5609 = vadd.f32 %v5566, %v5608
        %5610 = vdwg.mxu0
        %v5611 = vld [vmem:[%s1087] sm:$0x3]
        %v5613 = vlaneseq
        %v5614 = vshrl.u32 %v5613, 7
        %v5615 = vsub.s32 0, %v5614
        %v5616 = vrot.slane %v5611, %v5615
        %v5617 = vlaneseq
        %v5618 = vshrl.u32 %v5617, 7
        %v5619 = vsub.s32 1, %v5618
        %v5620 = vrot.slane %v5611, %v5619
        %v5623 = vmul.f32 %v5616, %v5603
        %v5624 = vmul.f32 %v5620, %v5605
        %v5625 = vmul.f32 %v5616, %v5607
        %v5626 = vmul.f32 %v5620, %v5609
        %v5627 = vadd.f32 %v3167, %v5623
        %v5628 = vadd.f32 %v3168, %v5624
        %v5629 = vadd.f32 %v3169, %v5625
        %v5630 = vadd.f32 %v3170, %v5626
        %5631 = vst [vmem:[#allocation26] sm:$0xff] %v5627
        %5632 = vst [vmem:[#allocation26 + $0x8] sm:$0xff] %v5628
        %5633 = vst [vmem:[#allocation26 + $0x10] sm:$0xff] %v5629
        %5634 = vst [vmem:[#allocation26 + $0x18] sm:$0xff] %v5630
        // Predicated region
        $region185: #{tpu_custom_call.1} parent=99 // pred_check
          %p5635 = pneg %p565
        $region186: #{tpu_custom_call.1} parent=99 // pred_check_branch
          %5637 = sbr.rel (%p5635) target = $region188
        $region187: #{tpu_custom_call.1} parent=99 // pred_region
          %s5638 = smul.u32 2, %s39
          %s5640 = ssub.s32 512, 512
          %5641 = vsyncadd [#allocation4], %s5640
          %s5642 = smul.addr %s5638, 2
          %s5643 = smul.addr %s5642, 128
          %s5644 = scalar_lea.hbm %s20, %s5643
          %s5645 = sshll.u32 [#allocation26], 4
          %s5646 = int_to_ptr.vmem [resolvable:$true] %s5645
          %5651 = dma.vmem_to_hbm [thread:$0]  %s5646, 512, %s5644, [#allocation4], 256, 256, 16
        $region188: #{tpu_custom_call.1} parent=99 // pred_fallthru
          _
        // Predicated region
        $region189: #{tpu_custom_call.1} parent=99 // pred_check
          %p5652 = pneg %p565
        $region190: #{tpu_custom_call.1} parent=99 // pred_check_branch
          %5654 = sbr.rel (%p5652) target = $region192
        $region191: #{tpu_custom_call.1} parent=99 // pred_region
          %5655 = dma.done [#allocation4], 512
        $region192: #{tpu_custom_call.1} parent=99 // pred_fallthru
          _
      $region100: #{tpu_custom_call.1} parent=5 // pred_fallthru
        _
      %p5656 = scmp.le.s32.totalorder 2, %s30
      // Predicated region
      $region193: #{tpu_custom_call.1} parent=5 // pred_check
        %p5657 = pneg %p5656
      $region194: #{tpu_custom_call.1} parent=5 // pred_check_branch
        %5659 = sbr.rel (%p5657) target = $region196
      $region195: #{tpu_custom_call.1} parent=5 // pred_region
        %s5660 = ssub.s32 %s30, 2
      $region196: #{tpu_custom_call.1} parent=5 // pred_fallthru
        _
    $region6: #{tpu_custom_call.1} parent=1 // loop_footer
      %s34 = sadd.s32 1, %s30
    $region7: #{tpu_custom_call.1} parent=1 // loop_footer_branch
      %29 = sbr.rel target = $region3
    $region8: #{tpu_custom_call.1} parent=1 // loop_exit
      _
    %5661 = vsyncpa [#allocation3], 1
    %s5662 = scalar_lea.sflag [#allocation3], 1
    %5663 = vsyncpa %s5662, 1
    %5664 = vsyncpa [#allocation6], 1
    %5665 = vsyncpa [#allocation9], 1
    %5666 = vsyncpa [#allocation4], 1
    %s5667 = scalar_lea.sflag [#allocation4], 1
    %5668 = vsyncpa %s5667, 1

</llo_original>
